<compile_context>
chip_gen: v6e
topology: v6e:2x2x1
jax: 0.10.0
libtpu: 0.0.40
codegen_flags: <defaults>
</compile_context>

<pallas_src>
import functools

import jax
import jax.numpy as jnp
import numpy as np
from jax.experimental import pallas as pl
from jax.experimental.pallas import tpu as pltpu


# ----------------------------- Pallas kernel --------------------------------
def block35_kernel(x_ref, m_ref,
                   ws_ref, bs_ref,          # fused 1x1 stems        (320,96), (1,96)
                   wf_ref, bf_ref,          # fused 3x3 block-diag   (576,80), (1,80)
                   w2c_ref, b2c_ref,        # branch2 second 3x3     (432,64), (1,64)
                   wc_ref, bc_ref,          # scaled 1x1 projection  (128,320), (1,320)
                   o_ref, *, H, W):
    B = x_ref.shape[0]
    C = x_ref.shape[3]
    M = B * H * W

    # Host-precomputed boundary masks (1.0 inside image, 0.0 at the border),
    # indexed by destination row: [x>=1, x<=W-2, y>=1, y<=H-2].
    xm0 = m_ref[:, 0:1]
    xm2 = m_ref[:, 1:2]
    ym0 = m_ref[:, 2:3]
    ym2 = m_ref[:, 3:4]

    def im2col9(inp):
        """Full 9-tap im2col of a flattened (M, ci) activation -> (M, 9*ci).

        dx shifts are row-rolls by +-1, dy shifts are row-rolls by +-W
        (pltpu.roll -> XLU rotate); out-of-image taps (including cross-image
        rows inside the batch tile) are zeroed by the destination-row masks.
        Column order is (dy, dx, ci), matching w.reshape(9*ci, co).
        """
        left = pltpu.roll(inp, 1 % M, axis=0) * xm0            # tap dx=0 reads x-1
        right = pltpu.roll(inp, (M - 1) % M, axis=0) * xm2     # tap dx=2 reads x+1
        cols3 = jnp.concatenate([left, inp, right], axis=-1)   # (M, 3*ci)
        up = pltpu.roll(cols3, W % M, axis=0) * ym0            # tap dy=0 reads y-1
        down = pltpu.roll(cols3, (M - W) % M, axis=0) * ym2    # tap dy=2 reads y+1
        return jnp.concatenate([up, cols3, down], axis=-1)     # (M, 9*ci)

    def conv3x3_relu(inp, w_ref, b_ref):
        cols = im2col9(inp).astype(jnp.bfloat16)                # single bf16 cast
        y = jnp.dot(cols, w_ref[...], preferred_element_type=jnp.float32)
        return jnp.maximum(y + b_ref[...], 0.0)

    # Fused 1x1 stems of the three branches: one (M,320)x(320,96) matmul.
    xbf = x_ref[...].reshape(M, C).astype(jnp.bfloat16)
    stem = jnp.dot(xbf, ws_ref[...], preferred_element_type=jnp.float32)
    stem = jnp.maximum(stem + bs_ref[...], 0.0)                  # (M, 96)

    x0 = stem[:, 0:32]                                           # branch0 output
    # branch1 3x3 (32->32) and branch2 first 3x3 (32->48) fused via a shared
    # im2col of the joint 64-channel stem and a block-diagonal (576,80) weight.
    fused = conv3x3_relu(stem[:, 32:96], wf_ref, bf_ref)         # (M, 80)
    x1 = fused[:, 0:32]
    x2 = conv3x3_relu(fused[:, 32:80], w2c_ref, b2c_ref)         # (M, 64)

    # concat(32|32|64) + 1x1 projection as a single K=128 matmul.  `scale` is
    # pre-folded into wc/bc, so only residual add + ReLU remain.
    cat = jnp.concatenate([x0, x1, x2], axis=-1).astype(jnp.bfloat16)
    out = jnp.dot(cat, wc_ref[...], preferred_element_type=jnp.float32)
    res = x_ref[...].reshape(M, C).astype(jnp.float32)           # re-read residual
    out = jnp.maximum(out + bc_ref[...] + res, 0.0)
    o_ref[...] = out.reshape(B, H, W, C).astype(o_ref.dtype)


# ------------------------------- wrapper -------------------------------------
def _pick_block_b(N, H, W, m_cap):
    """Largest batch-tile divisor of N with B*H*W <= m_cap rows, preferring
    a grid of >= 2 steps (so v7x's two TensorCores both get work)."""
    divs = [d for d in range(1, N + 1) if N % d == 0]
    fit = [d for d in divs if d * H * W <= m_cap] or [1]
    pref = [d for d in fit if N // d >= 2]
    return max(pref) if pref else max(fit)


def _build_masks(B, H, W):
    """(B*H*W, 4) f32 destination-row boundary masks: [x>=1, x<=W-2, y>=1, y<=H-2]."""
    y = np.repeat(np.arange(H), W)
    x = np.tile(np.arange(W), H)
    x = np.tile(x, B).reshape(-1, 1)
    y = np.tile(y, B).reshape(-1, 1)
    m = np.concatenate([(x >= 1), (x <= W - 2), (y >= 1), (y <= H - 2)],
                       axis=1).astype(np.float32)
    return jnp.asarray(m)


def block35_pallas(x_nhwc, kp, *, block_b=None, m_cap=2048):
    N, H, W, C = x_nhwc.shape
    assert C == 320
    B = block_b if block_b is not None else _pick_block_b(N, H, W, m_cap)
    assert N % B == 0

    masks = _build_masks(B, H, W)

    weight_names = ["ws", "bs", "wf", "bf", "w2c", "b2c", "wc", "bc"]
    weights = [kp[k] for k in weight_names]

    def full_spec(arr):
        nd = arr.ndim
        return pl.BlockSpec(arr.shape, lambda n, _nd=nd: (0,) * _nd)

    in_specs = [pl.BlockSpec((B, H, W, C), lambda n: (n, 0, 0, 0)),
                full_spec(masks)]
    in_specs += [full_spec(a) for a in weights]

    kern = functools.partial(block35_kernel, H=H, W=W)
    return pl.pallas_call(
        kern,
        out_shape=jax.ShapeDtypeStruct((N, H, W, C), x_nhwc.dtype),
        grid=(N // B,),
        in_specs=in_specs,
        out_specs=pl.BlockSpec((B, H, W, C), lambda n: (n, 0, 0, 0)),
        compiler_params=pltpu.CompilerParams(
            dimension_semantics=("parallel",),
            vmem_limit_bytes=48 * 1024 * 1024),
    )(x_nhwc, masks, *weights)


# --------------------- deterministic parameter construction ------------------
def make_basic_conv(key, cin, cout, k):
    k1, k2, k3, k4, k5 = jax.random.split(key, 5)
    return dict(
        w=jax.random.normal(k1, (k, k, cin, cout), jnp.float32) * 0.05,  # HWIO
        gamma=jax.random.uniform(k2, (cout,), jnp.float32, 0.5, 1.5),
        beta=jax.random.normal(k3, (cout,), jnp.float32) * 0.1,
        mean=jax.random.normal(k4, (cout,), jnp.float32) * 0.1,
        var=jax.random.uniform(k5, (cout,), jnp.float32, 0.5, 1.5),
    )


def fold_bn(p, eps=1e-3):
    s = p["gamma"] / jnp.sqrt(p["var"] + eps)
    w_folded = p["w"] * s                      # scale output channels (last dim)
    b_folded = p["beta"] - p["mean"] * s
    return w_folded, b_folded


def build_params(key, scale):
    keys = jax.random.split(key, 8)
    raw = dict(
        b0=make_basic_conv(keys[0], 320, 32, 1),
        b1a=make_basic_conv(keys[1], 320, 32, 1),
        b1b=make_basic_conv(keys[2], 32, 32, 3),
        b2a=make_basic_conv(keys[3], 320, 32, 1),
        b2b=make_basic_conv(keys[4], 32, 48, 3),
        b2c=make_basic_conv(keys[5], 48, 64, 3),
        wc=jax.random.normal(keys[6], (1, 1, 128, 320), jnp.float32) * 0.05,
        bc=jax.random.normal(keys[7], (320,), jnp.float32) * 0.1,
    )

    def fold1x1(p):
        w, b = fold_bn(p)
        return w.reshape(w.shape[2], w.shape[3]), b.reshape(1, -1)

    w0, b0 = fold1x1(raw["b0"])
    w1a, b1a = fold1x1(raw["b1a"])
    w2a, b2a = fold1x1(raw["b2a"])

    w1b, b1b = fold_bn(raw["b1b"])             # (3, 3, 32, 32)
    w2b, b2b = fold_bn(raw["b2b"])             # (3, 3, 32, 48)
    w2c, b2c = fold_bn(raw["b2c"])             # (3, 3, 48, 64)

    # Block-diagonal fusion of branch1's 3x3 and branch2's first 3x3:
    # joint input channels [branch1 stem | branch2 stem], joint outputs [x1 | x2b].
    wf = jnp.zeros((3, 3, 64, 80), jnp.float32)
    wf = wf.at[:, :, 0:32, 0:32].set(w1b)
    wf = wf.at[:, :, 32:64, 32:80].set(w2b)

    kp = dict(
        # fused 1x1 stems: columns [branch0 | branch1 | branch2]
        ws=jnp.concatenate([w0, w1a, w2a], axis=1).astype(jnp.bfloat16),
        bs=jnp.concatenate([b0, b1a, b2a], axis=1),
        wf=wf.reshape(9 * 64, 80).astype(jnp.bfloat16),
        bf=jnp.concatenate([b1b.reshape(1, -1), b2b.reshape(1, -1)], axis=1),
        w2c=w2c.reshape(9 * 48, 64).astype(jnp.bfloat16),
        b2c=b2c.reshape(1, -1),
        # residual scale folded into the projection
        wc=(raw["wc"].reshape(128, 320) * scale).astype(jnp.bfloat16),
        bc=raw["bc"].reshape(1, 320) * scale,
    )
    return raw, kp


# ---------------------------- pure-JAX reference ------------------------------
def conv_nhwc(x, w_hwio, padding):
    return jax.lax.conv_general_dilated(
        x, w_hwio, window_strides=(1, 1), padding=padding,
        dimension_numbers=("NHWC", "HWIO", "NHWC"),
        precision=jax.lax.Precision.HIGHEST)


def basic_ref(x, p, padding, eps=1e-3):
    y = conv_nhwc(x, p["w"], padding)
    s = p["gamma"] / jnp.sqrt(p["var"] + eps)
    y = (y - p["mean"]) * s + p["beta"]
    return jnp.maximum(y, 0.0)


def block35_ref(x, raw, scale):
    pad3 = [(1, 1), (1, 1)]
    x0 = basic_ref(x, raw["b0"], "VALID")
    x1 = basic_ref(basic_ref(x, raw["b1a"], "VALID"), raw["b1b"], pad3)
    x2 = basic_ref(x, raw["b2a"], "VALID")
    x2 = basic_ref(x2, raw["b2b"], pad3)
    x2 = basic_ref(x2, raw["b2c"], pad3)
    cat = jnp.concatenate([x0, x1, x2], axis=-1)
    out = conv_nhwc(cat, raw["wc"], "VALID") + raw["bc"]
    out = out * scale + x
    return jnp.maximum(out, 0.0)


# ----------------------------------- main -------------------------------------
if __name__ == "__main__":
    key = jax.random.PRNGKey(0)
    kx, kparams = jax.random.split(key)

    N, H, W, C = 8, 8, 8, 320          # channels fixed at 320 by Block35
    scale = 0.17
    x = jax.random.normal(kx, (N, H, W, C), jnp.float32)

    raw, kp = build_params(kparams, scale)

    out = jax.block_until_ready(block35_pallas(x, kp))
    ref = jax.block_until_ready(block35_ref(x, raw, scale))

    np.testing.assert_allclose(np.asarray(out), np.asarray(ref),
                               rtol=2e-2, atol=2e-2)
    print("KERNEL_OK")
</pallas_src>

<mosaic_0001>
module attributes {stable_mosaic.version = 11 : i64} {
  func.func @block35_kernel(%arg0: i32, %arg1: memref<4x8x8x320xf32, #tpu.memory_space<vmem>>, %arg2: memref<256x4xf32, #tpu.memory_space<vmem>>, %arg3: memref<320x96xbf16, #tpu.memory_space<vmem>>, %arg4: memref<1x96xf32, #tpu.memory_space<vmem>>, %arg5: memref<576x80xbf16, #tpu.memory_space<vmem>>, %arg6: memref<1x80xf32, #tpu.memory_space<vmem>>, %arg7: memref<432x64xbf16, #tpu.memory_space<vmem>>, %arg8: memref<1x64xf32, #tpu.memory_space<vmem>>, %arg9: memref<128x320xbf16, #tpu.memory_space<vmem>>, %arg10: memref<1x320xf32, #tpu.memory_space<vmem>>, %arg11: memref<4x8x8x320xf32, #tpu.memory_space<vmem>>) attributes {dimension_semantics = [#tpu.dimension_semantics<parallel>], iteration_bounds = array<i64: 2>, scalar_prefetch = 0 : i64, scratch_operands = 0 : i64, tpu.core_type = #tpu.core_type<tc>, window_params = [{transform_indices = @transform_0, window_bounds = array<i64: 4, 8, 8, 320>}, {pipeline_mode = #tpu.pipeline_mode<synchronous>, transform_indices = @transform_1, window_bounds = array<i64: 256, 4>}, {pipeline_mode = #tpu.pipeline_mode<synchronous>, transform_indices = @transform_2, window_bounds = array<i64: 320, 96>}, {pipeline_mode = #tpu.pipeline_mode<synchronous>, transform_indices = @transform_3, window_bounds = array<i64: 1, 96>}, {pipeline_mode = #tpu.pipeline_mode<synchronous>, transform_indices = @transform_4, window_bounds = array<i64: 576, 80>}, {pipeline_mode = #tpu.pipeline_mode<synchronous>, transform_indices = @transform_5, window_bounds = array<i64: 1, 80>}, {pipeline_mode = #tpu.pipeline_mode<synchronous>, transform_indices = @transform_6, window_bounds = array<i64: 432, 64>}, {pipeline_mode = #tpu.pipeline_mode<synchronous>, transform_indices = @transform_7, window_bounds = array<i64: 1, 64>}, {pipeline_mode = #tpu.pipeline_mode<synchronous>, transform_indices = @transform_8, window_bounds = array<i64: 128, 320>}, {pipeline_mode = #tpu.pipeline_mode<synchronous>, transform_indices = @transform_9, window_bounds = array<i64: 1, 320>}, {transform_indices = @transform_10, window_bounds = array<i64: 4, 8, 8, 320>}]} {
    %c0 = arith.constant 0 : index
    %c0_0 = arith.constant 0 : index
    %0 = vector.load %arg2[%c0, %c0_0] : memref<256x4xf32, #tpu.memory_space<vmem>>, vector<256x1xf32>
    %c0_1 = arith.constant 0 : index
    %c1 = arith.constant 1 : index
    %1 = vector.load %arg2[%c0_1, %c1] : memref<256x4xf32, #tpu.memory_space<vmem>>, vector<256x1xf32>
    %c0_2 = arith.constant 0 : index
    %c2 = arith.constant 2 : index
    %2 = vector.load %arg2[%c0_2, %c2] : memref<256x4xf32, #tpu.memory_space<vmem>>, vector<256x1xf32>
    %c0_3 = arith.constant 0 : index
    %c3 = arith.constant 3 : index
    %3 = vector.load %arg2[%c0_3, %c3] : memref<256x4xf32, #tpu.memory_space<vmem>>, vector<256x1xf32>
    %c0_4 = arith.constant 0 : index
    %c0_5 = arith.constant 0 : index
    %c0_6 = arith.constant 0 : index
    %c0_7 = arith.constant 0 : index
    %4 = vector.load %arg1[%c0_4, %c0_5, %c0_6, %c0_7] : memref<4x8x8x320xf32, #tpu.memory_space<vmem>>, vector<4x8x8x320xf32>
    %5 = vector.shape_cast %4 : vector<4x8x8x320xf32> to vector<256x320xf32>
    %6 = arith.truncf %5 : vector<256x320xf32> to vector<256x320xbf16>
    %c0_8 = arith.constant 0 : index
    %c0_9 = arith.constant 0 : index
    %7 = vector.load %arg3[%c0_8, %c0_9] : memref<320x96xbf16, #tpu.memory_space<vmem>>, vector<320x96xbf16>
    %cst = arith.constant dense<0.000000e+00> : vector<256x96xf32>
    %8 = tpu.matmul %6, %7, %cst {dimension_numbers = #tpu.dot_dimension_numbers<[1], [0], [0], [1], [0, 0, 1, 1], [], []>} : vector<256x320xbf16>, vector<320x96xbf16>, vector<256x96xf32> -> vector<256x96xf32>
    %c0_10 = arith.constant 0 : index
    %c0_11 = arith.constant 0 : index
    %9 = vector.load %arg4[%c0_10, %c0_11] : memref<1x96xf32, #tpu.memory_space<vmem>>, vector<1x96xf32>
    %10 = vector.broadcast %9 : vector<1x96xf32> to vector<256x96xf32>
    %11 = arith.addf %8, %10 : vector<256x96xf32>
    %cst_12 = arith.constant 0.000000e+00 : f32
    %12 = vector.broadcast %cst_12 : f32 to vector<256x96xf32>
    %13 = arith.maximumf %11, %12 : vector<256x96xf32>
    %14 = vector.extract_strided_slice %13 {offsets = [0, 0], sizes = [256, 32], strides = [1, 1]} : vector<256x96xf32> to vector<256x32xf32>
    %15 = vector.extract_strided_slice %13 {offsets = [0, 32], sizes = [256, 64], strides = [1, 1]} : vector<256x96xf32> to vector<256x64xf32>
    %c1_i32 = arith.constant 1 : i32
    %16 = tpu.dynamic_rotate %15 by %c1_i32 dim 0 : vector<256x64xf32>, i32 -> vector<256x64xf32>
    %17 = vector.broadcast %0 : vector<256x1xf32> to vector<256x64xf32>
    %18 = arith.mulf %16, %17 : vector<256x64xf32>
    %c255_i32 = arith.constant 255 : i32
    %19 = tpu.dynamic_rotate %15 by %c255_i32 dim 0 : vector<256x64xf32>, i32 -> vector<256x64xf32>
    %20 = vector.broadcast %1 : vector<256x1xf32> to vector<256x64xf32>
    %21 = arith.mulf %19, %20 : vector<256x64xf32>
    %22 = tpu.concatenate %18, %15, %21 in 1 : vector<256x64xf32>, vector<256x64xf32>, vector<256x64xf32> -> vector<256x192xf32>
    %c8_i32 = arith.constant 8 : i32
    %23 = tpu.dynamic_rotate %22 by %c8_i32 dim 0 : vector<256x192xf32>, i32 -> vector<256x192xf32>
    %24 = vector.broadcast %2 : vector<256x1xf32> to vector<256x192xf32>
    %25 = arith.mulf %23, %24 : vector<256x192xf32>
    %c248_i32 = arith.constant 248 : i32
    %26 = tpu.dynamic_rotate %22 by %c248_i32 dim 0 : vector<256x192xf32>, i32 -> vector<256x192xf32>
    %27 = vector.broadcast %3 : vector<256x1xf32> to vector<256x192xf32>
    %28 = arith.mulf %26, %27 : vector<256x192xf32>
    %29 = tpu.concatenate %25, %22, %28 in 1 : vector<256x192xf32>, vector<256x192xf32>, vector<256x192xf32> -> vector<256x576xf32>
    %30 = arith.truncf %29 : vector<256x576xf32> to vector<256x576xbf16>
    %c0_13 = arith.constant 0 : index
    %c0_14 = arith.constant 0 : index
    %31 = vector.load %arg5[%c0_13, %c0_14] : memref<576x80xbf16, #tpu.memory_space<vmem>>, vector<576x80xbf16>
    %cst_15 = arith.constant dense<0.000000e+00> : vector<256x80xf32>
    %32 = tpu.matmul %30, %31, %cst_15 {dimension_numbers = #tpu.dot_dimension_numbers<[1], [0], [0], [1], [0, 0, 1, 1], [], []>} : vector<256x576xbf16>, vector<576x80xbf16>, vector<256x80xf32> -> vector<256x80xf32>
    %c0_16 = arith.constant 0 : index
    %c0_17 = arith.constant 0 : index
    %33 = vector.load %arg6[%c0_16, %c0_17] : memref<1x80xf32, #tpu.memory_space<vmem>>, vector<1x80xf32>
    %34 = vector.broadcast %33 : vector<1x80xf32> to vector<256x80xf32>
    %35 = arith.addf %32, %34 : vector<256x80xf32>
    %cst_18 = arith.constant 0.000000e+00 : f32
    %36 = vector.broadcast %cst_18 : f32 to vector<256x80xf32>
    %37 = arith.maximumf %35, %36 : vector<256x80xf32>
    %38 = vector.extract_strided_slice %37 {offsets = [0, 0], sizes = [256, 32], strides = [1, 1]} : vector<256x80xf32> to vector<256x32xf32>
    %39 = vector.extract_strided_slice %37 {offsets = [0, 32], sizes = [256, 48], strides = [1, 1]} : vector<256x80xf32> to vector<256x48xf32>
    %c1_i32_19 = arith.constant 1 : i32
    %40 = tpu.dynamic_rotate %39 by %c1_i32_19 dim 0 : vector<256x48xf32>, i32 -> vector<256x48xf32>
    %41 = vector.broadcast %0 : vector<256x1xf32> to vector<256x48xf32>
    %42 = arith.mulf %40, %41 : vector<256x48xf32>
    %c255_i32_20 = arith.constant 255 : i32
    %43 = tpu.dynamic_rotate %39 by %c255_i32_20 dim 0 : vector<256x48xf32>, i32 -> vector<256x48xf32>
    %44 = vector.broadcast %1 : vector<256x1xf32> to vector<256x48xf32>
    %45 = arith.mulf %43, %44 : vector<256x48xf32>
    %46 = tpu.concatenate %42, %39, %45 in 1 : vector<256x48xf32>, vector<256x48xf32>, vector<256x48xf32> -> vector<256x144xf32>
    %c8_i32_21 = arith.constant 8 : i32
    %47 = tpu.dynamic_rotate %46 by %c8_i32_21 dim 0 : vector<256x144xf32>, i32 -> vector<256x144xf32>
    %48 = vector.broadcast %2 : vector<256x1xf32> to vector<256x144xf32>
    %49 = arith.mulf %47, %48 : vector<256x144xf32>
    %c248_i32_22 = arith.constant 248 : i32
    %50 = tpu.dynamic_rotate %46 by %c248_i32_22 dim 0 : vector<256x144xf32>, i32 -> vector<256x144xf32>
    %51 = vector.broadcast %3 : vector<256x1xf32> to vector<256x144xf32>
    %52 = arith.mulf %50, %51 : vector<256x144xf32>
    %53 = tpu.concatenate %49, %46, %52 in 1 : vector<256x144xf32>, vector<256x144xf32>, vector<256x144xf32> -> vector<256x432xf32>
    %54 = arith.truncf %53 : vector<256x432xf32> to vector<256x432xbf16>
    %c0_23 = arith.constant 0 : index
    %c0_24 = arith.constant 0 : index
    %55 = vector.load %arg7[%c0_23, %c0_24] : memref<432x64xbf16, #tpu.memory_space<vmem>>, vector<432x64xbf16>
    %cst_25 = arith.constant dense<0.000000e+00> : vector<256x64xf32>
    %56 = tpu.matmul %54, %55, %cst_25 {dimension_numbers = #tpu.dot_dimension_numbers<[1], [0], [0], [1], [0, 0, 1, 1], [], []>} : vector<256x432xbf16>, vector<432x64xbf16>, vector<256x64xf32> -> vector<256x64xf32>
    %c0_26 = arith.constant 0 : index
    %c0_27 = arith.constant 0 : index
    %57 = vector.load %arg8[%c0_26, %c0_27] : memref<1x64xf32, #tpu.memory_space<vmem>>, vector<1x64xf32>
    %58 = vector.broadcast %57 : vector<1x64xf32> to vector<256x64xf32>
    %59 = arith.addf %56, %58 : vector<256x64xf32>
    %cst_28 = arith.constant 0.000000e+00 : f32
    %60 = vector.broadcast %cst_28 : f32 to vector<256x64xf32>
    %61 = arith.maximumf %59, %60 : vector<256x64xf32>
    %62 = tpu.concatenate %14, %38, %61 in 1 : vector<256x32xf32>, vector<256x32xf32>, vector<256x64xf32> -> vector<256x128xf32>
    %63 = arith.truncf %62 : vector<256x128xf32> to vector<256x128xbf16>
    %c0_29 = arith.constant 0 : index
    %c0_30 = arith.constant 0 : index
    %64 = vector.load %arg9[%c0_29, %c0_30] : memref<128x320xbf16, #tpu.memory_space<vmem>>, vector<128x320xbf16>
    %cst_31 = arith.constant dense<0.000000e+00> : vector<256x320xf32>
    %65 = tpu.matmul %63, %64, %cst_31 {dimension_numbers = #tpu.dot_dimension_numbers<[1], [0], [0], [1], [0, 0, 1, 1], [], []>} : vector<256x128xbf16>, vector<128x320xbf16>, vector<256x320xf32> -> vector<256x320xf32>
    %c0_32 = arith.constant 0 : index
    %c0_33 = arith.constant 0 : index
    %c0_34 = arith.constant 0 : index
    %c0_35 = arith.constant 0 : index
    %66 = vector.load %arg1[%c0_32, %c0_33, %c0_34, %c0_35] : memref<4x8x8x320xf32, #tpu.memory_space<vmem>>, vector<4x8x8x320xf32>
    %67 = vector.shape_cast %66 : vector<4x8x8x320xf32> to vector<256x320xf32>
    %c0_36 = arith.constant 0 : index
    %c0_37 = arith.constant 0 : index
    %68 = vector.load %arg10[%c0_36, %c0_37] : memref<1x320xf32, #tpu.memory_space<vmem>>, vector<1x320xf32>
    %69 = vector.broadcast %68 : vector<1x320xf32> to vector<256x320xf32>
    %70 = arith.addf %65, %69 : vector<256x320xf32>
    %71 = arith.addf %70, %67 : vector<256x320xf32>
    %cst_38 = arith.constant 0.000000e+00 : f32
    %72 = vector.broadcast %cst_38 : f32 to vector<256x320xf32>
    %73 = arith.maximumf %71, %72 : vector<256x320xf32>
    %74 = vector.shape_cast %73 : vector<256x320xf32> to vector<4x8x8x320xf32>
    %c0_39 = arith.constant 0 : index
    %c0_40 = arith.constant 0 : index
    %c0_41 = arith.constant 0 : index
    %c0_42 = arith.constant 0 : index
    %75 = vector.load %arg11[%c0_39, %c0_40, %c0_41, %c0_42] : memref<4x8x8x320xf32, #tpu.memory_space<vmem>>, vector<4x8x8x320xf32>
    tpu.vector_store %arg11[%c0_39, %c0_40, %c0_41, %c0_42], %74 {strides = array<i32>} : memref<4x8x8x320xf32, #tpu.memory_space<vmem>>, vector<4x8x8x320xf32>,
    return
  }
  func.func @transform_0(%arg0: i32) -> (i32, i32, i32, i32) {
    %c0_i32 = arith.constant 0 : i32
    %c0_i32_0 = arith.constant 0 : i32
    %c0_i32_1 = arith.constant 0 : i32
    %c0_i32_2 = arith.constant 0 : i32
    return %arg0, %c0_i32, %c0_i32_0, %c0_i32_1 : i32, i32, i32, i32
  }
  func.func @transform_1(%arg0: i32) -> (i32, i32) {
    %c0_i32 = arith.constant 0 : i32
    %c0_i32_0 = arith.constant 0 : i32
    %c0_i32_1 = arith.constant 0 : i32
    return %c0_i32, %c0_i32_0 : i32, i32
  }
  func.func @transform_2(%arg0: i32) -> (i32, i32) {
    %c0_i32 = arith.constant 0 : i32
    %c0_i32_0 = arith.constant 0 : i32
    %c0_i32_1 = arith.constant 0 : i32
    return %c0_i32, %c0_i32_0 : i32, i32
  }
  func.func @transform_3(%arg0: i32) -> (i32, i32) {
    %c0_i32 = arith.constant 0 : i32
    %c0_i32_0 = arith.constant 0 : i32
    %c0_i32_1 = arith.constant 0 : i32
    return %c0_i32, %c0_i32_0 : i32, i32
  }
  func.func @transform_4(%arg0: i32) -> (i32, i32) {
    %c0_i32 = arith.constant 0 : i32
    %c0_i32_0 = arith.constant 0 : i32
    %c0_i32_1 = arith.constant 0 : i32
    return %c0_i32, %c0_i32_0 : i32, i32
  }
  func.func @transform_5(%arg0: i32) -> (i32, i32) {
    %c0_i32 = arith.constant 0 : i32
    %c0_i32_0 = arith.constant 0 : i32
    %c0_i32_1 = arith.constant 0 : i32
    return %c0_i32, %c0_i32_0 : i32, i32
  }
  func.func @transform_6(%arg0: i32) -> (i32, i32) {
    %c0_i32 = arith.constant 0 : i32
    %c0_i32_0 = arith.constant 0 : i32
    %c0_i32_1 = arith.constant 0 : i32
    return %c0_i32, %c0_i32_0 : i32, i32
  }
  func.func @transform_7(%arg0: i32) -> (i32, i32) {
    %c0_i32 = arith.constant 0 : i32
    %c0_i32_0 = arith.constant 0 : i32
    %c0_i32_1 = arith.constant 0 : i32
    return %c0_i32, %c0_i32_0 : i32, i32
  }
  func.func @transform_8(%arg0: i32) -> (i32, i32) {
    %c0_i32 = arith.constant 0 : i32
    %c0_i32_0 = arith.constant 0 : i32
    %c0_i32_1 = arith.constant 0 : i32
    return %c0_i32, %c0_i32_0 : i32, i32
  }
  func.func @transform_9(%arg0: i32) -> (i32, i32) {
    %c0_i32 = arith.constant 0 : i32
    %c0_i32_0 = arith.constant 0 : i32
    %c0_i32_1 = arith.constant 0 : i32
    return %c0_i32, %c0_i32_0 : i32, i32
  }
  func.func @transform_10(%arg0: i32) -> (i32, i32, i32, i32) {
    %c0_i32 = arith.constant 0 : i32
    %c0_i32_0 = arith.constant 0 : i32
    %c0_i32_1 = arith.constant 0 : i32
    %c0_i32_2 = arith.constant 0 : i32
    return %arg0, %c0_i32, %c0_i32_0, %c0_i32_1 : i32, i32, i32, i32
  }
}

</mosaic_0001>

<llo_original>
// kernel: tpu_custom_call.1
$region0: #{tpu_custom_call.1}
  #allocation0 [shape = 'u32[]', space=smem, size = 0x4, offset = 0x4, fixed_abs, tag = 'smem constant byte address 0x4 - core index']
  #allocation1 [shape = 'u32[144,128]{1,0:T(1,128)}', space=vmem, size = 0x12000, scoped, tag = 'internal scratch']
  %s0 = inlined_call_operand.vmem [shape: f32[8,8,8,320], index: 0, kind: input, shape index: {}]
  %s1 = inlined_call_operand.vmem [shape: f32[256,4], index: 1, kind: input, shape index: {}]
  %s2 = inlined_call_operand.vmem [shape: bf16[320,96], index: 2, kind: input, shape index: {}]
  %s3 = inlined_call_operand.vmem [shape: f32[1,96], index: 3, kind: input, shape index: {}]
  %s4 = inlined_call_operand.vmem [shape: bf16[576,80], index: 4, kind: input, shape index: {}]
  %s5 = inlined_call_operand.vmem [shape: f32[1,80], index: 5, kind: input, shape index: {}]
  %s6 = inlined_call_operand.vmem [shape: bf16[432,64], index: 6, kind: input, shape index: {}]
  %s7 = inlined_call_operand.vmem [shape: f32[1,64], index: 7, kind: input, shape index: {}]
  %s8 = inlined_call_operand.vmem [shape: bf16[128,320], index: 8, kind: input, shape index: {}]
  %s9 = inlined_call_operand.vmem [shape: f32[1,320], index: 9, kind: input, shape index: {}]
  %s10 = inlined_call_operand.hbm [shape: f32[8,8,8,320], index: 10, kind: output, shape index: {}]
  %s11 = sld [smem:[#allocation0]]
  $region73: #{tpu_custom_call.1} parent=0
    _
  %s13 = ssub.s32 1, %s11
  %s14 = scalar_select 0, %s13, %s11
  $region1: #{tpu_custom_call.1} parent=0
    #allocation2 [shape = 'u8[786432]{0}', space=vmem, size = 0xc0000, scoped, tag = 'output window, operand 0']
    #allocation3 [shape = 's32[2]{0}', space=sflag, size = 0x8, scoped, tag = 'scoped memory for tpu_custom_call.1']
    %15 = vsyncpa [#allocation3], 0
    %s16 = scalar_lea.sflag [#allocation3], 1
    %17 = vsyncpa %s16, 0
    loop: start=0, step=1, limit=4
    $region2: #{tpu_custom_call.1} parent=1 // loop_pre_header
      _
    $region3: #{tpu_custom_call.1} parent=1 // loop_header
      %s19 = sphi 0, %s23
      %p20 = scmp.ge.s32.totalorder %s19, 4
      %s29 = sphi 0, %s31
      %s32 = sphi 0, %s29
      %s33 = sphi 0, %s32
      %s49 = sphi 0, %s33
      %s53 = sphi 0, %s53
      %s55 = sphi 0, %s53
      %s56 = sphi 0, %s55
      %s70 = sphi 0, %s56
      %s74 = sphi 0, %s74
      %s76 = sphi 0, %s74
      %s77 = sphi 0, %s76
      %s91 = sphi 0, %s77
      %s95 = sphi 0, %s95
      %s97 = sphi 0, %s95
      %s98 = sphi 0, %s97
      %s112 = sphi 0, %s98
      %s116 = sphi 0, %s116
      %s118 = sphi 0, %s116
      %s119 = sphi 0, %s118
      %s133 = sphi 0, %s119
      %s137 = sphi 0, %s137
      %s139 = sphi 0, %s137
      %s140 = sphi 0, %s139
      %s154 = sphi 0, %s140
      %s158 = sphi 0, %s158
      %s160 = sphi 0, %s158
      %s161 = sphi 0, %s160
      %s175 = sphi 0, %s161
      %s179 = sphi 0, %s179
      %s181 = sphi 0, %s179
      %s182 = sphi 0, %s181
      %s196 = sphi 0, %s182
      %s200 = sphi 0, %s200
      %s202 = sphi 0, %s200
      %s203 = sphi 0, %s202
      %s217 = sphi 0, %s203
      %s221 = sphi 0, %s221
      %s223 = sphi 0, %s221
      %s224 = sphi 0, %s223
      %s238 = sphi 0, %s224
      %s244 = sphi 0, %s246
      %s247 = sphi 0, %s244
      %s248 = sphi 0, %s247
      %s264 = sphi 0, %s248
    $region4: #{tpu_custom_call.1} parent=1 // loop_header_branch
      %22 = sbr.rel (%p20) target = $region8
    $region5: #{tpu_custom_call.1} parent=1 // loop_body
      %s24 = ssub.s32 %s19, 1
      %s25 = ssub.s32 %s19, 2
      %s26 = sadd.s32 %s19, 1
      %s27 = ssub.s32 %s19, %s26
      %p28 = scmp.eq.s32.totalorder %s27, 0
      %s30 = sadd.s32 %s29, 1
      %s31 = scalar_select %p28, %s29, %s30
      %p34 = pneg %p28
      %p35 = scmp.eq.s32.totalorder %s19, 1
      %p36 = por %p34, %p35
      %p37 = scmp.ne.s32.totalorder %s29, %s32
      %p38 = scmp.eq.s32.totalorder %s19, 0
      %p39 = por %p37, %p38
      %p40 = scmp.ne.s32.totalorder %s29, %s32
      %p41 = scmp.eq.s32.totalorder %s24, 1
      %p42 = por %p40, %p41
      %p43 = scmp.ne.s32.totalorder %s32, %s33
      %p44 = scmp.eq.s32.totalorder %s24, 0
      %p45 = por %p43, %p44
      %p46 = scmp.ne.s32.totalorder %s32, %s33
      %p47 = scmp.eq.s32.totalorder %s25, 1
      %p48 = por %p46, %p47
      %p50 = scmp.ne.s32.totalorder %s33, %s49
      %p51 = scmp.eq.s32.totalorder %s25, 0
      %p52 = por %p50, %p51
      %s54 = sadd.s32 %s53, 1
      %p57 = scmp.eq.s32.totalorder %s19, 1
      %p58 = scmp.ne.s32.totalorder %s53, %s55
      %p59 = scmp.eq.s32.totalorder %s19, 0
      %p60 = por %p58, %p59
      %p61 = scmp.ne.s32.totalorder %s53, %s55
      %p62 = scmp.eq.s32.totalorder %s24, 1
      %p63 = por %p61, %p62
      %p64 = scmp.ne.s32.totalorder %s55, %s56
      %p65 = scmp.eq.s32.totalorder %s24, 0
      %p66 = por %p64, %p65
      %p67 = scmp.ne.s32.totalorder %s55, %s56
      %p68 = scmp.eq.s32.totalorder %s25, 1
      %p69 = por %p67, %p68
      %p71 = scmp.ne.s32.totalorder %s56, %s70
      %p72 = scmp.eq.s32.totalorder %s25, 0
      %p73 = por %p71, %p72
      %s75 = sadd.s32 %s74, 1
      %p78 = scmp.eq.s32.totalorder %s19, 1
      %p79 = scmp.ne.s32.totalorder %s74, %s76
      %p80 = scmp.eq.s32.totalorder %s19, 0
      %p81 = por %p79, %p80
      %p82 = scmp.ne.s32.totalorder %s74, %s76
      %p83 = scmp.eq.s32.totalorder %s24, 1
      %p84 = por %p82, %p83
      %p85 = scmp.ne.s32.totalorder %s76, %s77
      %p86 = scmp.eq.s32.totalorder %s24, 0
      %p87 = por %p85, %p86
      %p88 = scmp.ne.s32.totalorder %s76, %s77
      %p89 = scmp.eq.s32.totalorder %s25, 1
      %p90 = por %p88, %p89
      %p92 = scmp.ne.s32.totalorder %s77, %s91
      %p93 = scmp.eq.s32.totalorder %s25, 0
      %p94 = por %p92, %p93
      %s96 = sadd.s32 %s95, 1
      %p99 = scmp.eq.s32.totalorder %s19, 1
      %p100 = scmp.ne.s32.totalorder %s95, %s97
      %p101 = scmp.eq.s32.totalorder %s19, 0
      %p102 = por %p100, %p101
      %p103 = scmp.ne.s32.totalorder %s95, %s97
      %p104 = scmp.eq.s32.totalorder %s24, 1
      %p105 = por %p103, %p104
      %p106 = scmp.ne.s32.totalorder %s97, %s98
      %p107 = scmp.eq.s32.totalorder %s24, 0
      %p108 = por %p106, %p107
      %p109 = scmp.ne.s32.totalorder %s97, %s98
      %p110 = scmp.eq.s32.totalorder %s25, 1
      %p111 = por %p109, %p110
      %p113 = scmp.ne.s32.totalorder %s98, %s112
      %p114 = scmp.eq.s32.totalorder %s25, 0
      %p115 = por %p113, %p114
      %s117 = sadd.s32 %s116, 1
      %p120 = scmp.eq.s32.totalorder %s19, 1
      %p121 = scmp.ne.s32.totalorder %s116, %s118
      %p122 = scmp.eq.s32.totalorder %s19, 0
      %p123 = por %p121, %p122
      %p124 = scmp.ne.s32.totalorder %s116, %s118
      %p125 = scmp.eq.s32.totalorder %s24, 1
      %p126 = por %p124, %p125
      %p127 = scmp.ne.s32.totalorder %s118, %s119
      %p128 = scmp.eq.s32.totalorder %s24, 0
      %p129 = por %p127, %p128
      %p130 = scmp.ne.s32.totalorder %s118, %s119
      %p131 = scmp.eq.s32.totalorder %s25, 1
      %p132 = por %p130, %p131
      %p134 = scmp.ne.s32.totalorder %s119, %s133
      %p135 = scmp.eq.s32.totalorder %s25, 0
      %p136 = por %p134, %p135
      %s138 = sadd.s32 %s137, 1
      %p141 = scmp.eq.s32.totalorder %s19, 1
      %p142 = scmp.ne.s32.totalorder %s137, %s139
      %p143 = scmp.eq.s32.totalorder %s19, 0
      %p144 = por %p142, %p143
      %p145 = scmp.ne.s32.totalorder %s137, %s139
      %p146 = scmp.eq.s32.totalorder %s24, 1
      %p147 = por %p145, %p146
      %p148 = scmp.ne.s32.totalorder %s139, %s140
      %p149 = scmp.eq.s32.totalorder %s24, 0
      %p150 = por %p148, %p149
      %p151 = scmp.ne.s32.totalorder %s139, %s140
      %p152 = scmp.eq.s32.totalorder %s25, 1
      %p153 = por %p151, %p152
      %p155 = scmp.ne.s32.totalorder %s140, %s154
      %p156 = scmp.eq.s32.totalorder %s25, 0
      %p157 = por %p155, %p156
      %s159 = sadd.s32 %s158, 1
      %p162 = scmp.eq.s32.totalorder %s19, 1
      %p163 = scmp.ne.s32.totalorder %s158, %s160
      %p164 = scmp.eq.s32.totalorder %s19, 0
      %p165 = por %p163, %p164
      %p166 = scmp.ne.s32.totalorder %s158, %s160
      %p167 = scmp.eq.s32.totalorder %s24, 1
      %p168 = por %p166, %p167
      %p169 = scmp.ne.s32.totalorder %s160, %s161
      %p170 = scmp.eq.s32.totalorder %s24, 0
      %p171 = por %p169, %p170
      %p172 = scmp.ne.s32.totalorder %s160, %s161
      %p173 = scmp.eq.s32.totalorder %s25, 1
      %p174 = por %p172, %p173
      %p176 = scmp.ne.s32.totalorder %s161, %s175
      %p177 = scmp.eq.s32.totalorder %s25, 0
      %p178 = por %p176, %p177
      %s180 = sadd.s32 %s179, 1
      %p183 = scmp.eq.s32.totalorder %s19, 1
      %p184 = scmp.ne.s32.totalorder %s179, %s181
      %p185 = scmp.eq.s32.totalorder %s19, 0
      %p186 = por %p184, %p185
      %p187 = scmp.ne.s32.totalorder %s179, %s181
      %p188 = scmp.eq.s32.totalorder %s24, 1
      %p189 = por %p187, %p188
      %p190 = scmp.ne.s32.totalorder %s181, %s182
      %p191 = scmp.eq.s32.totalorder %s24, 0
      %p192 = por %p190, %p191
      %p193 = scmp.ne.s32.totalorder %s181, %s182
      %p194 = scmp.eq.s32.totalorder %s25, 1
      %p195 = por %p193, %p194
      %p197 = scmp.ne.s32.totalorder %s182, %s196
      %p198 = scmp.eq.s32.totalorder %s25, 0
      %p199 = por %p197, %p198
      %s201 = sadd.s32 %s200, 1
      %p204 = scmp.eq.s32.totalorder %s19, 1
      %p205 = scmp.ne.s32.totalorder %s200, %s202
      %p206 = scmp.eq.s32.totalorder %s19, 0
      %p207 = por %p205, %p206
      %p208 = scmp.ne.s32.totalorder %s200, %s202
      %p209 = scmp.eq.s32.totalorder %s24, 1
      %p210 = por %p208, %p209
      %p211 = scmp.ne.s32.totalorder %s202, %s203
      %p212 = scmp.eq.s32.totalorder %s24, 0
      %p213 = por %p211, %p212
      %p214 = scmp.ne.s32.totalorder %s202, %s203
      %p215 = scmp.eq.s32.totalorder %s25, 1
      %p216 = por %p214, %p215
      %p218 = scmp.ne.s32.totalorder %s203, %s217
      %p219 = scmp.eq.s32.totalorder %s25, 0
      %p220 = por %p218, %p219
      %s222 = sadd.s32 %s221, 1
      %p225 = scmp.eq.s32.totalorder %s19, 1
      %p226 = scmp.ne.s32.totalorder %s221, %s223
      %p227 = scmp.eq.s32.totalorder %s19, 0
      %p228 = por %p226, %p227
      %p229 = scmp.ne.s32.totalorder %s221, %s223
      %p230 = scmp.eq.s32.totalorder %s24, 1
      %p231 = por %p229, %p230
      %p232 = scmp.ne.s32.totalorder %s223, %s224
      %p233 = scmp.eq.s32.totalorder %s24, 0
      %p234 = por %p232, %p233
      %p235 = scmp.ne.s32.totalorder %s223, %s224
      %p236 = scmp.eq.s32.totalorder %s25, 1
      %p237 = por %p235, %p236
      %p239 = scmp.ne.s32.totalorder %s224, %s238
      %p240 = scmp.eq.s32.totalorder %s25, 0
      %p241 = por %p239, %p240
      %s242 = ssub.s32 %s19, %s26
      %p243 = scmp.eq.s32.totalorder %s242, 0
      %s245 = sadd.s32 %s244, 1
      %s246 = scalar_select %p243, %s244, %s245
      %p249 = pneg %p243
      %p250 = scmp.eq.s32.totalorder %s19, 1
      %p251 = por %p249, %p250
      %p252 = scmp.ne.s32.totalorder %s244, %s247
      %p253 = scmp.eq.s32.totalorder %s19, 0
      %p254 = por %p252, %p253
      %p255 = scmp.ne.s32.totalorder %s244, %s247
      %p256 = scmp.eq.s32.totalorder %s24, 1
      %p257 = por %p255, %p256
      %p258 = scmp.ne.s32.totalorder %s247, %s248
      %p259 = scmp.eq.s32.totalorder %s24, 0
      %p260 = por %p258, %p259
      %p261 = scmp.ne.s32.totalorder %s247, %s248
      %p262 = scmp.eq.s32.totalorder %s25, 1
      %p263 = por %p261, %p262
      %p265 = scmp.ne.s32.totalorder %s248, %s264
      %p266 = scmp.eq.s32.totalorder %s25, 0
      %p267 = por %p265, %p266
      %p268 = scmp.le.s32.totalorder 1, %s19
      %p269 = scmp.lt.s32.totalorder %s19, 3
      %p270 = pnand %p268, %p269
      %p271 = pneg %p270
      // Predicated region
      $region9: #{tpu_custom_call.1} parent=5 // pred_check
        _
      $region10: #{tpu_custom_call.1} parent=5 // pred_check_branch
        %273 = sbr.rel (%p270) target = $region12
      $region11: #{tpu_custom_call.1} parent=5 // pred_region
        %s274 = ssub.s32 %s19, 1
        // Predicated region
        $region13: #{tpu_custom_call.1} parent=11 // pred_check
          %p275 = pneg %p66
        $region14: #{tpu_custom_call.1} parent=11 // pred_check_branch
          %277 = sbr.rel (%p275) target = $region16
        $region15: #{tpu_custom_call.1} parent=11 // pred_region
          _
        $region16: #{tpu_custom_call.1} parent=11 // pred_fallthru
          _
        // Predicated region
        $region17: #{tpu_custom_call.1} parent=11 // pred_check
          %p278 = pneg %p87
        $region18: #{tpu_custom_call.1} parent=11 // pred_check_branch
          %280 = sbr.rel (%p278) target = $region20
        $region19: #{tpu_custom_call.1} parent=11 // pred_region
          _
        $region20: #{tpu_custom_call.1} parent=11 // pred_fallthru
          _
        // Predicated region
        $region21: #{tpu_custom_call.1} parent=11 // pred_check
          %p281 = pneg %p108
        $region22: #{tpu_custom_call.1} parent=11 // pred_check_branch
          %283 = sbr.rel (%p281) target = $region24
        $region23: #{tpu_custom_call.1} parent=11 // pred_region
          _
        $region24: #{tpu_custom_call.1} parent=11 // pred_fallthru
          _
        // Predicated region
        $region25: #{tpu_custom_call.1} parent=11 // pred_check
          %p284 = pneg %p129
        $region26: #{tpu_custom_call.1} parent=11 // pred_check_branch
          %286 = sbr.rel (%p284) target = $region28
        $region27: #{tpu_custom_call.1} parent=11 // pred_region
          _
        $region28: #{tpu_custom_call.1} parent=11 // pred_fallthru
          _
        // Predicated region
        $region29: #{tpu_custom_call.1} parent=11 // pred_check
          %p287 = pneg %p150
        $region30: #{tpu_custom_call.1} parent=11 // pred_check_branch
          %289 = sbr.rel (%p287) target = $region32
        $region31: #{tpu_custom_call.1} parent=11 // pred_region
          _
        $region32: #{tpu_custom_call.1} parent=11 // pred_fallthru
          _
        // Predicated region
        $region33: #{tpu_custom_call.1} parent=11 // pred_check
          %p290 = pneg %p171
        $region34: #{tpu_custom_call.1} parent=11 // pred_check_branch
          %292 = sbr.rel (%p290) target = $region36
        $region35: #{tpu_custom_call.1} parent=11 // pred_region
          _
        $region36: #{tpu_custom_call.1} parent=11 // pred_fallthru
          _
        // Predicated region
        $region37: #{tpu_custom_call.1} parent=11 // pred_check
          %p293 = pneg %p192
        $region38: #{tpu_custom_call.1} parent=11 // pred_check_branch
          %295 = sbr.rel (%p293) target = $region40
        $region39: #{tpu_custom_call.1} parent=11 // pred_region
          _
        $region40: #{tpu_custom_call.1} parent=11 // pred_fallthru
          _
        // Predicated region
        $region41: #{tpu_custom_call.1} parent=11 // pred_check
          %p296 = pneg %p213
        $region42: #{tpu_custom_call.1} parent=11 // pred_check_branch
          %298 = sbr.rel (%p296) target = $region44
        $region43: #{tpu_custom_call.1} parent=11 // pred_region
          _
        $region44: #{tpu_custom_call.1} parent=11 // pred_fallthru
          _
        // Predicated region
        $region45: #{tpu_custom_call.1} parent=11 // pred_check
          %p299 = pneg %p234
        $region46: #{tpu_custom_call.1} parent=11 // pred_check_branch
          %301 = sbr.rel (%p299) target = $region48
        $region47: #{tpu_custom_call.1} parent=11 // pred_region
          _
        $region48: #{tpu_custom_call.1} parent=11 // pred_fallthru
          _
      $region12: #{tpu_custom_call.1} parent=5 // pred_fallthru
        _
      %p302 = scmp.lt.s32.totalorder %s19, 2
      // Predicated region
      $region49: #{tpu_custom_call.1} parent=5 // pred_check
        %p303 = pneg %p302
      $region50: #{tpu_custom_call.1} parent=5 // pred_check_branch
        %305 = sbr.rel (%p303) target = $region52
      $region51: #{tpu_custom_call.1} parent=5 // pred_region
        // Predicated region
        $region53: #{tpu_custom_call.1} parent=51 // pred_check
          %p306 = pneg %p39
        $region54: #{tpu_custom_call.1} parent=51 // pred_check_branch
          %308 = sbr.rel (%p306) target = $region56
        $region55: #{tpu_custom_call.1} parent=51 // pred_region
          %s309 = smul.u32 4, %s19
          %p310 = scmp.lt.s32.totalorder %s309, 7
          %s311 = scalar_select %p310, %s309, 7
          %s312 = smul.addr %s311, 24
          %s313 = smul.addr %s312, 8
          %s314 = scalar_lea.vmem %s0, %s313
          %s315 = smul.u32 4, %s19
        $region56: #{tpu_custom_call.1} parent=51 // pred_fallthru
          _
      $region52: #{tpu_custom_call.1} parent=5 // pred_fallthru
        _
      %p316 = scmp.le.s32.totalorder 1, %s19
      %p317 = scmp.lt.s32.totalorder %s19, 3
      %p318 = pnand %p316, %p317
      %p319 = pneg %p318
      // Predicated region
      $region57: #{tpu_custom_call.1} parent=5 // pred_check
        _
      $region58: #{tpu_custom_call.1} parent=5 // pred_check_branch
        %321 = sbr.rel (%p318) target = $region60
      $region59: #{tpu_custom_call.1} parent=5 // pred_region
        %s322 = ssub.s32 %s19, 1
        %s323 = smul.u32 4, %s24
        %p324 = scmp.lt.s32.totalorder %s323, 7
        %s325 = scalar_select %p324, %s323, 7
        %s326 = smul.addr %s325, 24
        %s327 = smul.addr %s326, 8
        %s328 = scalar_lea.vmem %s0, %s327
        %p329 = pneg %p45
        %p330 = pneg %p42
        %p331 = pneg %p66
        %p332 = pneg %p63
        %p333 = pneg %p87
        %p334 = pneg %p84
        %p335 = pneg %p108
        %p336 = pneg %p105
        %p337 = pneg %p129
        %p338 = pneg %p126
        %p339 = pneg %p150
        %p340 = pneg %p147
        %p341 = pneg %p171
        %p342 = pneg %p168
        %p343 = pneg %p192
        %p344 = pneg %p189
        %p345 = pneg %p213
        %p346 = pneg %p210
        %p347 = pneg %p234
        %p348 = pneg %p231
        %p349 = pneg %p260
        %p350 = pneg %p257
        %s351 = sand.u32 %s247, 1
        %s352 = scalar_lea.sflag [#allocation3], %s351
        %s353 = sand.u32 %s247, 1
        %s354 = smul.addr %s353, 768
        %s355 = scalar_lea.vmem [#allocation2], %s354
        %s356 = smul.u32 4, %s24
        %p357 = scmp.lt.s32.totalorder %s356, 7
        %s358 = scalar_select %p357, %s356, 7
        %s359 = smul.addr %s358, 24
        %s360 = smul.addr %s359, 8
        %s361 = scalar_lea.vmem %s0, %s360
        %s362 = smul.u32 4, %s24
        %s363 = smul.u32 4, %s24
        %v365 = vld [vmem:[%s1] sm:$0xff]
        %v366 = vld [vmem:[%s1 + $0x8] sm:$0xff]
        %v367 = vld [vmem:[%s1 + $0x10] sm:$0xff]
        %v368 = vld [vmem:[%s1 + $0x18] sm:$0xff]
        %v369 = vld [vmem:[%s1 + $0x20] sm:$0xff]
        %v370 = vld [vmem:[%s1 + $0x28] sm:$0xff]
        %v371 = vld [vmem:[%s1 + $0x30] sm:$0xff]
        %v372 = vld [vmem:[%s1 + $0x38] sm:$0xff]
        %v373 = vld [vmem:[%s1 + $0x40] sm:$0xff]
        %v374 = vld [vmem:[%s1 + $0x48] sm:$0xff]
        %v375 = vld [vmem:[%s1 + $0x50] sm:$0xff]
        %v376 = vld [vmem:[%s1 + $0x58] sm:$0xff]
        %v377 = vld [vmem:[%s1 + $0x60] sm:$0xff]
        %v378 = vld [vmem:[%s1 + $0x68] sm:$0xff]
        %v379 = vld [vmem:[%s1 + $0x70] sm:$0xff]
        %v380 = vld [vmem:[%s1 + $0x78] sm:$0xff]
        %v381 = vld [vmem:[%s1 + $0x80] sm:$0xff]
        %v382 = vld [vmem:[%s1 + $0x88] sm:$0xff]
        %v383 = vld [vmem:[%s1 + $0x90] sm:$0xff]
        %v384 = vld [vmem:[%s1 + $0x98] sm:$0xff]
        %v385 = vld [vmem:[%s1 + $0xa0] sm:$0xff]
        %v386 = vld [vmem:[%s1 + $0xa8] sm:$0xff]
        %v387 = vld [vmem:[%s1 + $0xb0] sm:$0xff]
        %v388 = vld [vmem:[%s1 + $0xb8] sm:$0xff]
        %v389 = vld [vmem:[%s1 + $0xc0] sm:$0xff]
        %v390 = vld [vmem:[%s1 + $0xc8] sm:$0xff]
        %v391 = vld [vmem:[%s1 + $0xd0] sm:$0xff]
        %v392 = vld [vmem:[%s1 + $0xd8] sm:$0xff]
        %v393 = vld [vmem:[%s1 + $0xe0] sm:$0xff]
        %v394 = vld [vmem:[%s1 + $0xe8] sm:$0xff]
        %v395 = vld [vmem:[%s1 + $0xf0] sm:$0xff]
        %v396 = vld [vmem:[%s1 + $0xf8] sm:$0xff]
        %v397 = vld [vmem:[%s361] sm:$0xff]
        %v398 = vld [vmem:[%s361 + $0x8] sm:$0xff]
        %v399 = vld [vmem:[%s361 + $0x10] sm:$0xff]
        %v400 = vld [vmem:[%s361 + $0x18] sm:$0xff]
        %v401 = vld [vmem:[%s361 + $0x20] sm:$0xff]
        %v402 = vld [vmem:[%s361 + $0x28] sm:$0xff]
        %v403 = vld [vmem:[%s361 + $0x30] sm:$0xff]
        %v404 = vld [vmem:[%s361 + $0x38] sm:$0xff]
        %v405 = vld [vmem:[%s361 + $0x40] sm:$0xff]
        %v406 = vld [vmem:[%s361 + $0x48] sm:$0xff]
        %v407 = vld [vmem:[%s361 + $0x50] sm:$0xff]
        %v408 = vld [vmem:[%s361 + $0x58] sm:$0xff]
        %v409 = vld [vmem:[%s361 + $0x60] sm:$0xff]
        %v410 = vld [vmem:[%s361 + $0x68] sm:$0xff]
        %v411 = vld [vmem:[%s361 + $0x70] sm:$0xff]
        %v412 = vld [vmem:[%s361 + $0x78] sm:$0xff]
        %v413 = vld [vmem:[%s361 + $0x80] sm:$0xff]
        %v414 = vld [vmem:[%s361 + $0x88] sm:$0xff]
        %v415 = vld [vmem:[%s361 + $0x90] sm:$0xff]
        %v416 = vld [vmem:[%s361 + $0x98] sm:$0xff]
        %v417 = vld [vmem:[%s361 + $0xa0] sm:$0xff]
        %v418 = vld [vmem:[%s361 + $0xa8] sm:$0xff]
        %v419 = vld [vmem:[%s361 + $0xb0] sm:$0xff]
        %v420 = vld [vmem:[%s361 + $0xb8] sm:$0xff]
        %v421 = vld [vmem:[%s361 + $0xc0] sm:$0xff]
        %v422 = vld [vmem:[%s361 + $0xc8] sm:$0xff]
        %v423 = vld [vmem:[%s361 + $0xd0] sm:$0xff]
        %v424 = vld [vmem:[%s361 + $0xd8] sm:$0xff]
        %v425 = vld [vmem:[%s361 + $0xe0] sm:$0xff]
        %v426 = vld [vmem:[%s361 + $0xe8] sm:$0xff]
        %v427 = vld [vmem:[%s361 + $0xf0] sm:$0xff]
        %v428 = vld [vmem:[%s361 + $0xf8] sm:$0xff]
        %v429 = vld [vmem:[%s361 + $0x100] sm:$0xff]
        %v430 = vld [vmem:[%s361 + $0x108] sm:$0xff]
        %v431 = vld [vmem:[%s361 + $0x110] sm:$0xff]
        %v432 = vld [vmem:[%s361 + $0x118] sm:$0xff]
        %v433 = vld [vmem:[%s361 + $0x120] sm:$0xff]
        %v434 = vld [vmem:[%s361 + $0x128] sm:$0xff]
        %v435 = vld [vmem:[%s361 + $0x130] sm:$0xff]
        %v436 = vld [vmem:[%s361 + $0x138] sm:$0xff]
        %v437 = vld [vmem:[%s361 + $0x140] sm:$0xff]
        %v438 = vld [vmem:[%s361 + $0x148] sm:$0xff]
        %v439 = vld [vmem:[%s361 + $0x150] sm:$0xff]
        %v440 = vld [vmem:[%s361 + $0x158] sm:$0xff]
        %v441 = vld [vmem:[%s361 + $0x160] sm:$0xff]
        %v442 = vld [vmem:[%s361 + $0x168] sm:$0xff]
        %v443 = vld [vmem:[%s361 + $0x170] sm:$0xff]
        %v444 = vld [vmem:[%s361 + $0x178] sm:$0xff]
        %v445 = vld [vmem:[%s361 + $0x180] sm:$0xff]
        %v446 = vld [vmem:[%s361 + $0x188] sm:$0xff]
        %v447 = vld [vmem:[%s361 + $0x190] sm:$0xff]
        %v448 = vld [vmem:[%s361 + $0x198] sm:$0xff]
        %v449 = vld [vmem:[%s361 + $0x1a0] sm:$0xff]
        %v450 = vld [vmem:[%s361 + $0x1a8] sm:$0xff]
        %v451 = vld [vmem:[%s361 + $0x1b0] sm:$0xff]
        %v452 = vld [vmem:[%s361 + $0x1b8] sm:$0xff]
        %v453 = vld [vmem:[%s361 + $0x1c0] sm:$0xff]
        %v454 = vld [vmem:[%s361 + $0x1c8] sm:$0xff]
        %v455 = vld [vmem:[%s361 + $0x1d0] sm:$0xff]
        %v456 = vld [vmem:[%s361 + $0x1d8] sm:$0xff]
        %v457 = vld [vmem:[%s361 + $0x1e0] sm:$0xff]
        %v458 = vld [vmem:[%s361 + $0x1e8] sm:$0xff]
        %v459 = vld [vmem:[%s361 + $0x1f0] sm:$0xff]
        %v460 = vld [vmem:[%s361 + $0x1f8] sm:$0xff]
        %v461 = vld [vmem:[%s361 + $0x200] sm:$0xff]
        %v462 = vld [vmem:[%s361 + $0x208] sm:$0xff]
        %v463 = vld [vmem:[%s361 + $0x210] sm:$0xff]
        %v464 = vld [vmem:[%s361 + $0x218] sm:$0xff]
        %v465 = vld [vmem:[%s361 + $0x220] sm:$0xff]
        %v466 = vld [vmem:[%s361 + $0x228] sm:$0xff]
        %v467 = vld [vmem:[%s361 + $0x230] sm:$0xff]
        %v468 = vld [vmem:[%s361 + $0x238] sm:$0xff]
        %v469 = vld [vmem:[%s361 + $0x240] sm:$0xff]
        %v470 = vld [vmem:[%s361 + $0x248] sm:$0xff]
        %v471 = vld [vmem:[%s361 + $0x250] sm:$0xff]
        %v472 = vld [vmem:[%s361 + $0x258] sm:$0xff]
        %v473 = vld [vmem:[%s361 + $0x260] sm:$0xff]
        %v474 = vld [vmem:[%s361 + $0x268] sm:$0xff]
        %v475 = vld [vmem:[%s361 + $0x270] sm:$0xff]
        %v476 = vld [vmem:[%s361 + $0x278] sm:$0xff]
        %v477 = vld [vmem:[%s361 + $0x280] sm:$0xff]
        %v478 = vld [vmem:[%s361 + $0x288] sm:$0xff]
        %v479 = vld [vmem:[%s361 + $0x290] sm:$0xff]
        %v480 = vld [vmem:[%s361 + $0x298] sm:$0xff]
        %v481 = vld [vmem:[%s361 + $0x2a0] sm:$0xff]
        %v482 = vld [vmem:[%s361 + $0x2a8] sm:$0xff]
        %v483 = vld [vmem:[%s361 + $0x2b0] sm:$0xff]
        %v484 = vld [vmem:[%s361 + $0x2b8] sm:$0xff]
        %v485 = vld [vmem:[%s361 + $0x2c0] sm:$0xff]
        %v486 = vld [vmem:[%s361 + $0x2c8] sm:$0xff]
        %v487 = vld [vmem:[%s361 + $0x2d0] sm:$0xff]
        %v488 = vld [vmem:[%s361 + $0x2d8] sm:$0xff]
        %v489 = vld [vmem:[%s361 + $0x2e0] sm:$0xff]
        %v490 = vld [vmem:[%s361 + $0x2e8] sm:$0xff]
        %v491 = vld [vmem:[%s361 + $0x2f0] sm:$0xff]
        %v492 = vld [vmem:[%s361 + $0x2f8] sm:$0xff]
        %v493 = vpack.c.bf16 %v400, %v397
        %v494 = vpack.c.bf16 %v401, %v398
        %v495 = vpack.c.bf16 %v402, %v399
        %v496 = vpack.c.bf16 %v406, %v403
        %v497 = vpack.c.bf16 %v407, %v404
        %v498 = vpack.c.bf16 %v408, %v405
        %v499 = vpack.c.bf16 %v412, %v409
        %v500 = vpack.c.bf16 %v413, %v410
        %v501 = vpack.c.bf16 %v414, %v411
        %v502 = vpack.c.bf16 %v418, %v415
        %v503 = vpack.c.bf16 %v419, %v416
        %v504 = vpack.c.bf16 %v420, %v417
        %v505 = vpack.c.bf16 %v424, %v421
        %v506 = vpack.c.bf16 %v425, %v422
        %v507 = vpack.c.bf16 %v426, %v423
        %v508 = vpack.c.bf16 %v430, %v427
        %v509 = vpack.c.bf16 %v431, %v428
        %v510 = vpack.c.bf16 %v432, %v429
        %v511 = vpack.c.bf16 %v436, %v433
        %v512 = vpack.c.bf16 %v437, %v434
        %v513 = vpack.c.bf16 %v438, %v435
        %v514 = vpack.c.bf16 %v442, %v439
        %v515 = vpack.c.bf16 %v443, %v440
        %v516 = vpack.c.bf16 %v444, %v441
        %v517 = vpack.c.bf16 %v448, %v445
        %v518 = vpack.c.bf16 %v449, %v446
        %v519 = vpack.c.bf16 %v450, %v447
        %v520 = vpack.c.bf16 %v454, %v451
        %v521 = vpack.c.bf16 %v455, %v452
        %v522 = vpack.c.bf16 %v456, %v453
        %v523 = vpack.c.bf16 %v460, %v457
        %v524 = vpack.c.bf16 %v461, %v458
        %v525 = vpack.c.bf16 %v462, %v459
        %v526 = vpack.c.bf16 %v466, %v463
        %v527 = vpack.c.bf16 %v467, %v464
        %v528 = vpack.c.bf16 %v468, %v465
        %v529 = vpack.c.bf16 %v472, %v469
        %v530 = vpack.c.bf16 %v473, %v470
        %v531 = vpack.c.bf16 %v474, %v471
        %v532 = vpack.c.bf16 %v478, %v475
        %v533 = vpack.c.bf16 %v479, %v476
        %v534 = vpack.c.bf16 %v480, %v477
        %v535 = vpack.c.bf16 %v484, %v481
        %v536 = vpack.c.bf16 %v485, %v482
        %v537 = vpack.c.bf16 %v486, %v483
        %v538 = vpack.c.bf16 %v490, %v487
        %v539 = vpack.c.bf16 %v491, %v488
        %v540 = vpack.c.bf16 %v492, %v489
        %v541 = vld [vmem:[%s2] sm:$0xf]
        %v542 = vld [vmem:[%s2 + $0x4] sm:$0xf]
        %v543 = vld [vmem:[%s2 + $0x8] sm:$0xf]
        %v544 = vld [vmem:[%s2 + $0xc] sm:$0xf]
        %v545 = vld [vmem:[%s2 + $0x10] sm:$0xf]
        %v546 = vld [vmem:[%s2 + $0x14] sm:$0xf]
        %v547 = vld [vmem:[%s2 + $0x18] sm:$0xf]
        %v548 = vld [vmem:[%s2 + $0x1c] sm:$0xf]
        %v549 = vld [vmem:[%s2 + $0x20] sm:$0xf]
        %v550 = vld [vmem:[%s2 + $0x24] sm:$0xf]
        %v551 = vld [vmem:[%s2 + $0x28] sm:$0xf]
        %v552 = vld [vmem:[%s2 + $0x2c] sm:$0xf]
        %v553 = vld [vmem:[%s2 + $0x30] sm:$0xf]
        %v554 = vld [vmem:[%s2 + $0x34] sm:$0xf]
        %v555 = vld [vmem:[%s2 + $0x38] sm:$0xf]
        %v556 = vld [vmem:[%s2 + $0x3c] sm:$0xf]
        %v557 = vld [vmem:[%s2 + $0x40] sm:$0xf]
        %v558 = vld [vmem:[%s2 + $0x44] sm:$0xf]
        %v559 = vld [vmem:[%s2 + $0x48] sm:$0xf]
        %v560 = vld [vmem:[%s2 + $0x4c] sm:$0xf]
        %v561 = vld [vmem:[%s2 + $0x50] sm:$0xf]
        %v562 = vld [vmem:[%s2 + $0x54] sm:$0xf]
        %v563 = vld [vmem:[%s2 + $0x58] sm:$0xf]
        %v564 = vld [vmem:[%s2 + $0x5c] sm:$0xf]
        %v565 = vld [vmem:[%s2 + $0x60] sm:$0xf]
        %v566 = vld [vmem:[%s2 + $0x64] sm:$0xf]
        %v567 = vld [vmem:[%s2 + $0x68] sm:$0xf]
        %v568 = vld [vmem:[%s2 + $0x6c] sm:$0xf]
        %v569 = vld [vmem:[%s2 + $0x70] sm:$0xf]
        %v570 = vld [vmem:[%s2 + $0x74] sm:$0xf]
        %v571 = vld [vmem:[%s2 + $0x78] sm:$0xf]
        %v572 = vld [vmem:[%s2 + $0x7c] sm:$0xf]
        %v573 = vld [vmem:[%s2 + $0x80] sm:$0xf]
        %v574 = vld [vmem:[%s2 + $0x84] sm:$0xf]
        %v575 = vld [vmem:[%s2 + $0x88] sm:$0xf]
        %v576 = vld [vmem:[%s2 + $0x8c] sm:$0xf]
        %v577 = vld [vmem:[%s2 + $0x90] sm:$0xf]
        %v578 = vld [vmem:[%s2 + $0x94] sm:$0xf]
        %v579 = vld [vmem:[%s2 + $0x98] sm:$0xf]
        %v580 = vld [vmem:[%s2 + $0x9c] sm:$0xf]
        %v581 = vld [vmem:[%s3] sm:$0x1]
        %v583 = vlaneseq
        %v584 = vshrl.u32 %v583, 7
        %v585 = vsub.s32 0, %v584
        %v586 = vrot.slane %v581, %v585
        %v628 = vunpack.c.l.b16 %v541
        %v629 = vunpack.c.l.b16 %v542
        %v630 = vunpack.c.l.b16 %v543
        %v631 = vunpack.c.l.b16 %v544
        %v632 = vunpack.c.l.b16 %v545
        %v633 = vunpack.c.l.b16 %v546
        %v634 = vunpack.c.l.b16 %v547
        %v635 = vunpack.c.l.b16 %v548
        %v636 = vunpack.c.l.b16 %v549
        %v637 = vunpack.c.l.b16 %v550
        %v638 = vunpack.c.l.b16 %v551
        %v639 = vunpack.c.l.b16 %v552
        %v640 = vunpack.c.l.b16 %v553
        %v641 = vunpack.c.l.b16 %v554
        %v642 = vunpack.c.l.b16 %v555
        %v643 = vunpack.c.l.b16 %v556
        %v644 = vunpack.c.l.b16 %v557
        %v645 = vunpack.c.l.b16 %v558
        %v646 = vunpack.c.l.b16 %v559
        %v647 = vunpack.c.l.b16 %v560
        %v648 = vunpack.c.l.b16 %v561
        %v649 = vunpack.c.l.b16 %v562
        %v650 = vunpack.c.l.b16 %v563
        %v651 = vunpack.c.l.b16 %v564
        %v652 = vunpack.c.l.b16 %v565
        %v653 = vunpack.c.l.b16 %v566
        %v654 = vunpack.c.l.b16 %v567
        %v655 = vunpack.c.l.b16 %v568
        %v656 = vunpack.c.l.b16 %v569
        %v657 = vunpack.c.l.b16 %v570
        %v658 = vunpack.c.l.b16 %v571
        %v659 = vunpack.c.l.b16 %v572
        %v660 = vunpack.c.l.b16 %v573
        %v661 = vunpack.c.l.b16 %v574
        %v662 = vunpack.c.l.b16 %v575
        %v663 = vunpack.c.l.b16 %v576
        %v664 = vunpack.c.l.b16 %v577
        %v665 = vunpack.c.l.b16 %v578
        %v666 = vunpack.c.l.b16 %v579
        %v667 = vunpack.c.l.b16 %v580
        %v668 = vpack.c.b16 %v629, %v628
        %v669 = vpack.c.b16 %v631, %v630
        %v670 = vpack.c.b16 %v633, %v632
        %v671 = vpack.c.b16 %v635, %v634
        %v672 = vpack.c.b16 %v637, %v636
        %v673 = vpack.c.b16 %v639, %v638
        %v674 = vpack.c.b16 %v641, %v640
        %v675 = vpack.c.b16 %v643, %v642
        %v676 = vpack.c.b16 %v645, %v644
        %v677 = vpack.c.b16 %v647, %v646
        %v678 = vpack.c.b16 %v649, %v648
        %v679 = vpack.c.b16 %v651, %v650
        %v680 = vpack.c.b16 %v653, %v652
        %v681 = vpack.c.b16 %v655, %v654
        %v682 = vpack.c.b16 %v657, %v656
        %v683 = vpack.c.b16 %v659, %v658
        %v684 = vpack.c.b16 %v661, %v660
        %v685 = vpack.c.b16 %v663, %v662
        %v686 = vpack.c.b16 %v665, %v664
        %v687 = vpack.c.b16 %v667, %v666
        %vm708 = vcmask 523264
        %v710 = vsel %vm708, %v495, 0
        %v713 = vsel %vm708, %v498, 0
        %v716 = vsel %vm708, %v501, 0
        %v719 = vsel %vm708, %v504, 0
        %v722 = vsel %vm708, %v507, 0
        %v725 = vsel %vm708, %v510, 0
        %v728 = vsel %vm708, %v513, 0
        %v731 = vsel %vm708, %v516, 0
        %v734 = vsel %vm708, %v519, 0
        %v737 = vsel %vm708, %v522, 0
        %v740 = vsel %vm708, %v525, 0
        %v743 = vsel %vm708, %v528, 0
        %v746 = vsel %vm708, %v531, 0
        %v749 = vsel %vm708, %v534, 0
        %v752 = vsel %vm708, %v537, 0
        %v755 = vsel %vm708, %v540, 0
        %757 = vmatprep.subr.bf16.mxu0 0
        %758 = vmatpush1.bf16.msra.mxu0 %v675
        %759 = vmatprep.subr.bf16.mxu0 0
        %760 = vmatpush1.bf16.msra.mxu0 %v674
        %761 = vmatprep.subr.bf16.mxu0 0
        %762 = vmatpush1.bf16.msra.mxu0 %v673
        %763 = vmatprep.subr.bf16.mxu0 0
        %764 = vmatpush1.bf16.msra.mxu0 %v672
        %765 = vmatprep.subr.bf16.mxu0 0
        %766 = vmatpush1.bf16.msra.mxu0 %v671
        %767 = vmatprep.subr.bf16.mxu0 0
        %768 = vmatpush1.bf16.msra.mxu0 %v670
        %769 = vmatprep.subr.bf16.mxu0 0
        %770 = vmatpush1.bf16.msra.mxu0 %v669
        %771 = vmatprep.subr.bf16.mxu0 0
        %772 = vmatpush1.bf16.msra.mxu0 %v668
        %773 = vmatprep.subr.bf16.mxu0 0
        %774 = vmatpush2.bf16.msra.mxu0 %v683
        %775 = vmatprep.subr.bf16.mxu0 0
        %776 = vmatpush2.bf16.msra.mxu0 %v682
        %777 = vmatprep.subr.bf16.mxu0 0
        %778 = vmatpush2.bf16.msra.mxu0 %v681
        %779 = vmatprep.subr.bf16.mxu0 0
        %780 = vmatpush2.bf16.msra.mxu0 %v680
        %781 = vmatprep.subr.bf16.mxu0 0
        %782 = vmatpush2.bf16.msra.mxu0 %v679
        %783 = vmatprep.subr.bf16.mxu0 0
        %784 = vmatpush2.bf16.msra.mxu0 %v678
        %785 = vmatprep.subr.bf16.mxu0 0
        %786 = vmatpush2.bf16.msra.mxu0 %v677
        %787 = vmatprep.subr.bf16.mxu0 0
        %788 = vmatpush2.bf16.msra.mxu0 %v676
        %789 = vmatprep.mubr.bf16.mxu0 %v494
        %790 = vmatmul.mubr.bf16.gmra.mxu0 %v493
        %v791 = vpop.f32.mrf.mxu0
        %v792 = vadd.f32 %v586, %v791
        %v793 = vpop.f32.mrf.mxu0
        %v794 = vpop.f32.mrf.mxu0
        %v795 = vadd.f32 %v586, %v794
        %v796 = vpop.f32.mrf.mxu0
        %797 = vmatprep.mubr.bf16.mxu0 %v497
        %798 = vmatmul.mubr.bf16.gmra.mxu0 %v496
        %v799 = vpop.f32.mrf.mxu0
        %v800 = vadd.f32 %v586, %v799
        %v801 = vpop.f32.mrf.mxu0
        %v802 = vpop.f32.mrf.mxu0
        %v803 = vadd.f32 %v586, %v802
        %v804 = vpop.f32.mrf.mxu0
        %805 = vmatprep.mubr.bf16.mxu0 %v500
        %806 = vmatmul.mubr.bf16.gmra.mxu0 %v499
        %v807 = vpop.f32.mrf.mxu0
        %v808 = vadd.f32 %v586, %v807
        %v809 = vpop.f32.mrf.mxu0
        %v810 = vpop.f32.mrf.mxu0
        %v811 = vadd.f32 %v586, %v810
        %v812 = vpop.f32.mrf.mxu0
        %813 = vmatprep.mubr.bf16.mxu0 %v503
        %814 = vmatmul.mubr.bf16.gmra.mxu0 %v502
        %v815 = vpop.f32.mrf.mxu0
        %v816 = vadd.f32 %v586, %v815
        %v817 = vpop.f32.mrf.mxu0
        %v818 = vpop.f32.mrf.mxu0
        %v819 = vadd.f32 %v586, %v818
        %v820 = vpop.f32.mrf.mxu0
        %821 = vmatprep.mubr.bf16.mxu0 %v506
        %822 = vmatmul.mubr.bf16.gmra.mxu0 %v505
        %v823 = vpop.f32.mrf.mxu0
        %v824 = vadd.f32 %v586, %v823
        %v825 = vpop.f32.mrf.mxu0
        %v826 = vpop.f32.mrf.mxu0
        %v827 = vadd.f32 %v586, %v826
        %v828 = vpop.f32.mrf.mxu0
        %829 = vmatprep.mubr.bf16.mxu0 %v509
        %830 = vmatmul.mubr.bf16.gmra.mxu0 %v508
        %v831 = vpop.f32.mrf.mxu0
        %v832 = vadd.f32 %v586, %v831
        %v833 = vpop.f32.mrf.mxu0
        %v834 = vpop.f32.mrf.mxu0
        %v835 = vadd.f32 %v586, %v834
        %v836 = vpop.f32.mrf.mxu0
        %837 = vmatprep.mubr.bf16.mxu0 %v512
        %838 = vmatmul.mubr.bf16.gmra.mxu0 %v511
        %v839 = vpop.f32.mrf.mxu0
        %v840 = vadd.f32 %v586, %v839
        %v841 = vpop.f32.mrf.mxu0
        %v842 = vpop.f32.mrf.mxu0
        %v843 = vadd.f32 %v586, %v842
        %v844 = vpop.f32.mrf.mxu0
        %845 = vmatprep.mubr.bf16.mxu0 %v515
        %846 = vmatmul.mubr.bf16.gmra.mxu0 %v514
        %v847 = vpop.f32.mrf.mxu0
        %v848 = vadd.f32 %v586, %v847
        %v849 = vpop.f32.mrf.mxu0
        %v850 = vpop.f32.mrf.mxu0
        %v851 = vadd.f32 %v586, %v850
        %v852 = vpop.f32.mrf.mxu0
        %853 = vmatprep.mubr.bf16.mxu0 %v518
        %854 = vmatmul.mubr.bf16.gmra.mxu0 %v517
        %v855 = vpop.f32.mrf.mxu0
        %v856 = vadd.f32 %v586, %v855
        %v857 = vpop.f32.mrf.mxu0
        %v858 = vpop.f32.mrf.mxu0
        %v859 = vadd.f32 %v586, %v858
        %v860 = vpop.f32.mrf.mxu0
        %861 = vmatprep.mubr.bf16.mxu0 %v521
        %862 = vmatmul.mubr.bf16.gmra.mxu0 %v520
        %v863 = vpop.f32.mrf.mxu0
        %v864 = vadd.f32 %v586, %v863
        %v865 = vpop.f32.mrf.mxu0
        %v866 = vpop.f32.mrf.mxu0
        %v867 = vadd.f32 %v586, %v866
        %v868 = vpop.f32.mrf.mxu0
        %869 = vmatprep.mubr.bf16.mxu0 %v524
        %870 = vmatmul.mubr.bf16.gmra.mxu0 %v523
        %v871 = vpop.f32.mrf.mxu0
        %v872 = vadd.f32 %v586, %v871
        %v873 = vpop.f32.mrf.mxu0
        %v874 = vpop.f32.mrf.mxu0
        %v875 = vadd.f32 %v586, %v874
        %v876 = vpop.f32.mrf.mxu0
        %877 = vmatprep.mubr.bf16.mxu0 %v527
        %878 = vmatmul.mubr.bf16.gmra.mxu0 %v526
        %v879 = vpop.f32.mrf.mxu0
        %v880 = vadd.f32 %v586, %v879
        %v881 = vpop.f32.mrf.mxu0
        %v882 = vpop.f32.mrf.mxu0
        %v883 = vadd.f32 %v586, %v882
        %v884 = vpop.f32.mrf.mxu0
        %885 = vmatprep.mubr.bf16.mxu0 %v530
        %886 = vmatmul.mubr.bf16.gmra.mxu0 %v529
        %v887 = vpop.f32.mrf.mxu0
        %v888 = vadd.f32 %v586, %v887
        %v889 = vpop.f32.mrf.mxu0
        %v890 = vpop.f32.mrf.mxu0
        %v891 = vadd.f32 %v586, %v890
        %v892 = vpop.f32.mrf.mxu0
        %893 = vmatprep.mubr.bf16.mxu0 %v533
        %894 = vmatmul.mubr.bf16.gmra.mxu0 %v532
        %v895 = vpop.f32.mrf.mxu0
        %v896 = vadd.f32 %v586, %v895
        %v897 = vpop.f32.mrf.mxu0
        %v898 = vpop.f32.mrf.mxu0
        %v899 = vadd.f32 %v586, %v898
        %v900 = vpop.f32.mrf.mxu0
        %901 = vmatprep.mubr.bf16.mxu0 %v536
        %902 = vmatmul.mubr.bf16.gmra.mxu0 %v535
        %v903 = vpop.f32.mrf.mxu0
        %v904 = vadd.f32 %v586, %v903
        %v905 = vpop.f32.mrf.mxu0
        %v906 = vpop.f32.mrf.mxu0
        %v907 = vadd.f32 %v586, %v906
        %v908 = vpop.f32.mrf.mxu0
        %909 = vmatprep.mubr.bf16.mxu0 %v539
        %910 = vmatmul.mubr.bf16.gmra.mxu0 %v538
        %v911 = vpop.f32.mrf.mxu0
        %v912 = vadd.f32 %v586, %v911
        %v913 = vpop.f32.mrf.mxu0
        %v914 = vpop.f32.mrf.mxu0
        %v915 = vadd.f32 %v586, %v914
        %v916 = vpop.f32.mrf.mxu0
        %917 = vdwg.mxu0
        %918 = vmatprep.subr.bf16.mxu0 0
        %919 = vmatpush1.bf16.msra.mxu0 0
        %920 = vmatprep.subr.bf16.mxu0 0
        %921 = vmatpush1.bf16.msra.mxu0 0
        %922 = vmatprep.subr.bf16.mxu0 0
        %923 = vmatpush1.bf16.msra.mxu0 0
        %924 = vmatprep.subr.bf16.mxu0 0
        %925 = vmatpush1.bf16.msra.mxu0 0
        %926 = vmatprep.subr.bf16.mxu0 0
        %927 = vmatpush1.bf16.msra.mxu0 %v687
        %928 = vmatprep.subr.bf16.mxu0 0
        %929 = vmatpush1.bf16.msra.mxu0 %v686
        %930 = vmatprep.subr.bf16.mxu0 0
        %931 = vmatpush1.bf16.msra.mxu0 %v685
        %932 = vmatprep.subr.bf16.mxu0 0
        %933 = vmatpush1.bf16.msra.mxu0 %v684
        %934 = vmatprep.subr.bf16.mxu0 0
        %935 = vmatpush2.bf16.msra.mxu0 0
        %936 = vmatprep.subr.bf16.mxu0 0
        %937 = vmatpush2.bf16.msra.mxu0 0
        %938 = vmatprep.subr.bf16.mxu0 0
        %939 = vmatpush2.bf16.msra.mxu0 0
        %940 = vmatprep.subr.bf16.mxu0 0
        %941 = vmatpush2.bf16.msra.mxu0 0
        %942 = vmatprep.subr.bf16.mxu0 0
        %943 = vmatpush2.bf16.msra.mxu0 0
        %944 = vmatprep.subr.bf16.mxu0 0
        %945 = vmatpush2.bf16.msra.mxu0 0
        %946 = vmatprep.subr.bf16.mxu0 0
        %947 = vmatpush2.bf16.msra.mxu0 0
        %948 = vmatprep.subr.bf16.mxu0 0
        %949 = vmatpush2.bf16.msra.mxu0 0
        %950 = vmatprep.mubr.bf16.mxu0 0
        %951 = vmatmul.mubr.bf16.gmra.mxu0 %v710
        %v952 = vpop.f32.mrf.mxu0
        %v953 = vadd.f32 %v792, %v952
        %v954 = vpop.f32.mrf.mxu0
        %v955 = vpop.f32.mrf.mxu0
        %v956 = vadd.f32 %v795, %v955
        %v957 = vpop.f32.mrf.mxu0
        %958 = vmatprep.mubr.bf16.mxu0 0
        %959 = vmatmul.mubr.bf16.gmra.mxu0 %v713
        %v960 = vpop.f32.mrf.mxu0
        %v961 = vadd.f32 %v800, %v960
        %v962 = vpop.f32.mrf.mxu0
        %v963 = vpop.f32.mrf.mxu0
        %v964 = vadd.f32 %v803, %v963
        %v965 = vpop.f32.mrf.mxu0
        %966 = vmatprep.mubr.bf16.mxu0 0
        %967 = vmatmul.mubr.bf16.gmra.mxu0 %v716
        %v968 = vpop.f32.mrf.mxu0
        %v969 = vadd.f32 %v808, %v968
        %v970 = vpop.f32.mrf.mxu0
        %v971 = vpop.f32.mrf.mxu0
        %v972 = vadd.f32 %v811, %v971
        %v973 = vpop.f32.mrf.mxu0
        %974 = vmatprep.mubr.bf16.mxu0 0
        %975 = vmatmul.mubr.bf16.gmra.mxu0 %v719
        %v976 = vpop.f32.mrf.mxu0
        %v977 = vadd.f32 %v816, %v976
        %v978 = vpop.f32.mrf.mxu0
        %v979 = vpop.f32.mrf.mxu0
        %v980 = vadd.f32 %v819, %v979
        %v981 = vpop.f32.mrf.mxu0
        %982 = vmatprep.mubr.bf16.mxu0 0
        %983 = vmatmul.mubr.bf16.gmra.mxu0 %v722
        %v984 = vpop.f32.mrf.mxu0
        %v985 = vadd.f32 %v824, %v984
        %v986 = vpop.f32.mrf.mxu0
        %v987 = vpop.f32.mrf.mxu0
        %v988 = vadd.f32 %v827, %v987
        %v989 = vpop.f32.mrf.mxu0
        %990 = vmatprep.mubr.bf16.mxu0 0
        %991 = vmatmul.mubr.bf16.gmra.mxu0 %v725
        %v992 = vpop.f32.mrf.mxu0
        %v993 = vadd.f32 %v832, %v992
        %v994 = vpop.f32.mrf.mxu0
        %v995 = vpop.f32.mrf.mxu0
        %v996 = vadd.f32 %v835, %v995
        %v997 = vpop.f32.mrf.mxu0
        %998 = vmatprep.mubr.bf16.mxu0 0
        %999 = vmatmul.mubr.bf16.gmra.mxu0 %v728
        %v1000 = vpop.f32.mrf.mxu0
        %v1001 = vadd.f32 %v840, %v1000
        %v1002 = vpop.f32.mrf.mxu0
        %v1003 = vpop.f32.mrf.mxu0
        %v1004 = vadd.f32 %v843, %v1003
        %v1005 = vpop.f32.mrf.mxu0
        %1006 = vmatprep.mubr.bf16.mxu0 0
        %1007 = vmatmul.mubr.bf16.gmra.mxu0 %v731
        %v1008 = vpop.f32.mrf.mxu0
        %v1009 = vadd.f32 %v848, %v1008
        %v1010 = vpop.f32.mrf.mxu0
        %v1011 = vpop.f32.mrf.mxu0
        %v1012 = vadd.f32 %v851, %v1011
        %v1013 = vpop.f32.mrf.mxu0
        %1014 = vmatprep.mubr.bf16.mxu0 0
        %1015 = vmatmul.mubr.bf16.gmra.mxu0 %v734
        %v1016 = vpop.f32.mrf.mxu0
        %v1017 = vadd.f32 %v856, %v1016
        %v1018 = vpop.f32.mrf.mxu0
        %v1019 = vpop.f32.mrf.mxu0
        %v1020 = vadd.f32 %v859, %v1019
        %v1021 = vpop.f32.mrf.mxu0
        %1022 = vmatprep.mubr.bf16.mxu0 0
        %1023 = vmatmul.mubr.bf16.gmra.mxu0 %v737
        %v1024 = vpop.f32.mrf.mxu0
        %v1025 = vadd.f32 %v864, %v1024
        %v1026 = vpop.f32.mrf.mxu0
        %v1027 = vpop.f32.mrf.mxu0
        %v1028 = vadd.f32 %v867, %v1027
        %v1029 = vpop.f32.mrf.mxu0
        %1030 = vmatprep.mubr.bf16.mxu0 0
        %1031 = vmatmul.mubr.bf16.gmra.mxu0 %v740
        %v1032 = vpop.f32.mrf.mxu0
        %v1033 = vadd.f32 %v872, %v1032
        %v1034 = vpop.f32.mrf.mxu0
        %v1035 = vpop.f32.mrf.mxu0
        %v1036 = vadd.f32 %v875, %v1035
        %v1037 = vpop.f32.mrf.mxu0
        %1038 = vmatprep.mubr.bf16.mxu0 0
        %1039 = vmatmul.mubr.bf16.gmra.mxu0 %v743
        %v1040 = vpop.f32.mrf.mxu0
        %v1041 = vadd.f32 %v880, %v1040
        %v1042 = vpop.f32.mrf.mxu0
        %v1043 = vpop.f32.mrf.mxu0
        %v1044 = vadd.f32 %v883, %v1043
        %v1045 = vpop.f32.mrf.mxu0
        %1046 = vmatprep.mubr.bf16.mxu0 0
        %1047 = vmatmul.mubr.bf16.gmra.mxu0 %v746
        %v1048 = vpop.f32.mrf.mxu0
        %v1049 = vadd.f32 %v888, %v1048
        %v1050 = vpop.f32.mrf.mxu0
        %v1051 = vpop.f32.mrf.mxu0
        %v1052 = vadd.f32 %v891, %v1051
        %v1053 = vpop.f32.mrf.mxu0
        %1054 = vmatprep.mubr.bf16.mxu0 0
        %1055 = vmatmul.mubr.bf16.gmra.mxu0 %v749
        %v1056 = vpop.f32.mrf.mxu0
        %v1057 = vadd.f32 %v896, %v1056
        %v1058 = vpop.f32.mrf.mxu0
        %v1059 = vpop.f32.mrf.mxu0
        %v1060 = vadd.f32 %v899, %v1059
        %v1061 = vpop.f32.mrf.mxu0
        %1062 = vmatprep.mubr.bf16.mxu0 0
        %1063 = vmatmul.mubr.bf16.gmra.mxu0 %v752
        %v1064 = vpop.f32.mrf.mxu0
        %v1065 = vadd.f32 %v904, %v1064
        %v1066 = vpop.f32.mrf.mxu0
        %v1067 = vpop.f32.mrf.mxu0
        %v1068 = vadd.f32 %v907, %v1067
        %v1069 = vpop.f32.mrf.mxu0
        %1070 = vmatprep.mubr.bf16.mxu0 0
        %1071 = vmatmul.mubr.bf16.gmra.mxu0 %v755
        %v1072 = vpop.f32.mrf.mxu0
        %v1073 = vadd.f32 %v912, %v1072
        %v1074 = vpop.f32.mrf.mxu0
        %v1075 = vpop.f32.mrf.mxu0
        %v1076 = vadd.f32 %v915, %v1075
        %v1077 = vpop.f32.mrf.mxu0
        %1078 = vdwg.mxu0
        %v1079 = vmax.f32 %v953, 0.0
        %v1080 = vmax.f32 %v956, 0.0
        %v1081 = vmax.f32 %v961, 0.0
        %v1082 = vmax.f32 %v964, 0.0
        %v1083 = vmax.f32 %v969, 0.0
        %v1084 = vmax.f32 %v972, 0.0
        %v1085 = vmax.f32 %v977, 0.0
        %v1086 = vmax.f32 %v980, 0.0
        %v1087 = vmax.f32 %v985, 0.0
        %v1088 = vmax.f32 %v988, 0.0
        %v1089 = vmax.f32 %v993, 0.0
        %v1090 = vmax.f32 %v996, 0.0
        %v1091 = vmax.f32 %v1001, 0.0
        %v1092 = vmax.f32 %v1004, 0.0
        %v1093 = vmax.f32 %v1009, 0.0
        %v1094 = vmax.f32 %v1012, 0.0
        %v1095 = vmax.f32 %v1017, 0.0
        %v1096 = vmax.f32 %v1020, 0.0
        %v1097 = vmax.f32 %v1025, 0.0
        %v1098 = vmax.f32 %v1028, 0.0
        %v1099 = vmax.f32 %v1033, 0.0
        %v1100 = vmax.f32 %v1036, 0.0
        %v1101 = vmax.f32 %v1041, 0.0
        %v1102 = vmax.f32 %v1044, 0.0
        %v1103 = vmax.f32 %v1049, 0.0
        %v1104 = vmax.f32 %v1052, 0.0
        %v1105 = vmax.f32 %v1057, 0.0
        %v1106 = vmax.f32 %v1060, 0.0
        %v1107 = vmax.f32 %v1065, 0.0
        %v1108 = vmax.f32 %v1068, 0.0
        %v1109 = vmax.f32 %v1073, 0.0
        %v1110 = vmax.f32 %v1076, 0.0
        %1143 = vrot.lane.b32.xlu0 %v1079, 96
        %v1144 = vpop.permute.xlu0 %1143
        %1145 = vrot.lane.b32.xlu0 %v1080, 96
        %v1146 = vpop.permute.xlu0 %1145
        %1147 = vrot.lane.b32.xlu0 %v1081, 96
        %v1148 = vpop.permute.xlu0 %1147
        %1149 = vrot.lane.b32.xlu0 %v1082, 96
        %v1150 = vpop.permute.xlu0 %1149
        %1151 = vrot.lane.b32.xlu0 %v1083, 96
        %v1152 = vpop.permute.xlu0 %1151
        %1153 = vrot.lane.b32.xlu0 %v1084, 96
        %v1154 = vpop.permute.xlu0 %1153
        %1155 = vrot.lane.b32.xlu0 %v1085, 96
        %v1156 = vpop.permute.xlu0 %1155
        %1157 = vrot.lane.b32.xlu0 %v1086, 96
        %v1158 = vpop.permute.xlu0 %1157
        %1159 = vrot.lane.b32.xlu0 %v1087, 96
        %v1160 = vpop.permute.xlu0 %1159
        %1161 = vrot.lane.b32.xlu0 %v1088, 96
        %v1162 = vpop.permute.xlu0 %1161
        %1163 = vrot.lane.b32.xlu0 %v1089, 96
        %v1164 = vpop.permute.xlu0 %1163
        %1165 = vrot.lane.b32.xlu0 %v1090, 96
        %v1166 = vpop.permute.xlu0 %1165
        %1167 = vrot.lane.b32.xlu0 %v1091, 96
        %v1168 = vpop.permute.xlu0 %1167
        %1169 = vrot.lane.b32.xlu0 %v1092, 96
        %v1170 = vpop.permute.xlu0 %1169
        %1171 = vrot.lane.b32.xlu0 %v1093, 96
        %v1172 = vpop.permute.xlu0 %1171
        %1173 = vrot.lane.b32.xlu0 %v1094, 96
        %v1174 = vpop.permute.xlu0 %1173
        %1175 = vrot.lane.b32.xlu0 %v1095, 96
        %v1176 = vpop.permute.xlu0 %1175
        %1177 = vrot.lane.b32.xlu0 %v1096, 96
        %v1178 = vpop.permute.xlu0 %1177
        %1179 = vrot.lane.b32.xlu0 %v1097, 96
        %v1180 = vpop.permute.xlu0 %1179
        %1181 = vrot.lane.b32.xlu0 %v1098, 96
        %v1182 = vpop.permute.xlu0 %1181
        %1183 = vrot.lane.b32.xlu0 %v1099, 96
        %v1184 = vpop.permute.xlu0 %1183
        %1185 = vrot.lane.b32.xlu0 %v1100, 96
        %v1186 = vpop.permute.xlu0 %1185
        %1187 = vrot.lane.b32.xlu0 %v1101, 96
        %v1188 = vpop.permute.xlu0 %1187
        %1189 = vrot.lane.b32.xlu0 %v1102, 96
        %v1190 = vpop.permute.xlu0 %1189
        %1191 = vrot.lane.b32.xlu0 %v1103, 96
        %v1192 = vpop.permute.xlu0 %1191
        %1193 = vrot.lane.b32.xlu0 %v1104, 96
        %v1194 = vpop.permute.xlu0 %1193
        %1195 = vrot.lane.b32.xlu0 %v1105, 96
        %v1196 = vpop.permute.xlu0 %1195
        %1197 = vrot.lane.b32.xlu0 %v1106, 96
        %v1198 = vpop.permute.xlu0 %1197
        %1199 = vrot.lane.b32.xlu0 %v1107, 96
        %v1200 = vpop.permute.xlu0 %1199
        %1201 = vrot.lane.b32.xlu0 %v1108, 96
        %v1202 = vpop.permute.xlu0 %1201
        %1203 = vrot.lane.b32.xlu0 %v1109, 96
        %v1204 = vpop.permute.xlu0 %1203
        %1205 = vrot.lane.b32.xlu0 %v1110, 96
        %v1206 = vpop.permute.xlu0 %1205
        %v1239 = vrot.slane %v1144, 7
        %v1240 = vrot.slane %v1146, 7
        %v1241 = vrot.slane %v1148, 7
        %v1242 = vrot.slane %v1150, 7
        %v1243 = vrot.slane %v1152, 7
        %v1244 = vrot.slane %v1154, 7
        %v1245 = vrot.slane %v1156, 7
        %v1246 = vrot.slane %v1158, 7
        %v1247 = vrot.slane %v1160, 7
        %v1248 = vrot.slane %v1162, 7
        %v1249 = vrot.slane %v1164, 7
        %v1250 = vrot.slane %v1166, 7
        %v1251 = vrot.slane %v1168, 7
        %v1252 = vrot.slane %v1170, 7
        %v1253 = vrot.slane %v1172, 7
        %v1254 = vrot.slane %v1174, 7
        %v1255 = vrot.slane %v1176, 7
        %v1256 = vrot.slane %v1178, 7
        %v1257 = vrot.slane %v1180, 7
        %v1258 = vrot.slane %v1182, 7
        %v1259 = vrot.slane %v1184, 7
        %v1260 = vrot.slane %v1186, 7
        %v1261 = vrot.slane %v1188, 7
        %v1262 = vrot.slane %v1190, 7
        %v1263 = vrot.slane %v1192, 7
        %v1264 = vrot.slane %v1194, 7
        %v1265 = vrot.slane %v1196, 7
        %v1266 = vrot.slane %v1198, 7
        %v1267 = vrot.slane %v1200, 7
        %v1268 = vrot.slane %v1202, 7
        %v1269 = vrot.slane %v1204, 7
        %v1270 = vrot.slane %v1206, 7
        %v1271 = vlaneseq
        %v1272 = vshrl.u32 %v1271, 7
        %vm1273 = vcmp.lt.s32.totalorder %v1272, 1
        %v1274 = vsel %vm1273, %v1269, %v1270
        %v1275 = vsel %vm1273, %v1268, %v1269
        %v1276 = vsel %vm1273, %v1267, %v1268
        %v1277 = vsel %vm1273, %v1266, %v1267
        %v1278 = vsel %vm1273, %v1265, %v1266
        %v1279 = vsel %vm1273, %v1264, %v1265
        %v1280 = vsel %vm1273, %v1263, %v1264
        %v1281 = vsel %vm1273, %v1262, %v1263
        %v1282 = vsel %vm1273, %v1261, %v1262
        %v1283 = vsel %vm1273, %v1260, %v1261
        %v1284 = vsel %vm1273, %v1259, %v1260
        %v1285 = vsel %vm1273, %v1258, %v1259
        %v1286 = vsel %vm1273, %v1257, %v1258
        %v1287 = vsel %vm1273, %v1256, %v1257
        %v1288 = vsel %vm1273, %v1255, %v1256
        %v1289 = vsel %vm1273, %v1254, %v1255
        %v1290 = vsel %vm1273, %v1253, %v1254
        %v1291 = vsel %vm1273, %v1252, %v1253
        %v1292 = vsel %vm1273, %v1251, %v1252
        %v1293 = vsel %vm1273, %v1250, %v1251
        %v1294 = vsel %vm1273, %v1249, %v1250
        %v1295 = vsel %vm1273, %v1248, %v1249
        %v1296 = vsel %vm1273, %v1247, %v1248
        %v1297 = vsel %vm1273, %v1246, %v1247
        %v1298 = vsel %vm1273, %v1245, %v1246
        %v1299 = vsel %vm1273, %v1244, %v1245
        %v1300 = vsel %vm1273, %v1243, %v1244
        %v1301 = vsel %vm1273, %v1242, %v1243
        %v1302 = vsel %vm1273, %v1241, %v1242
        %v1303 = vsel %vm1273, %v1240, %v1241
        %v1304 = vsel %vm1273, %v1239, %v1240
        %v1305 = vsel %vm1273, %v1270, %v1239
        %1307 = vset.pattern.permute.xlu0 0
        %1308 = vperm.xlu0 %1307, %v365
        %v1309 = vpop.permute.xlu0 %1308
        %1312 = vset.pattern.permute.xlu0 0
        %1313 = vperm.xlu0 %1312, %v366
        %v1314 = vpop.permute.xlu0 %1313
        %1317 = vset.pattern.permute.xlu0 0
        %1318 = vperm.xlu0 %1317, %v367
        %v1319 = vpop.permute.xlu0 %1318
        %1322 = vset.pattern.permute.xlu0 0
        %1323 = vperm.xlu0 %1322, %v368
        %v1324 = vpop.permute.xlu0 %1323
        %1327 = vset.pattern.permute.xlu0 0
        %1328 = vperm.xlu0 %1327, %v369
        %v1329 = vpop.permute.xlu0 %1328
        %1332 = vset.pattern.permute.xlu0 0
        %1333 = vperm.xlu0 %1332, %v370
        %v1334 = vpop.permute.xlu0 %1333
        %1337 = vset.pattern.permute.xlu0 0
        %1338 = vperm.xlu0 %1337, %v371
        %v1339 = vpop.permute.xlu0 %1338
        %1342 = vset.pattern.permute.xlu0 0
        %1343 = vperm.xlu0 %1342, %v372
        %v1344 = vpop.permute.xlu0 %1343
        %1347 = vset.pattern.permute.xlu0 0
        %1348 = vperm.xlu0 %1347, %v373
        %v1349 = vpop.permute.xlu0 %1348
        %1352 = vset.pattern.permute.xlu0 0
        %1353 = vperm.xlu0 %1352, %v374
        %v1354 = vpop.permute.xlu0 %1353
        %1357 = vset.pattern.permute.xlu0 0
        %1358 = vperm.xlu0 %1357, %v375
        %v1359 = vpop.permute.xlu0 %1358
        %1362 = vset.pattern.permute.xlu0 0
        %1363 = vperm.xlu0 %1362, %v376
        %v1364 = vpop.permute.xlu0 %1363
        %1367 = vset.pattern.permute.xlu0 0
        %1368 = vperm.xlu0 %1367, %v377
        %v1369 = vpop.permute.xlu0 %1368
        %1372 = vset.pattern.permute.xlu0 0
        %1373 = vperm.xlu0 %1372, %v378
        %v1374 = vpop.permute.xlu0 %1373
        %1377 = vset.pattern.permute.xlu0 0
        %1378 = vperm.xlu0 %1377, %v379
        %v1379 = vpop.permute.xlu0 %1378
        %1382 = vset.pattern.permute.xlu0 0
        %1383 = vperm.xlu0 %1382, %v380
        %v1384 = vpop.permute.xlu0 %1383
        %1387 = vset.pattern.permute.xlu0 0
        %1388 = vperm.xlu0 %1387, %v381
        %v1389 = vpop.permute.xlu0 %1388
        %1392 = vset.pattern.permute.xlu0 0
        %1393 = vperm.xlu0 %1392, %v382
        %v1394 = vpop.permute.xlu0 %1393
        %1397 = vset.pattern.permute.xlu0 0
        %1398 = vperm.xlu0 %1397, %v383
        %v1399 = vpop.permute.xlu0 %1398
        %1402 = vset.pattern.permute.xlu0 0
        %1403 = vperm.xlu0 %1402, %v384
        %v1404 = vpop.permute.xlu0 %1403
        %1407 = vset.pattern.permute.xlu0 0
        %1408 = vperm.xlu0 %1407, %v385
        %v1409 = vpop.permute.xlu0 %1408
        %1412 = vset.pattern.permute.xlu0 0
        %1413 = vperm.xlu0 %1412, %v386
        %v1414 = vpop.permute.xlu0 %1413
        %1417 = vset.pattern.permute.xlu0 0
        %1418 = vperm.xlu0 %1417, %v387
        %v1419 = vpop.permute.xlu0 %1418
        %1422 = vset.pattern.permute.xlu0 0
        %1423 = vperm.xlu0 %1422, %v388
        %v1424 = vpop.permute.xlu0 %1423
        %1427 = vset.pattern.permute.xlu0 0
        %1428 = vperm.xlu0 %1427, %v389
        %v1429 = vpop.permute.xlu0 %1428
        %1432 = vset.pattern.permute.xlu0 0
        %1433 = vperm.xlu0 %1432, %v390
        %v1434 = vpop.permute.xlu0 %1433
        %1437 = vset.pattern.permute.xlu0 0
        %1438 = vperm.xlu0 %1437, %v391
        %v1439 = vpop.permute.xlu0 %1438
        %1442 = vset.pattern.permute.xlu0 0
        %1443 = vperm.xlu0 %1442, %v392
        %v1444 = vpop.permute.xlu0 %1443
        %1447 = vset.pattern.permute.xlu0 0
        %1448 = vperm.xlu0 %1447, %v393
        %v1449 = vpop.permute.xlu0 %1448
        %1452 = vset.pattern.permute.xlu0 0
        %1453 = vperm.xlu0 %1452, %v394
        %v1454 = vpop.permute.xlu0 %1453
        %1457 = vset.pattern.permute.xlu0 0
        %1458 = vperm.xlu0 %1457, %v395
        %v1459 = vpop.permute.xlu0 %1458
        %1462 = vset.pattern.permute.xlu0 0
        %1463 = vperm.xlu0 %1462, %v396
        %v1464 = vpop.permute.xlu0 %1463
        %v1466 = vmul.f32 %v1305, %v1309
        %v1467 = vmul.f32 %v1304, %v1314
        %v1468 = vmul.f32 %v1303, %v1319
        %v1469 = vmul.f32 %v1302, %v1324
        %v1470 = vmul.f32 %v1301, %v1329
        %v1471 = vmul.f32 %v1300, %v1334
        %v1472 = vmul.f32 %v1299, %v1339
        %v1473 = vmul.f32 %v1298, %v1344
        %v1474 = vmul.f32 %v1297, %v1349
        %v1475 = vmul.f32 %v1296, %v1354
        %v1476 = vmul.f32 %v1295, %v1359
        %v1477 = vmul.f32 %v1294, %v1364
        %v1478 = vmul.f32 %v1293, %v1369
        %v1479 = vmul.f32 %v1292, %v1374
        %v1480 = vmul.f32 %v1291, %v1379
        %v1481 = vmul.f32 %v1290, %v1384
        %v1482 = vmul.f32 %v1289, %v1389
        %v1483 = vmul.f32 %v1288, %v1394
        %v1484 = vmul.f32 %v1287, %v1399
        %v1485 = vmul.f32 %v1286, %v1404
        %v1486 = vmul.f32 %v1285, %v1409
        %v1487 = vmul.f32 %v1284, %v1414
        %v1488 = vmul.f32 %v1283, %v1419
        %v1489 = vmul.f32 %v1282, %v1424
        %v1490 = vmul.f32 %v1281, %v1429
        %v1491 = vmul.f32 %v1280, %v1434
        %v1492 = vmul.f32 %v1279, %v1439
        %v1493 = vmul.f32 %v1278, %v1444
        %v1494 = vmul.f32 %v1277, %v1449
        %v1495 = vmul.f32 %v1276, %v1454
        %v1496 = vmul.f32 %v1275, %v1459
        %v1497 = vmul.f32 %v1274, %v1464
        %v1498 = vrot.slane %v1144, 1
        %v1499 = vrot.slane %v1146, 1
        %v1500 = vrot.slane %v1148, 1
        %v1501 = vrot.slane %v1150, 1
        %v1502 = vrot.slane %v1152, 1
        %v1503 = vrot.slane %v1154, 1
        %v1504 = vrot.slane %v1156, 1
        %v1505 = vrot.slane %v1158, 1
        %v1506 = vrot.slane %v1160, 1
        %v1507 = vrot.slane %v1162, 1
        %v1508 = vrot.slane %v1164, 1
        %v1509 = vrot.slane %v1166, 1
        %v1510 = vrot.slane %v1168, 1
        %v1511 = vrot.slane %v1170, 1
        %v1512 = vrot.slane %v1172, 1
        %v1513 = vrot.slane %v1174, 1
        %v1514 = vrot.slane %v1176, 1
        %v1515 = vrot.slane %v1178, 1
        %v1516 = vrot.slane %v1180, 1
        %v1517 = vrot.slane %v1182, 1
        %v1518 = vrot.slane %v1184, 1
        %v1519 = vrot.slane %v1186, 1
        %v1520 = vrot.slane %v1188, 1
        %v1521 = vrot.slane %v1190, 1
        %v1522 = vrot.slane %v1192, 1
        %v1523 = vrot.slane %v1194, 1
        %v1524 = vrot.slane %v1196, 1
        %v1525 = vrot.slane %v1198, 1
        %v1526 = vrot.slane %v1200, 1
        %v1527 = vrot.slane %v1202, 1
        %v1528 = vrot.slane %v1204, 1
        %v1529 = vrot.slane %v1206, 1
        %vm1530 = vcmp.lt.s32.totalorder %v1272, 7
        %v1531 = vsel %vm1530, %v1528, %v1529
        %v1532 = vsel %vm1530, %v1527, %v1528
        %v1533 = vsel %vm1530, %v1526, %v1527
        %v1534 = vsel %vm1530, %v1525, %v1526
        %v1535 = vsel %vm1530, %v1524, %v1525
        %v1536 = vsel %vm1530, %v1523, %v1524
        %v1537 = vsel %vm1530, %v1522, %v1523
        %v1538 = vsel %vm1530, %v1521, %v1522
        %v1539 = vsel %vm1530, %v1520, %v1521
        %v1540 = vsel %vm1530, %v1519, %v1520
        %v1541 = vsel %vm1530, %v1518, %v1519
        %v1542 = vsel %vm1530, %v1517, %v1518
        %v1543 = vsel %vm1530, %v1516, %v1517
        %v1544 = vsel %vm1530, %v1515, %v1516
        %v1545 = vsel %vm1530, %v1514, %v1515
        %v1546 = vsel %vm1530, %v1513, %v1514
        %v1547 = vsel %vm1530, %v1512, %v1513
        %v1548 = vsel %vm1530, %v1511, %v1512
        %v1549 = vsel %vm1530, %v1510, %v1511
        %v1550 = vsel %vm1530, %v1509, %v1510
        %v1551 = vsel %vm1530, %v1508, %v1509
        %v1552 = vsel %vm1530, %v1507, %v1508
        %v1553 = vsel %vm1530, %v1506, %v1507
        %v1554 = vsel %vm1530, %v1505, %v1506
        %v1555 = vsel %vm1530, %v1504, %v1505
        %v1556 = vsel %vm1530, %v1503, %v1504
        %v1557 = vsel %vm1530, %v1502, %v1503
        %v1558 = vsel %vm1530, %v1501, %v1502
        %v1559 = vsel %vm1530, %v1500, %v1501
        %v1560 = vsel %vm1530, %v1499, %v1500
        %v1561 = vsel %vm1530, %v1498, %v1499
        %v1562 = vsel %vm1530, %v1529, %v1498
        %1563 = vset.pattern.permute.xlu0 1
        %1564 = vperm.xlu0 %1563, %v365
        %v1565 = vpop.permute.xlu0 %1564
        %1567 = vset.pattern.permute.xlu0 1
        %1568 = vperm.xlu0 %1567, %v366
        %v1569 = vpop.permute.xlu0 %1568
        %1571 = vset.pattern.permute.xlu0 1
        %1572 = vperm.xlu0 %1571, %v367
        %v1573 = vpop.permute.xlu0 %1572
        %1575 = vset.pattern.permute.xlu0 1
        %1576 = vperm.xlu0 %1575, %v368
        %v1577 = vpop.permute.xlu0 %1576
        %1579 = vset.pattern.permute.xlu0 1
        %1580 = vperm.xlu0 %1579, %v369
        %v1581 = vpop.permute.xlu0 %1580
        %1583 = vset.pattern.permute.xlu0 1
        %1584 = vperm.xlu0 %1583, %v370
        %v1585 = vpop.permute.xlu0 %1584
        %1587 = vset.pattern.permute.xlu0 1
        %1588 = vperm.xlu0 %1587, %v371
        %v1589 = vpop.permute.xlu0 %1588
        %1591 = vset.pattern.permute.xlu0 1
        %1592 = vperm.xlu0 %1591, %v372
        %v1593 = vpop.permute.xlu0 %1592
        %1595 = vset.pattern.permute.xlu0 1
        %1596 = vperm.xlu0 %1595, %v373
        %v1597 = vpop.permute.xlu0 %1596
        %1599 = vset.pattern.permute.xlu0 1
        %1600 = vperm.xlu0 %1599, %v374
        %v1601 = vpop.permute.xlu0 %1600
        %1603 = vset.pattern.permute.xlu0 1
        %1604 = vperm.xlu0 %1603, %v375
        %v1605 = vpop.permute.xlu0 %1604
        %1607 = vset.pattern.permute.xlu0 1
        %1608 = vperm.xlu0 %1607, %v376
        %v1609 = vpop.permute.xlu0 %1608
        %1611 = vset.pattern.permute.xlu0 1
        %1612 = vperm.xlu0 %1611, %v377
        %v1613 = vpop.permute.xlu0 %1612
        %1615 = vset.pattern.permute.xlu0 1
        %1616 = vperm.xlu0 %1615, %v378
        %v1617 = vpop.permute.xlu0 %1616
        %1619 = vset.pattern.permute.xlu0 1
        %1620 = vperm.xlu0 %1619, %v379
        %v1621 = vpop.permute.xlu0 %1620
        %1623 = vset.pattern.permute.xlu0 1
        %1624 = vperm.xlu0 %1623, %v380
        %v1625 = vpop.permute.xlu0 %1624
        %1627 = vset.pattern.permute.xlu0 1
        %1628 = vperm.xlu0 %1627, %v381
        %v1629 = vpop.permute.xlu0 %1628
        %1631 = vset.pattern.permute.xlu0 1
        %1632 = vperm.xlu0 %1631, %v382
        %v1633 = vpop.permute.xlu0 %1632
        %1635 = vset.pattern.permute.xlu0 1
        %1636 = vperm.xlu0 %1635, %v383
        %v1637 = vpop.permute.xlu0 %1636
        %1639 = vset.pattern.permute.xlu0 1
        %1640 = vperm.xlu0 %1639, %v384
        %v1641 = vpop.permute.xlu0 %1640
        %1643 = vset.pattern.permute.xlu0 1
        %1644 = vperm.xlu0 %1643, %v385
        %v1645 = vpop.permute.xlu0 %1644
        %1647 = vset.pattern.permute.xlu0 1
        %1648 = vperm.xlu0 %1647, %v386
        %v1649 = vpop.permute.xlu0 %1648
        %1651 = vset.pattern.permute.xlu0 1
        %1652 = vperm.xlu0 %1651, %v387
        %v1653 = vpop.permute.xlu0 %1652
        %1655 = vset.pattern.permute.xlu0 1
        %1656 = vperm.xlu0 %1655, %v388
        %v1657 = vpop.permute.xlu0 %1656
        %1659 = vset.pattern.permute.xlu0 1
        %1660 = vperm.xlu0 %1659, %v389
        %v1661 = vpop.permute.xlu0 %1660
        %1663 = vset.pattern.permute.xlu0 1
        %1664 = vperm.xlu0 %1663, %v390
        %v1665 = vpop.permute.xlu0 %1664
        %1667 = vset.pattern.permute.xlu0 1
        %1668 = vperm.xlu0 %1667, %v391
        %v1669 = vpop.permute.xlu0 %1668
        %1671 = vset.pattern.permute.xlu0 1
        %1672 = vperm.xlu0 %1671, %v392
        %v1673 = vpop.permute.xlu0 %1672
        %1675 = vset.pattern.permute.xlu0 1
        %1676 = vperm.xlu0 %1675, %v393
        %v1677 = vpop.permute.xlu0 %1676
        %1679 = vset.pattern.permute.xlu0 1
        %1680 = vperm.xlu0 %1679, %v394
        %v1681 = vpop.permute.xlu0 %1680
        %1683 = vset.pattern.permute.xlu0 1
        %1684 = vperm.xlu0 %1683, %v395
        %v1685 = vpop.permute.xlu0 %1684
        %1687 = vset.pattern.permute.xlu0 1
        %1688 = vperm.xlu0 %1687, %v396
        %v1689 = vpop.permute.xlu0 %1688
        %v1691 = vmul.f32 %v1561, %v1565
        %v1692 = vmul.f32 %v1560, %v1569
        %v1693 = vmul.f32 %v1559, %v1573
        %v1694 = vmul.f32 %v1558, %v1577
        %v1695 = vmul.f32 %v1557, %v1581
        %v1696 = vmul.f32 %v1556, %v1585
        %v1697 = vmul.f32 %v1555, %v1589
        %v1698 = vmul.f32 %v1554, %v1593
        %v1699 = vmul.f32 %v1553, %v1597
        %v1700 = vmul.f32 %v1552, %v1601
        %v1701 = vmul.f32 %v1551, %v1605
        %v1702 = vmul.f32 %v1550, %v1609
        %v1703 = vmul.f32 %v1549, %v1613
        %v1704 = vmul.f32 %v1548, %v1617
        %v1705 = vmul.f32 %v1547, %v1621
        %v1706 = vmul.f32 %v1546, %v1625
        %v1707 = vmul.f32 %v1545, %v1629
        %v1708 = vmul.f32 %v1544, %v1633
        %v1709 = vmul.f32 %v1543, %v1637
        %v1710 = vmul.f32 %v1542, %v1641
        %v1711 = vmul.f32 %v1541, %v1645
        %v1712 = vmul.f32 %v1540, %v1649
        %v1713 = vmul.f32 %v1539, %v1653
        %v1714 = vmul.f32 %v1538, %v1657
        %v1715 = vmul.f32 %v1537, %v1661
        %v1716 = vmul.f32 %v1536, %v1665
        %v1717 = vmul.f32 %v1535, %v1669
        %v1718 = vmul.f32 %v1534, %v1673
        %v1719 = vmul.f32 %v1533, %v1677
        %v1720 = vmul.f32 %v1532, %v1681
        %v1721 = vmul.f32 %v1531, %v1685
        %v1722 = vmul.f32 %v1562, %v1689
        %1723 = vrot.lane.b32.xlu0 %v1079, 32
        %v1724 = vpop.permute.xlu0 %1723
        %1725 = vrot.lane.b32.xlu0 %v1080, 32
        %v1726 = vpop.permute.xlu0 %1725
        %1727 = vrot.lane.b32.xlu0 %v1081, 32
        %v1728 = vpop.permute.xlu0 %1727
        %1729 = vrot.lane.b32.xlu0 %v1082, 32
        %v1730 = vpop.permute.xlu0 %1729
        %1731 = vrot.lane.b32.xlu0 %v1083, 32
        %v1732 = vpop.permute.xlu0 %1731
        %1733 = vrot.lane.b32.xlu0 %v1084, 32
        %v1734 = vpop.permute.xlu0 %1733
        %1735 = vrot.lane.b32.xlu0 %v1085, 32
        %v1736 = vpop.permute.xlu0 %1735
        %1737 = vrot.lane.b32.xlu0 %v1086, 32
        %v1738 = vpop.permute.xlu0 %1737
        %1739 = vrot.lane.b32.xlu0 %v1087, 32
        %v1740 = vpop.permute.xlu0 %1739
        %1741 = vrot.lane.b32.xlu0 %v1088, 32
        %v1742 = vpop.permute.xlu0 %1741
        %1743 = vrot.lane.b32.xlu0 %v1089, 32
        %v1744 = vpop.permute.xlu0 %1743
        %1745 = vrot.lane.b32.xlu0 %v1090, 32
        %v1746 = vpop.permute.xlu0 %1745
        %1747 = vrot.lane.b32.xlu0 %v1091, 32
        %v1748 = vpop.permute.xlu0 %1747
        %1749 = vrot.lane.b32.xlu0 %v1092, 32
        %v1750 = vpop.permute.xlu0 %1749
        %1751 = vrot.lane.b32.xlu0 %v1093, 32
        %v1752 = vpop.permute.xlu0 %1751
        %1753 = vrot.lane.b32.xlu0 %v1094, 32
        %v1754 = vpop.permute.xlu0 %1753
        %1755 = vrot.lane.b32.xlu0 %v1095, 32
        %v1756 = vpop.permute.xlu0 %1755
        %1757 = vrot.lane.b32.xlu0 %v1096, 32
        %v1758 = vpop.permute.xlu0 %1757
        %1759 = vrot.lane.b32.xlu0 %v1097, 32
        %v1760 = vpop.permute.xlu0 %1759
        %1761 = vrot.lane.b32.xlu0 %v1098, 32
        %v1762 = vpop.permute.xlu0 %1761
        %1763 = vrot.lane.b32.xlu0 %v1099, 32
        %v1764 = vpop.permute.xlu0 %1763
        %1765 = vrot.lane.b32.xlu0 %v1100, 32
        %v1766 = vpop.permute.xlu0 %1765
        %1767 = vrot.lane.b32.xlu0 %v1101, 32
        %v1768 = vpop.permute.xlu0 %1767
        %1769 = vrot.lane.b32.xlu0 %v1102, 32
        %v1770 = vpop.permute.xlu0 %1769
        %1771 = vrot.lane.b32.xlu0 %v1103, 32
        %v1772 = vpop.permute.xlu0 %1771
        %1773 = vrot.lane.b32.xlu0 %v1104, 32
        %v1774 = vpop.permute.xlu0 %1773
        %1775 = vrot.lane.b32.xlu0 %v1105, 32
        %v1776 = vpop.permute.xlu0 %1775
        %1777 = vrot.lane.b32.xlu0 %v1106, 32
        %v1778 = vpop.permute.xlu0 %1777
        %1779 = vrot.lane.b32.xlu0 %v1107, 32
        %v1780 = vpop.permute.xlu0 %1779
        %1781 = vrot.lane.b32.xlu0 %v1108, 32
        %v1782 = vpop.permute.xlu0 %1781
        %1783 = vrot.lane.b32.xlu0 %v1109, 32
        %v1784 = vpop.permute.xlu0 %1783
        %1785 = vrot.lane.b32.xlu0 %v1110, 32
        %v1786 = vpop.permute.xlu0 %1785
        %v1819 = vsel %vm708, %v1466, %v1724
        %v1820 = vsel %vm708, %v1467, %v1726
        %v1821 = vsel %vm708, %v1468, %v1728
        %v1822 = vsel %vm708, %v1469, %v1730
        %v1823 = vsel %vm708, %v1470, %v1732
        %v1824 = vsel %vm708, %v1471, %v1734
        %v1825 = vsel %vm708, %v1472, %v1736
        %v1826 = vsel %vm708, %v1473, %v1738
        %v1827 = vsel %vm708, %v1474, %v1740
        %v1828 = vsel %vm708, %v1475, %v1742
        %v1829 = vsel %vm708, %v1476, %v1744
        %v1830 = vsel %vm708, %v1477, %v1746
        %v1831 = vsel %vm708, %v1478, %v1748
        %v1832 = vsel %vm708, %v1479, %v1750
        %v1833 = vsel %vm708, %v1480, %v1752
        %v1834 = vsel %vm708, %v1481, %v1754
        %v1835 = vsel %vm708, %v1482, %v1756
        %v1836 = vsel %vm708, %v1483, %v1758
        %v1837 = vsel %vm708, %v1484, %v1760
        %v1838 = vsel %vm708, %v1485, %v1762
        %v1839 = vsel %vm708, %v1486, %v1764
        %v1840 = vsel %vm708, %v1487, %v1766
        %v1841 = vsel %vm708, %v1488, %v1768
        %v1842 = vsel %vm708, %v1489, %v1770
        %v1843 = vsel %vm708, %v1490, %v1772
        %v1844 = vsel %vm708, %v1491, %v1774
        %v1845 = vsel %vm708, %v1492, %v1776
        %v1846 = vsel %vm708, %v1493, %v1778
        %v1847 = vsel %vm708, %v1494, %v1780
        %v1848 = vsel %vm708, %v1495, %v1782
        %v1849 = vsel %vm708, %v1496, %v1784
        %v1850 = vsel %vm708, %v1497, %v1786
        %1851 = vset.pattern.permute.xlu0 2
        %1852 = vperm.xlu0 %1851, %v365
        %v1853 = vpop.permute.xlu0 %1852
        %1855 = vset.pattern.permute.xlu0 2
        %1856 = vperm.xlu0 %1855, %v366
        %v1857 = vpop.permute.xlu0 %1856
        %1859 = vset.pattern.permute.xlu0 2
        %1860 = vperm.xlu0 %1859, %v367
        %v1861 = vpop.permute.xlu0 %1860
        %1863 = vset.pattern.permute.xlu0 2
        %1864 = vperm.xlu0 %1863, %v368
        %v1865 = vpop.permute.xlu0 %1864
        %1867 = vset.pattern.permute.xlu0 2
        %1868 = vperm.xlu0 %1867, %v369
        %v1869 = vpop.permute.xlu0 %1868
        %1871 = vset.pattern.permute.xlu0 2
        %1872 = vperm.xlu0 %1871, %v370
        %v1873 = vpop.permute.xlu0 %1872
        %1875 = vset.pattern.permute.xlu0 2
        %1876 = vperm.xlu0 %1875, %v371
        %v1877 = vpop.permute.xlu0 %1876
        %1879 = vset.pattern.permute.xlu0 2
        %1880 = vperm.xlu0 %1879, %v372
        %v1881 = vpop.permute.xlu0 %1880
        %1883 = vset.pattern.permute.xlu0 2
        %1884 = vperm.xlu0 %1883, %v373
        %v1885 = vpop.permute.xlu0 %1884
        %1887 = vset.pattern.permute.xlu0 2
        %1888 = vperm.xlu0 %1887, %v374
        %v1889 = vpop.permute.xlu0 %1888
        %1891 = vset.pattern.permute.xlu0 2
        %1892 = vperm.xlu0 %1891, %v375
        %v1893 = vpop.permute.xlu0 %1892
        %1895 = vset.pattern.permute.xlu0 2
        %1896 = vperm.xlu0 %1895, %v376
        %v1897 = vpop.permute.xlu0 %1896
        %1899 = vset.pattern.permute.xlu0 2
        %1900 = vperm.xlu0 %1899, %v377
        %v1901 = vpop.permute.xlu0 %1900
        %1903 = vset.pattern.permute.xlu0 2
        %1904 = vperm.xlu0 %1903, %v378
        %v1905 = vpop.permute.xlu0 %1904
        %1907 = vset.pattern.permute.xlu0 2
        %1908 = vperm.xlu0 %1907, %v379
        %v1909 = vpop.permute.xlu0 %1908
        %1911 = vset.pattern.permute.xlu0 2
        %1912 = vperm.xlu0 %1911, %v380
        %v1913 = vpop.permute.xlu0 %1912
        %1915 = vset.pattern.permute.xlu0 2
        %1916 = vperm.xlu0 %1915, %v381
        %v1917 = vpop.permute.xlu0 %1916
        %1919 = vset.pattern.permute.xlu0 2
        %1920 = vperm.xlu0 %1919, %v382
        %v1921 = vpop.permute.xlu0 %1920
        %1923 = vset.pattern.permute.xlu0 2
        %1924 = vperm.xlu0 %1923, %v383
        %v1925 = vpop.permute.xlu0 %1924
        %1927 = vset.pattern.permute.xlu0 2
        %1928 = vperm.xlu0 %1927, %v384
        %v1929 = vpop.permute.xlu0 %1928
        %1931 = vset.pattern.permute.xlu0 2
        %1932 = vperm.xlu0 %1931, %v385
        %v1933 = vpop.permute.xlu0 %1932
        %1935 = vset.pattern.permute.xlu0 2
        %1936 = vperm.xlu0 %1935, %v386
        %v1937 = vpop.permute.xlu0 %1936
        %1939 = vset.pattern.permute.xlu0 2
        %1940 = vperm.xlu0 %1939, %v387
        %v1941 = vpop.permute.xlu0 %1940
        %1943 = vset.pattern.permute.xlu0 2
        %1944 = vperm.xlu0 %1943, %v388
        %v1945 = vpop.permute.xlu0 %1944
        %1947 = vset.pattern.permute.xlu0 2
        %1948 = vperm.xlu0 %1947, %v389
        %v1949 = vpop.permute.xlu0 %1948
        %1951 = vset.pattern.permute.xlu0 2
        %1952 = vperm.xlu0 %1951, %v390
        %v1953 = vpop.permute.xlu0 %1952
        %1955 = vset.pattern.permute.xlu0 2
        %1956 = vperm.xlu0 %1955, %v391
        %v1957 = vpop.permute.xlu0 %1956
        %1959 = vset.pattern.permute.xlu0 2
        %1960 = vperm.xlu0 %1959, %v392
        %v1961 = vpop.permute.xlu0 %1960
        %1963 = vset.pattern.permute.xlu0 2
        %1964 = vperm.xlu0 %1963, %v393
        %v1965 = vpop.permute.xlu0 %1964
        %1967 = vset.pattern.permute.xlu0 2
        %1968 = vperm.xlu0 %1967, %v394
        %v1969 = vpop.permute.xlu0 %1968
        %1971 = vset.pattern.permute.xlu0 2
        %1972 = vperm.xlu0 %1971, %v395
        %v1973 = vpop.permute.xlu0 %1972
        %1975 = vset.pattern.permute.xlu0 2
        %1976 = vperm.xlu0 %1975, %v396
        %v1977 = vpop.permute.xlu0 %1976
        %v1979 = vmul.f32 %v1850, %v1853
        %v1980 = vmul.f32 %v1722, %v1853
        %v1981 = vmul.f32 %v1819, %v1857
        %v1982 = vmul.f32 %v1691, %v1857
        %v1983 = vmul.f32 %v1820, %v1861
        %v1984 = vmul.f32 %v1692, %v1861
        %v1985 = vmul.f32 %v1821, %v1865
        %v1986 = vmul.f32 %v1693, %v1865
        %v1987 = vmul.f32 %v1822, %v1869
        %v1988 = vmul.f32 %v1694, %v1869
        %v1989 = vmul.f32 %v1823, %v1873
        %v1990 = vmul.f32 %v1695, %v1873
        %v1991 = vmul.f32 %v1824, %v1877
        %v1992 = vmul.f32 %v1696, %v1877
        %v1993 = vmul.f32 %v1825, %v1881
        %v1994 = vmul.f32 %v1697, %v1881
        %v1995 = vmul.f32 %v1826, %v1885
        %v1996 = vmul.f32 %v1698, %v1885
        %v1997 = vmul.f32 %v1827, %v1889
        %v1998 = vmul.f32 %v1699, %v1889
        %v1999 = vmul.f32 %v1828, %v1893
        %v2000 = vmul.f32 %v1700, %v1893
        %v2001 = vmul.f32 %v1829, %v1897
        %v2002 = vmul.f32 %v1701, %v1897
        %v2003 = vmul.f32 %v1830, %v1901
        %v2004 = vmul.f32 %v1702, %v1901
        %v2005 = vmul.f32 %v1831, %v1905
        %v2006 = vmul.f32 %v1703, %v1905
        %v2007 = vmul.f32 %v1832, %v1909
        %v2008 = vmul.f32 %v1704, %v1909
        %v2009 = vmul.f32 %v1833, %v1913
        %v2010 = vmul.f32 %v1705, %v1913
        %v2011 = vmul.f32 %v1834, %v1917
        %v2012 = vmul.f32 %v1706, %v1917
        %v2013 = vmul.f32 %v1835, %v1921
        %v2014 = vmul.f32 %v1707, %v1921
        %v2015 = vmul.f32 %v1836, %v1925
        %v2016 = vmul.f32 %v1708, %v1925
        %v2017 = vmul.f32 %v1837, %v1929
        %v2018 = vmul.f32 %v1709, %v1929
        %v2019 = vmul.f32 %v1838, %v1933
        %v2020 = vmul.f32 %v1710, %v1933
        %v2021 = vmul.f32 %v1839, %v1937
        %v2022 = vmul.f32 %v1711, %v1937
        %v2023 = vmul.f32 %v1840, %v1941
        %v2024 = vmul.f32 %v1712, %v1941
        %v2025 = vmul.f32 %v1841, %v1945
        %v2026 = vmul.f32 %v1713, %v1945
        %v2027 = vmul.f32 %v1842, %v1949
        %v2028 = vmul.f32 %v1714, %v1949
        %v2029 = vmul.f32 %v1843, %v1953
        %v2030 = vmul.f32 %v1715, %v1953
        %v2031 = vmul.f32 %v1844, %v1957
        %v2032 = vmul.f32 %v1716, %v1957
        %v2033 = vmul.f32 %v1845, %v1961
        %v2034 = vmul.f32 %v1717, %v1961
        %v2035 = vmul.f32 %v1846, %v1965
        %v2036 = vmul.f32 %v1718, %v1965
        %v2037 = vmul.f32 %v1847, %v1969
        %v2038 = vmul.f32 %v1719, %v1969
        %v2039 = vmul.f32 %v1848, %v1973
        %v2040 = vmul.f32 %v1720, %v1973
        %v2041 = vmul.f32 %v1849, %v1977
        %v2042 = vmul.f32 %v1721, %v1977
        %2043 = vset.pattern.permute.xlu0 3
        %2044 = vperm.xlu0 %2043, %v365
        %v2045 = vpop.permute.xlu0 %2044
        %2047 = vset.pattern.permute.xlu0 3
        %2048 = vperm.xlu0 %2047, %v366
        %v2049 = vpop.permute.xlu0 %2048
        %2051 = vset.pattern.permute.xlu0 3
        %2052 = vperm.xlu0 %2051, %v367
        %v2053 = vpop.permute.xlu0 %2052
        %2055 = vset.pattern.permute.xlu0 3
        %2056 = vperm.xlu0 %2055, %v368
        %v2057 = vpop.permute.xlu0 %2056
        %2059 = vset.pattern.permute.xlu0 3
        %2060 = vperm.xlu0 %2059, %v369
        %v2061 = vpop.permute.xlu0 %2060
        %2063 = vset.pattern.permute.xlu0 3
        %2064 = vperm.xlu0 %2063, %v370
        %v2065 = vpop.permute.xlu0 %2064
        %2067 = vset.pattern.permute.xlu0 3
        %2068 = vperm.xlu0 %2067, %v371
        %v2069 = vpop.permute.xlu0 %2068
        %2071 = vset.pattern.permute.xlu0 3
        %2072 = vperm.xlu0 %2071, %v372
        %v2073 = vpop.permute.xlu0 %2072
        %2075 = vset.pattern.permute.xlu0 3
        %2076 = vperm.xlu0 %2075, %v373
        %v2077 = vpop.permute.xlu0 %2076
        %2079 = vset.pattern.permute.xlu0 3
        %2080 = vperm.xlu0 %2079, %v374
        %v2081 = vpop.permute.xlu0 %2080
        %2083 = vset.pattern.permute.xlu0 3
        %2084 = vperm.xlu0 %2083, %v375
        %v2085 = vpop.permute.xlu0 %2084
        %2087 = vset.pattern.permute.xlu0 3
        %2088 = vperm.xlu0 %2087, %v376
        %v2089 = vpop.permute.xlu0 %2088
        %2091 = vset.pattern.permute.xlu0 3
        %2092 = vperm.xlu0 %2091, %v377
        %v2093 = vpop.permute.xlu0 %2092
        %2095 = vset.pattern.permute.xlu0 3
        %2096 = vperm.xlu0 %2095, %v378
        %v2097 = vpop.permute.xlu0 %2096
        %2099 = vset.pattern.permute.xlu0 3
        %2100 = vperm.xlu0 %2099, %v379
        %v2101 = vpop.permute.xlu0 %2100
        %2103 = vset.pattern.permute.xlu0 3
        %2104 = vperm.xlu0 %2103, %v380
        %v2105 = vpop.permute.xlu0 %2104
        %2107 = vset.pattern.permute.xlu0 3
        %2108 = vperm.xlu0 %2107, %v381
        %v2109 = vpop.permute.xlu0 %2108
        %2111 = vset.pattern.permute.xlu0 3
        %2112 = vperm.xlu0 %2111, %v382
        %v2113 = vpop.permute.xlu0 %2112
        %2115 = vset.pattern.permute.xlu0 3
        %2116 = vperm.xlu0 %2115, %v383
        %v2117 = vpop.permute.xlu0 %2116
        %2119 = vset.pattern.permute.xlu0 3
        %2120 = vperm.xlu0 %2119, %v384
        %v2121 = vpop.permute.xlu0 %2120
        %2123 = vset.pattern.permute.xlu0 3
        %2124 = vperm.xlu0 %2123, %v385
        %v2125 = vpop.permute.xlu0 %2124
        %2127 = vset.pattern.permute.xlu0 3
        %2128 = vperm.xlu0 %2127, %v386
        %v2129 = vpop.permute.xlu0 %2128
        %2131 = vset.pattern.permute.xlu0 3
        %2132 = vperm.xlu0 %2131, %v387
        %v2133 = vpop.permute.xlu0 %2132
        %2135 = vset.pattern.permute.xlu0 3
        %2136 = vperm.xlu0 %2135, %v388
        %v2137 = vpop.permute.xlu0 %2136
        %2139 = vset.pattern.permute.xlu0 3
        %2140 = vperm.xlu0 %2139, %v389
        %v2141 = vpop.permute.xlu0 %2140
        %2143 = vset.pattern.permute.xlu0 3
        %2144 = vperm.xlu0 %2143, %v390
        %v2145 = vpop.permute.xlu0 %2144
        %2147 = vset.pattern.permute.xlu0 3
        %2148 = vperm.xlu0 %2147, %v391
        %v2149 = vpop.permute.xlu0 %2148
        %2151 = vset.pattern.permute.xlu0 3
        %2152 = vperm.xlu0 %2151, %v392
        %v2153 = vpop.permute.xlu0 %2152
        %2155 = vset.pattern.permute.xlu0 3
        %2156 = vperm.xlu0 %2155, %v393
        %v2157 = vpop.permute.xlu0 %2156
        %2159 = vset.pattern.permute.xlu0 3
        %2160 = vperm.xlu0 %2159, %v394
        %v2161 = vpop.permute.xlu0 %2160
        %2163 = vset.pattern.permute.xlu0 3
        %2164 = vperm.xlu0 %2163, %v395
        %v2165 = vpop.permute.xlu0 %2164
        %2167 = vset.pattern.permute.xlu0 3
        %2168 = vperm.xlu0 %2167, %v396
        %v2169 = vpop.permute.xlu0 %2168
        %v2171 = vmul.f32 %v1820, %v2045
        %v2172 = vmul.f32 %v1692, %v2045
        %v2173 = vmul.f32 %v1821, %v2049
        %v2174 = vmul.f32 %v1693, %v2049
        %v2175 = vmul.f32 %v1822, %v2053
        %v2176 = vmul.f32 %v1694, %v2053
        %v2177 = vmul.f32 %v1823, %v2057
        %v2178 = vmul.f32 %v1695, %v2057
        %v2179 = vmul.f32 %v1824, %v2061
        %v2180 = vmul.f32 %v1696, %v2061
        %v2181 = vmul.f32 %v1825, %v2065
        %v2182 = vmul.f32 %v1697, %v2065
        %v2183 = vmul.f32 %v1826, %v2069
        %v2184 = vmul.f32 %v1698, %v2069
        %v2185 = vmul.f32 %v1827, %v2073
        %v2186 = vmul.f32 %v1699, %v2073
        %v2187 = vmul.f32 %v1828, %v2077
        %v2188 = vmul.f32 %v1700, %v2077
        %v2189 = vmul.f32 %v1829, %v2081
        %v2190 = vmul.f32 %v1701, %v2081
        %v2191 = vmul.f32 %v1830, %v2085
        %v2192 = vmul.f32 %v1702, %v2085
        %v2193 = vmul.f32 %v1831, %v2089
        %v2194 = vmul.f32 %v1703, %v2089
        %v2195 = vmul.f32 %v1832, %v2093
        %v2196 = vmul.f32 %v1704, %v2093
        %v2197 = vmul.f32 %v1833, %v2097
        %v2198 = vmul.f32 %v1705, %v2097
        %v2199 = vmul.f32 %v1834, %v2101
        %v2200 = vmul.f32 %v1706, %v2101
        %v2201 = vmul.f32 %v1835, %v2105
        %v2202 = vmul.f32 %v1707, %v2105
        %v2203 = vmul.f32 %v1836, %v2109
        %v2204 = vmul.f32 %v1708, %v2109
        %v2205 = vmul.f32 %v1837, %v2113
        %v2206 = vmul.f32 %v1709, %v2113
        %v2207 = vmul.f32 %v1838, %v2117
        %v2208 = vmul.f32 %v1710, %v2117
        %v2209 = vmul.f32 %v1839, %v2121
        %v2210 = vmul.f32 %v1711, %v2121
        %v2211 = vmul.f32 %v1840, %v2125
        %v2212 = vmul.f32 %v1712, %v2125
        %v2213 = vmul.f32 %v1841, %v2129
        %v2214 = vmul.f32 %v1713, %v2129
        %v2215 = vmul.f32 %v1842, %v2133
        %v2216 = vmul.f32 %v1714, %v2133
        %v2217 = vmul.f32 %v1843, %v2137
        %v2218 = vmul.f32 %v1715, %v2137
        %v2219 = vmul.f32 %v1844, %v2141
        %v2220 = vmul.f32 %v1716, %v2141
        %v2221 = vmul.f32 %v1845, %v2145
        %v2222 = vmul.f32 %v1717, %v2145
        %v2223 = vmul.f32 %v1846, %v2149
        %v2224 = vmul.f32 %v1718, %v2149
        %v2225 = vmul.f32 %v1847, %v2153
        %v2226 = vmul.f32 %v1719, %v2153
        %v2227 = vmul.f32 %v1848, %v2157
        %v2228 = vmul.f32 %v1720, %v2157
        %v2229 = vmul.f32 %v1849, %v2161
        %v2230 = vmul.f32 %v1721, %v2161
        %v2231 = vmul.f32 %v1850, %v2165
        %v2232 = vmul.f32 %v1722, %v2165
        %v2233 = vmul.f32 %v1819, %v2169
        %v2234 = vmul.f32 %v1691, %v2169
        %2299 = vrot.lane.b32.xlu0 %v1819, 64
        %v2300 = vpop.permute.xlu0 %2299
        %2301 = vrot.lane.b32.xlu0 %v1691, 64
        %v2302 = vpop.permute.xlu0 %2301
        %2303 = vrot.lane.b32.xlu0 %v1820, 64
        %v2304 = vpop.permute.xlu0 %2303
        %2305 = vrot.lane.b32.xlu0 %v1692, 64
        %v2306 = vpop.permute.xlu0 %2305
        %2307 = vrot.lane.b32.xlu0 %v1821, 64
        %v2308 = vpop.permute.xlu0 %2307
        %2309 = vrot.lane.b32.xlu0 %v1693, 64
        %v2310 = vpop.permute.xlu0 %2309
        %2311 = vrot.lane.b32.xlu0 %v1822, 64
        %v2312 = vpop.permute.xlu0 %2311
        %2313 = vrot.lane.b32.xlu0 %v1694, 64
        %v2314 = vpop.permute.xlu0 %2313
        %2315 = vrot.lane.b32.xlu0 %v1823, 64
        %v2316 = vpop.permute.xlu0 %2315
        %2317 = vrot.lane.b32.xlu0 %v1695, 64
        %v2318 = vpop.permute.xlu0 %2317
        %2319 = vrot.lane.b32.xlu0 %v1824, 64
        %v2320 = vpop.permute.xlu0 %2319
        %2321 = vrot.lane.b32.xlu0 %v1696, 64
        %v2322 = vpop.permute.xlu0 %2321
        %2323 = vrot.lane.b32.xlu0 %v1825, 64
        %v2324 = vpop.permute.xlu0 %2323
        %2325 = vrot.lane.b32.xlu0 %v1697, 64
        %v2326 = vpop.permute.xlu0 %2325
        %2327 = vrot.lane.b32.xlu0 %v1826, 64
        %v2328 = vpop.permute.xlu0 %2327
        %2329 = vrot.lane.b32.xlu0 %v1698, 64
        %v2330 = vpop.permute.xlu0 %2329
        %2331 = vrot.lane.b32.xlu0 %v1827, 64
        %v2332 = vpop.permute.xlu0 %2331
        %2333 = vrot.lane.b32.xlu0 %v1699, 64
        %v2334 = vpop.permute.xlu0 %2333
        %2335 = vrot.lane.b32.xlu0 %v1828, 64
        %v2336 = vpop.permute.xlu0 %2335
        %2337 = vrot.lane.b32.xlu0 %v1700, 64
        %v2338 = vpop.permute.xlu0 %2337
        %2339 = vrot.lane.b32.xlu0 %v1829, 64
        %v2340 = vpop.permute.xlu0 %2339
        %2341 = vrot.lane.b32.xlu0 %v1701, 64
        %v2342 = vpop.permute.xlu0 %2341
        %2343 = vrot.lane.b32.xlu0 %v1830, 64
        %v2344 = vpop.permute.xlu0 %2343
        %2345 = vrot.lane.b32.xlu0 %v1702, 64
        %v2346 = vpop.permute.xlu0 %2345
        %2347 = vrot.lane.b32.xlu0 %v1831, 64
        %v2348 = vpop.permute.xlu0 %2347
        %2349 = vrot.lane.b32.xlu0 %v1703, 64
        %v2350 = vpop.permute.xlu0 %2349
        %2351 = vrot.lane.b32.xlu0 %v1832, 64
        %v2352 = vpop.permute.xlu0 %2351
        %2353 = vrot.lane.b32.xlu0 %v1704, 64
        %v2354 = vpop.permute.xlu0 %2353
        %2355 = vrot.lane.b32.xlu0 %v1833, 64
        %v2356 = vpop.permute.xlu0 %2355
        %2357 = vrot.lane.b32.xlu0 %v1705, 64
        %v2358 = vpop.permute.xlu0 %2357
        %2359 = vrot.lane.b32.xlu0 %v1834, 64
        %v2360 = vpop.permute.xlu0 %2359
        %2361 = vrot.lane.b32.xlu0 %v1706, 64
        %v2362 = vpop.permute.xlu0 %2361
        %2363 = vrot.lane.b32.xlu0 %v1835, 64
        %v2364 = vpop.permute.xlu0 %2363
        %2365 = vrot.lane.b32.xlu0 %v1707, 64
        %v2366 = vpop.permute.xlu0 %2365
        %2367 = vrot.lane.b32.xlu0 %v1836, 64
        %v2368 = vpop.permute.xlu0 %2367
        %2369 = vrot.lane.b32.xlu0 %v1708, 64
        %v2370 = vpop.permute.xlu0 %2369
        %2371 = vrot.lane.b32.xlu0 %v1837, 64
        %v2372 = vpop.permute.xlu0 %2371
        %2373 = vrot.lane.b32.xlu0 %v1709, 64
        %v2374 = vpop.permute.xlu0 %2373
        %2375 = vrot.lane.b32.xlu0 %v1838, 64
        %v2376 = vpop.permute.xlu0 %2375
        %2377 = vrot.lane.b32.xlu0 %v1710, 64
        %v2378 = vpop.permute.xlu0 %2377
        %2379 = vrot.lane.b32.xlu0 %v1839, 64
        %v2380 = vpop.permute.xlu0 %2379
        %2381 = vrot.lane.b32.xlu0 %v1711, 64
        %v2382 = vpop.permute.xlu0 %2381
        %2383 = vrot.lane.b32.xlu0 %v1840, 64
        %v2384 = vpop.permute.xlu0 %2383
        %2385 = vrot.lane.b32.xlu0 %v1712, 64
        %v2386 = vpop.permute.xlu0 %2385
        %2387 = vrot.lane.b32.xlu0 %v1841, 64
        %v2388 = vpop.permute.xlu0 %2387
        %2389 = vrot.lane.b32.xlu0 %v1713, 64
        %v2390 = vpop.permute.xlu0 %2389
        %2391 = vrot.lane.b32.xlu0 %v1842, 64
        %v2392 = vpop.permute.xlu0 %2391
        %2393 = vrot.lane.b32.xlu0 %v1714, 64
        %v2394 = vpop.permute.xlu0 %2393
        %2395 = vrot.lane.b32.xlu0 %v1843, 64
        %v2396 = vpop.permute.xlu0 %2395
        %2397 = vrot.lane.b32.xlu0 %v1715, 64
        %v2398 = vpop.permute.xlu0 %2397
        %2399 = vrot.lane.b32.xlu0 %v1844, 64
        %v2400 = vpop.permute.xlu0 %2399
        %2401 = vrot.lane.b32.xlu0 %v1716, 64
        %v2402 = vpop.permute.xlu0 %2401
        %2403 = vrot.lane.b32.xlu0 %v1845, 64
        %v2404 = vpop.permute.xlu0 %2403
        %2405 = vrot.lane.b32.xlu0 %v1717, 64
        %v2406 = vpop.permute.xlu0 %2405
        %2407 = vrot.lane.b32.xlu0 %v1846, 64
        %v2408 = vpop.permute.xlu0 %2407
        %2409 = vrot.lane.b32.xlu0 %v1718, 64
        %v2410 = vpop.permute.xlu0 %2409
        %2411 = vrot.lane.b32.xlu0 %v1847, 64
        %v2412 = vpop.permute.xlu0 %2411
        %2413 = vrot.lane.b32.xlu0 %v1719, 64
        %v2414 = vpop.permute.xlu0 %2413
        %2415 = vrot.lane.b32.xlu0 %v1848, 64
        %v2416 = vpop.permute.xlu0 %2415
        %2417 = vrot.lane.b32.xlu0 %v1720, 64
        %v2418 = vpop.permute.xlu0 %2417
        %2419 = vrot.lane.b32.xlu0 %v1849, 64
        %v2420 = vpop.permute.xlu0 %2419
        %2421 = vrot.lane.b32.xlu0 %v1721, 64
        %v2422 = vpop.permute.xlu0 %2421
        %2423 = vrot.lane.b32.xlu0 %v1850, 64
        %v2424 = vpop.permute.xlu0 %2423
        %2425 = vrot.lane.b32.xlu0 %v1722, 64
        %v2426 = vpop.permute.xlu0 %2425
        %v2427 = vsel %vm708, %v2300, %v2302
        %v2428 = vsel %vm708, %v2304, %v2306
        %v2429 = vsel %vm708, %v2308, %v2310
        %v2430 = vsel %vm708, %v2312, %v2314
        %v2431 = vsel %vm708, %v2316, %v2318
        %v2432 = vsel %vm708, %v2320, %v2322
        %v2433 = vsel %vm708, %v2324, %v2326
        %v2434 = vsel %vm708, %v2328, %v2330
        %v2435 = vsel %vm708, %v2332, %v2334
        %v2436 = vsel %vm708, %v2336, %v2338
        %v2437 = vsel %vm708, %v2340, %v2342
        %v2438 = vsel %vm708, %v2344, %v2346
        %v2439 = vsel %vm708, %v2348, %v2350
        %v2440 = vsel %vm708, %v2352, %v2354
        %v2441 = vsel %vm708, %v2356, %v2358
        %v2442 = vsel %vm708, %v2360, %v2362
        %v2443 = vsel %vm708, %v2364, %v2366
        %v2444 = vsel %vm708, %v2368, %v2370
        %v2445 = vsel %vm708, %v2372, %v2374
        %v2446 = vsel %vm708, %v2376, %v2378
        %v2447 = vsel %vm708, %v2380, %v2382
        %v2448 = vsel %vm708, %v2384, %v2386
        %v2449 = vsel %vm708, %v2388, %v2390
        %v2450 = vsel %vm708, %v2392, %v2394
        %v2451 = vsel %vm708, %v2396, %v2398
        %v2452 = vsel %vm708, %v2400, %v2402
        %v2453 = vsel %vm708, %v2404, %v2406
        %v2454 = vsel %vm708, %v2408, %v2410
        %v2455 = vsel %vm708, %v2412, %v2414
        %v2456 = vsel %vm708, %v2416, %v2418
        %v2457 = vsel %vm708, %v2420, %v2422
        %v2458 = vsel %vm708, %v2424, %v2426
        %v2523 = vsel %vm708, %v1980, %v2300
        %v2524 = vsel %vm708, %v1982, %v2304
        %v2525 = vsel %vm708, %v1984, %v2308
        %v2526 = vsel %vm708, %v1986, %v2312
        %v2527 = vsel %vm708, %v1988, %v2316
        %v2528 = vsel %vm708, %v1990, %v2320
        %v2529 = vsel %vm708, %v1992, %v2324
        %v2530 = vsel %vm708, %v1994, %v2328
        %v2531 = vsel %vm708, %v1996, %v2332
        %v2532 = vsel %vm708, %v1998, %v2336
        %v2533 = vsel %vm708, %v2000, %v2340
        %v2534 = vsel %vm708, %v2002, %v2344
        %v2535 = vsel %vm708, %v2004, %v2348
        %v2536 = vsel %vm708, %v2006, %v2352
        %v2537 = vsel %vm708, %v2008, %v2356
        %v2538 = vsel %vm708, %v2010, %v2360
        %v2539 = vsel %vm708, %v2012, %v2364
        %v2540 = vsel %vm708, %v2014, %v2368
        %v2541 = vsel %vm708, %v2016, %v2372
        %v2542 = vsel %vm708, %v2018, %v2376
        %v2543 = vsel %vm708, %v2020, %v2380
        %v2544 = vsel %vm708, %v2022, %v2384
        %v2545 = vsel %vm708, %v2024, %v2388
        %v2546 = vsel %vm708, %v2026, %v2392
        %v2547 = vsel %vm708, %v2028, %v2396
        %v2548 = vsel %vm708, %v2030, %v2400
        %v2549 = vsel %vm708, %v2032, %v2404
        %v2550 = vsel %vm708, %v2034, %v2408
        %v2551 = vsel %vm708, %v2036, %v2412
        %v2552 = vsel %vm708, %v2038, %v2416
        %v2553 = vsel %vm708, %v2040, %v2420
        %v2554 = vsel %vm708, %v2042, %v2424
        %v2555 = vpack.c.bf16 %v1981, %v1979
        %v2556 = vpack.c.bf16 %v2524, %v2523
        %v2557 = vpack.c.bf16 %v2428, %v2427
        %v2558 = vpack.c.bf16 %v2173, %v2171
        %v2559 = vpack.c.bf16 %v2174, %v2172
        %v2560 = vpack.c.bf16 %v1985, %v1983
        %v2561 = vpack.c.bf16 %v2526, %v2525
        %v2562 = vpack.c.bf16 %v2430, %v2429
        %v2563 = vpack.c.bf16 %v2177, %v2175
        %v2564 = vpack.c.bf16 %v2178, %v2176
        %v2565 = vpack.c.bf16 %v1989, %v1987
        %v2566 = vpack.c.bf16 %v2528, %v2527
        %v2567 = vpack.c.bf16 %v2432, %v2431
        %v2568 = vpack.c.bf16 %v2181, %v2179
        %v2569 = vpack.c.bf16 %v2182, %v2180
        %v2570 = vpack.c.bf16 %v1993, %v1991
        %v2571 = vpack.c.bf16 %v2530, %v2529
        %v2572 = vpack.c.bf16 %v2434, %v2433
        %v2573 = vpack.c.bf16 %v2185, %v2183
        %v2574 = vpack.c.bf16 %v2186, %v2184
        %v2575 = vpack.c.bf16 %v1997, %v1995
        %v2576 = vpack.c.bf16 %v2532, %v2531
        %v2577 = vpack.c.bf16 %v2436, %v2435
        %v2578 = vpack.c.bf16 %v2189, %v2187
        %v2579 = vpack.c.bf16 %v2190, %v2188
        %v2580 = vpack.c.bf16 %v2001, %v1999
        %v2581 = vpack.c.bf16 %v2534, %v2533
        %v2582 = vpack.c.bf16 %v2438, %v2437
        %v2583 = vpack.c.bf16 %v2193, %v2191
        %v2584 = vpack.c.bf16 %v2194, %v2192
        %v2585 = vpack.c.bf16 %v2005, %v2003
        %v2586 = vpack.c.bf16 %v2536, %v2535
        %v2587 = vpack.c.bf16 %v2440, %v2439
        %v2588 = vpack.c.bf16 %v2197, %v2195
        %v2589 = vpack.c.bf16 %v2198, %v2196
        %v2590 = vpack.c.bf16 %v2009, %v2007
        %v2591 = vpack.c.bf16 %v2538, %v2537
        %v2592 = vpack.c.bf16 %v2442, %v2441
        %v2593 = vpack.c.bf16 %v2201, %v2199
        %v2594 = vpack.c.bf16 %v2202, %v2200
        %v2595 = vpack.c.bf16 %v2013, %v2011
        %v2596 = vpack.c.bf16 %v2540, %v2539
        %v2597 = vpack.c.bf16 %v2444, %v2443
        %v2598 = vpack.c.bf16 %v2205, %v2203
        %v2599 = vpack.c.bf16 %v2206, %v2204
        %v2600 = vpack.c.bf16 %v2017, %v2015
        %v2601 = vpack.c.bf16 %v2542, %v2541
        %v2602 = vpack.c.bf16 %v2446, %v2445
        %v2603 = vpack.c.bf16 %v2209, %v2207
        %v2604 = vpack.c.bf16 %v2210, %v2208
        %v2605 = vpack.c.bf16 %v2021, %v2019
        %v2606 = vpack.c.bf16 %v2544, %v2543
        %v2607 = vpack.c.bf16 %v2448, %v2447
        %v2608 = vpack.c.bf16 %v2213, %v2211
        %v2609 = vpack.c.bf16 %v2214, %v2212
        %v2610 = vpack.c.bf16 %v2025, %v2023
        %v2611 = vpack.c.bf16 %v2546, %v2545
        %v2612 = vpack.c.bf16 %v2450, %v2449
        %v2613 = vpack.c.bf16 %v2217, %v2215
        %v2614 = vpack.c.bf16 %v2218, %v2216
        %v2615 = vpack.c.bf16 %v2029, %v2027
        %v2616 = vpack.c.bf16 %v2548, %v2547
        %v2617 = vpack.c.bf16 %v2452, %v2451
        %v2618 = vpack.c.bf16 %v2221, %v2219
        %v2619 = vpack.c.bf16 %v2222, %v2220
        %v2620 = vpack.c.bf16 %v2033, %v2031
        %v2621 = vpack.c.bf16 %v2550, %v2549
        %v2622 = vpack.c.bf16 %v2454, %v2453
        %v2623 = vpack.c.bf16 %v2225, %v2223
        %v2624 = vpack.c.bf16 %v2226, %v2224
        %v2625 = vpack.c.bf16 %v2037, %v2035
        %v2626 = vpack.c.bf16 %v2552, %v2551
        %v2627 = vpack.c.bf16 %v2456, %v2455
        %v2628 = vpack.c.bf16 %v2229, %v2227
        %v2629 = vpack.c.bf16 %v2230, %v2228
        %v2630 = vpack.c.bf16 %v2041, %v2039
        %v2631 = vpack.c.bf16 %v2554, %v2553
        %v2632 = vpack.c.bf16 %v2458, %v2457
        %v2633 = vpack.c.bf16 %v2233, %v2231
        %v2634 = vpack.c.bf16 %v2234, %v2232
        %v2635 = vld [vmem:[%s4] sm:$0xf]
        %v2636 = vld [vmem:[%s4 + $0x4] sm:$0xf]
        %v2637 = vld [vmem:[%s4 + $0x8] sm:$0xf]
        %v2638 = vld [vmem:[%s4 + $0xc] sm:$0xf]
        %v2639 = vld [vmem:[%s4 + $0x10] sm:$0xf]
        %v2640 = vld [vmem:[%s4 + $0x14] sm:$0xf]
        %v2641 = vld [vmem:[%s4 + $0x18] sm:$0xf]
        %v2642 = vld [vmem:[%s4 + $0x1c] sm:$0xf]
        %v2643 = vld [vmem:[%s4 + $0x20] sm:$0xf]
        %v2644 = vld [vmem:[%s4 + $0x24] sm:$0xf]
        %v2645 = vld [vmem:[%s4 + $0x28] sm:$0xf]
        %v2646 = vld [vmem:[%s4 + $0x2c] sm:$0xf]
        %v2647 = vld [vmem:[%s4 + $0x30] sm:$0xf]
        %v2648 = vld [vmem:[%s4 + $0x34] sm:$0xf]
        %v2649 = vld [vmem:[%s4 + $0x38] sm:$0xf]
        %v2650 = vld [vmem:[%s4 + $0x3c] sm:$0xf]
        %v2651 = vld [vmem:[%s4 + $0x40] sm:$0xf]
        %v2652 = vld [vmem:[%s4 + $0x44] sm:$0xf]
        %v2653 = vld [vmem:[%s4 + $0x48] sm:$0xf]
        %v2654 = vld [vmem:[%s4 + $0x4c] sm:$0xf]
        %v2655 = vld [vmem:[%s4 + $0x50] sm:$0xf]
        %v2656 = vld [vmem:[%s4 + $0x54] sm:$0xf]
        %v2657 = vld [vmem:[%s4 + $0x58] sm:$0xf]
        %v2658 = vld [vmem:[%s4 + $0x5c] sm:$0xf]
        %v2659 = vld [vmem:[%s4 + $0x60] sm:$0xf]
        %v2660 = vld [vmem:[%s4 + $0x64] sm:$0xf]
        %v2661 = vld [vmem:[%s4 + $0x68] sm:$0xf]
        %v2662 = vld [vmem:[%s4 + $0x6c] sm:$0xf]
        %v2663 = vld [vmem:[%s4 + $0x70] sm:$0xf]
        %v2664 = vld [vmem:[%s4 + $0x74] sm:$0xf]
        %v2665 = vld [vmem:[%s4 + $0x78] sm:$0xf]
        %v2666 = vld [vmem:[%s4 + $0x7c] sm:$0xf]
        %v2667 = vld [vmem:[%s4 + $0x80] sm:$0xf]
        %v2668 = vld [vmem:[%s4 + $0x84] sm:$0xf]
        %v2669 = vld [vmem:[%s4 + $0x88] sm:$0xf]
        %v2670 = vld [vmem:[%s4 + $0x8c] sm:$0xf]
        %v2671 = vld [vmem:[%s4 + $0x90] sm:$0xf]
        %v2672 = vld [vmem:[%s4 + $0x94] sm:$0xf]
        %v2673 = vld [vmem:[%s4 + $0x98] sm:$0xf]
        %v2674 = vld [vmem:[%s4 + $0x9c] sm:$0xf]
        %v2675 = vld [vmem:[%s4 + $0xa0] sm:$0xf]
        %v2676 = vld [vmem:[%s4 + $0xa4] sm:$0xf]
        %v2677 = vld [vmem:[%s4 + $0xa8] sm:$0xf]
        %v2678 = vld [vmem:[%s4 + $0xac] sm:$0xf]
        %v2679 = vld [vmem:[%s4 + $0xb0] sm:$0xf]
        %v2680 = vld [vmem:[%s4 + $0xb4] sm:$0xf]
        %v2681 = vld [vmem:[%s4 + $0xb8] sm:$0xf]
        %v2682 = vld [vmem:[%s4 + $0xbc] sm:$0xf]
        %v2683 = vld [vmem:[%s4 + $0xc0] sm:$0xf]
        %v2684 = vld [vmem:[%s4 + $0xc4] sm:$0xf]
        %v2685 = vld [vmem:[%s4 + $0xc8] sm:$0xf]
        %v2686 = vld [vmem:[%s4 + $0xcc] sm:$0xf]
        %v2687 = vld [vmem:[%s4 + $0xd0] sm:$0xf]
        %v2688 = vld [vmem:[%s4 + $0xd4] sm:$0xf]
        %v2689 = vld [vmem:[%s4 + $0xd8] sm:$0xf]
        %v2690 = vld [vmem:[%s4 + $0xdc] sm:$0xf]
        %v2691 = vld [vmem:[%s4 + $0xe0] sm:$0xf]
        %v2692 = vld [vmem:[%s4 + $0xe4] sm:$0xf]
        %v2693 = vld [vmem:[%s4 + $0xe8] sm:$0xf]
        %v2694 = vld [vmem:[%s4 + $0xec] sm:$0xf]
        %v2695 = vld [vmem:[%s4 + $0xf0] sm:$0xf]
        %v2696 = vld [vmem:[%s4 + $0xf4] sm:$0xf]
        %v2697 = vld [vmem:[%s4 + $0xf8] sm:$0xf]
        %v2698 = vld [vmem:[%s4 + $0xfc] sm:$0xf]
        %v2699 = vld [vmem:[%s4 + $0x100] sm:$0xf]
        %v2700 = vld [vmem:[%s4 + $0x104] sm:$0xf]
        %v2701 = vld [vmem:[%s4 + $0x108] sm:$0xf]
        %v2702 = vld [vmem:[%s4 + $0x10c] sm:$0xf]
        %v2703 = vld [vmem:[%s4 + $0x110] sm:$0xf]
        %v2704 = vld [vmem:[%s4 + $0x114] sm:$0xf]
        %v2705 = vld [vmem:[%s4 + $0x118] sm:$0xf]
        %v2706 = vld [vmem:[%s4 + $0x11c] sm:$0xf]
        %v2707 = vld [vmem:[%s5] sm:$0x1]
        %v2709 = vlaneseq
        %v2710 = vshrl.u32 %v2709, 7
        %v2711 = vsub.s32 0, %v2710
        %v2712 = vrot.slane %v2707, %v2711
        %v2786 = vunpack.c.l.b16 %v2635
        %v2787 = vunpack.c.l.b16 %v2636
        %v2788 = vunpack.c.l.b16 %v2637
        %v2789 = vunpack.c.l.b16 %v2638
        %v2790 = vunpack.c.l.b16 %v2639
        %v2791 = vunpack.c.l.b16 %v2640
        %v2792 = vunpack.c.l.b16 %v2641
        %v2793 = vunpack.c.l.b16 %v2642
        %v2794 = vunpack.c.l.b16 %v2643
        %v2795 = vunpack.c.l.b16 %v2644
        %v2796 = vunpack.c.l.b16 %v2645
        %v2797 = vunpack.c.l.b16 %v2646
        %v2798 = vunpack.c.l.b16 %v2647
        %v2799 = vunpack.c.l.b16 %v2648
        %v2800 = vunpack.c.l.b16 %v2649
        %v2801 = vunpack.c.l.b16 %v2650
        %v2802 = vunpack.c.l.b16 %v2651
        %v2803 = vunpack.c.l.b16 %v2652
        %v2804 = vunpack.c.l.b16 %v2653
        %v2805 = vunpack.c.l.b16 %v2654
        %v2806 = vunpack.c.l.b16 %v2655
        %v2807 = vunpack.c.l.b16 %v2656
        %v2808 = vunpack.c.l.b16 %v2657
        %v2809 = vunpack.c.l.b16 %v2658
        %v2810 = vunpack.c.l.b16 %v2659
        %v2811 = vunpack.c.l.b16 %v2660
        %v2812 = vunpack.c.l.b16 %v2661
        %v2813 = vunpack.c.l.b16 %v2662
        %v2814 = vunpack.c.l.b16 %v2663
        %v2815 = vunpack.c.l.b16 %v2664
        %v2816 = vunpack.c.l.b16 %v2665
        %v2817 = vunpack.c.l.b16 %v2666
        %v2818 = vunpack.c.l.b16 %v2667
        %v2819 = vunpack.c.l.b16 %v2668
        %v2820 = vunpack.c.l.b16 %v2669
        %v2821 = vunpack.c.l.b16 %v2670
        %v2822 = vunpack.c.l.b16 %v2671
        %v2823 = vunpack.c.l.b16 %v2672
        %v2824 = vunpack.c.l.b16 %v2673
        %v2825 = vunpack.c.l.b16 %v2674
        %v2826 = vunpack.c.l.b16 %v2675
        %v2827 = vunpack.c.l.b16 %v2676
        %v2828 = vunpack.c.l.b16 %v2677
        %v2829 = vunpack.c.l.b16 %v2678
        %v2830 = vunpack.c.l.b16 %v2679
        %v2831 = vunpack.c.l.b16 %v2680
        %v2832 = vunpack.c.l.b16 %v2681
        %v2833 = vunpack.c.l.b16 %v2682
        %v2834 = vunpack.c.l.b16 %v2683
        %v2835 = vunpack.c.l.b16 %v2684
        %v2836 = vunpack.c.l.b16 %v2685
        %v2837 = vunpack.c.l.b16 %v2686
        %v2838 = vunpack.c.l.b16 %v2687
        %v2839 = vunpack.c.l.b16 %v2688
        %v2840 = vunpack.c.l.b16 %v2689
        %v2841 = vunpack.c.l.b16 %v2690
        %v2842 = vunpack.c.l.b16 %v2691
        %v2843 = vunpack.c.l.b16 %v2692
        %v2844 = vunpack.c.l.b16 %v2693
        %v2845 = vunpack.c.l.b16 %v2694
        %v2846 = vunpack.c.l.b16 %v2695
        %v2847 = vunpack.c.l.b16 %v2696
        %v2848 = vunpack.c.l.b16 %v2697
        %v2849 = vunpack.c.l.b16 %v2698
        %v2850 = vunpack.c.l.b16 %v2699
        %v2851 = vunpack.c.l.b16 %v2700
        %v2852 = vunpack.c.l.b16 %v2701
        %v2853 = vunpack.c.l.b16 %v2702
        %v2854 = vunpack.c.l.b16 %v2703
        %v2855 = vunpack.c.l.b16 %v2704
        %v2856 = vunpack.c.l.b16 %v2705
        %v2857 = vunpack.c.l.b16 %v2706
        %v2858 = vpack.c.b16 %v2787, %v2786
        %v2859 = vpack.c.b16 %v2789, %v2788
        %v2860 = vpack.c.b16 %v2791, %v2790
        %v2861 = vpack.c.b16 %v2793, %v2792
        %v2862 = vpack.c.b16 %v2795, %v2794
        %v2863 = vpack.c.b16 %v2797, %v2796
        %v2864 = vpack.c.b16 %v2799, %v2798
        %v2865 = vpack.c.b16 %v2801, %v2800
        %v2866 = vpack.c.b16 %v2803, %v2802
        %v2867 = vpack.c.b16 %v2805, %v2804
        %v2868 = vpack.c.b16 %v2807, %v2806
        %v2869 = vpack.c.b16 %v2809, %v2808
        %v2870 = vpack.c.b16 %v2811, %v2810
        %v2871 = vpack.c.b16 %v2813, %v2812
        %v2872 = vpack.c.b16 %v2815, %v2814
        %v2873 = vpack.c.b16 %v2817, %v2816
        %v2874 = vpack.c.b16 %v2819, %v2818
        %v2875 = vpack.c.b16 %v2821, %v2820
        %v2876 = vpack.c.b16 %v2823, %v2822
        %v2877 = vpack.c.b16 %v2825, %v2824
        %v2878 = vpack.c.b16 %v2827, %v2826
        %v2879 = vpack.c.b16 %v2829, %v2828
        %v2880 = vpack.c.b16 %v2831, %v2830
        %v2881 = vpack.c.b16 %v2833, %v2832
        %v2882 = vpack.c.b16 %v2835, %v2834
        %v2883 = vpack.c.b16 %v2837, %v2836
        %v2884 = vpack.c.b16 %v2839, %v2838
        %v2885 = vpack.c.b16 %v2841, %v2840
        %v2886 = vpack.c.b16 %v2843, %v2842
        %v2887 = vpack.c.b16 %v2845, %v2844
        %v2888 = vpack.c.b16 %v2847, %v2846
        %v2889 = vpack.c.b16 %v2849, %v2848
        %v2890 = vpack.c.b16 %v2851, %v2850
        %v2891 = vpack.c.b16 %v2853, %v2852
        %v2892 = vpack.c.b16 %v2855, %v2854
        %v2893 = vpack.c.b16 %v2857, %v2856
        %v2931 = vsel %vm708, %v2559, 0
        %v2934 = vsel %vm708, %v2564, 0
        %v2937 = vsel %vm708, %v2569, 0
        %v2940 = vsel %vm708, %v2574, 0
        %v2943 = vsel %vm708, %v2579, 0
        %v2946 = vsel %vm708, %v2584, 0
        %v2949 = vsel %vm708, %v2589, 0
        %v2952 = vsel %vm708, %v2594, 0
        %v2955 = vsel %vm708, %v2599, 0
        %v2958 = vsel %vm708, %v2604, 0
        %v2961 = vsel %vm708, %v2609, 0
        %v2964 = vsel %vm708, %v2614, 0
        %v2967 = vsel %vm708, %v2619, 0
        %v2970 = vsel %vm708, %v2624, 0
        %v2973 = vsel %vm708, %v2629, 0
        %v2976 = vsel %vm708, %v2634, 0
        %2978 = vmatprep.subr.bf16.mxu0 0
        %2979 = vmatpush1.bf16.msra.mxu0 %v2865
        %2980 = vmatprep.subr.bf16.mxu0 0
        %2981 = vmatpush1.bf16.msra.mxu0 %v2864
        %2982 = vmatprep.subr.bf16.mxu0 0
        %2983 = vmatpush1.bf16.msra.mxu0 %v2863
        %2984 = vmatprep.subr.bf16.mxu0 0
        %2985 = vmatpush1.bf16.msra.mxu0 %v2862
        %2986 = vmatprep.subr.bf16.mxu0 0
        %2987 = vmatpush1.bf16.msra.mxu0 %v2861
        %2988 = vmatprep.subr.bf16.mxu0 0
        %2989 = vmatpush1.bf16.msra.mxu0 %v2860
        %2990 = vmatprep.subr.bf16.mxu0 0
        %2991 = vmatpush1.bf16.msra.mxu0 %v2859
        %2992 = vmatprep.subr.bf16.mxu0 0
        %2993 = vmatpush1.bf16.msra.mxu0 %v2858
        %2994 = vmatprep.subr.bf16.mxu0 0
        %2995 = vmatpush2.bf16.msra.mxu0 %v2873
        %2996 = vmatprep.subr.bf16.mxu0 0
        %2997 = vmatpush2.bf16.msra.mxu0 %v2872
        %2998 = vmatprep.subr.bf16.mxu0 0
        %2999 = vmatpush2.bf16.msra.mxu0 %v2871
        %3000 = vmatprep.subr.bf16.mxu0 0
        %3001 = vmatpush2.bf16.msra.mxu0 %v2870
        %3002 = vmatprep.subr.bf16.mxu0 0
        %3003 = vmatpush2.bf16.msra.mxu0 %v2869
        %3004 = vmatprep.subr.bf16.mxu0 0
        %3005 = vmatpush2.bf16.msra.mxu0 %v2868
        %3006 = vmatprep.subr.bf16.mxu0 0
        %3007 = vmatpush2.bf16.msra.mxu0 %v2867
        %3008 = vmatprep.subr.bf16.mxu0 0
        %3009 = vmatpush2.bf16.msra.mxu0 %v2866
        %3010 = vmatprep.mubr.bf16.mxu0 %v2556
        %3011 = vmatmul.mubr.bf16.gmra.mxu0 %v2555
        %v3012 = vpop.f32.mrf.mxu0
        %v3013 = vadd.f32 %v2712, %v3012
        %v3014 = vpop.f32.mrf.mxu0
        %v3015 = vpop.f32.mrf.mxu0
        %v3016 = vadd.f32 %v2712, %v3015
        %v3017 = vpop.f32.mrf.mxu0
        %3018 = vmatprep.mubr.bf16.mxu0 %v2561
        %3019 = vmatmul.mubr.bf16.gmra.mxu0 %v2560
        %v3020 = vpop.f32.mrf.mxu0
        %v3021 = vadd.f32 %v2712, %v3020
        %v3022 = vpop.f32.mrf.mxu0
        %v3023 = vpop.f32.mrf.mxu0
        %v3024 = vadd.f32 %v2712, %v3023
        %v3025 = vpop.f32.mrf.mxu0
        %3026 = vmatprep.mubr.bf16.mxu0 %v2566
        %3027 = vmatmul.mubr.bf16.gmra.mxu0 %v2565
        %v3028 = vpop.f32.mrf.mxu0
        %v3029 = vadd.f32 %v2712, %v3028
        %v3030 = vpop.f32.mrf.mxu0
        %v3031 = vpop.f32.mrf.mxu0
        %v3032 = vadd.f32 %v2712, %v3031
        %v3033 = vpop.f32.mrf.mxu0
        %3034 = vmatprep.mubr.bf16.mxu0 %v2571
        %3035 = vmatmul.mubr.bf16.gmra.mxu0 %v2570
        %v3036 = vpop.f32.mrf.mxu0
        %v3037 = vadd.f32 %v2712, %v3036
        %v3038 = vpop.f32.mrf.mxu0
        %v3039 = vpop.f32.mrf.mxu0
        %v3040 = vadd.f32 %v2712, %v3039
        %v3041 = vpop.f32.mrf.mxu0
        %3042 = vmatprep.mubr.bf16.mxu0 %v2576
        %3043 = vmatmul.mubr.bf16.gmra.mxu0 %v2575
        %v3044 = vpop.f32.mrf.mxu0
        %v3045 = vadd.f32 %v2712, %v3044
        %v3046 = vpop.f32.mrf.mxu0
        %v3047 = vpop.f32.mrf.mxu0
        %v3048 = vadd.f32 %v2712, %v3047
        %v3049 = vpop.f32.mrf.mxu0
        %3050 = vmatprep.mubr.bf16.mxu0 %v2581
        %3051 = vmatmul.mubr.bf16.gmra.mxu0 %v2580
        %v3052 = vpop.f32.mrf.mxu0
        %v3053 = vadd.f32 %v2712, %v3052
        %v3054 = vpop.f32.mrf.mxu0
        %v3055 = vpop.f32.mrf.mxu0
        %v3056 = vadd.f32 %v2712, %v3055
        %v3057 = vpop.f32.mrf.mxu0
        %3058 = vmatprep.mubr.bf16.mxu0 %v2586
        %3059 = vmatmul.mubr.bf16.gmra.mxu0 %v2585
        %v3060 = vpop.f32.mrf.mxu0
        %v3061 = vadd.f32 %v2712, %v3060
        %v3062 = vpop.f32.mrf.mxu0
        %v3063 = vpop.f32.mrf.mxu0
        %v3064 = vadd.f32 %v2712, %v3063
        %v3065 = vpop.f32.mrf.mxu0
        %3066 = vmatprep.mubr.bf16.mxu0 %v2591
        %3067 = vmatmul.mubr.bf16.gmra.mxu0 %v2590
        %v3068 = vpop.f32.mrf.mxu0
        %v3069 = vadd.f32 %v2712, %v3068
        %v3070 = vpop.f32.mrf.mxu0
        %v3071 = vpop.f32.mrf.mxu0
        %v3072 = vadd.f32 %v2712, %v3071
        %v3073 = vpop.f32.mrf.mxu0
        %3074 = vmatprep.mubr.bf16.mxu0 %v2596
        %3075 = vmatmul.mubr.bf16.gmra.mxu0 %v2595
        %v3076 = vpop.f32.mrf.mxu0
        %v3077 = vadd.f32 %v2712, %v3076
        %v3078 = vpop.f32.mrf.mxu0
        %v3079 = vpop.f32.mrf.mxu0
        %v3080 = vadd.f32 %v2712, %v3079
        %v3081 = vpop.f32.mrf.mxu0
        %3082 = vmatprep.mubr.bf16.mxu0 %v2601
        %3083 = vmatmul.mubr.bf16.gmra.mxu0 %v2600
        %v3084 = vpop.f32.mrf.mxu0
        %v3085 = vadd.f32 %v2712, %v3084
        %v3086 = vpop.f32.mrf.mxu0
        %v3087 = vpop.f32.mrf.mxu0
        %v3088 = vadd.f32 %v2712, %v3087
        %v3089 = vpop.f32.mrf.mxu0
        %3090 = vmatprep.mubr.bf16.mxu0 %v2606
        %3091 = vmatmul.mubr.bf16.gmra.mxu0 %v2605
        %v3092 = vpop.f32.mrf.mxu0
        %v3093 = vadd.f32 %v2712, %v3092
        %v3094 = vpop.f32.mrf.mxu0
        %v3095 = vpop.f32.mrf.mxu0
        %v3096 = vadd.f32 %v2712, %v3095
        %v3097 = vpop.f32.mrf.mxu0
        %3098 = vmatprep.mubr.bf16.mxu0 %v2611
        %3099 = vmatmul.mubr.bf16.gmra.mxu0 %v2610
        %v3100 = vpop.f32.mrf.mxu0
        %v3101 = vadd.f32 %v2712, %v3100
        %v3102 = vpop.f32.mrf.mxu0
        %v3103 = vpop.f32.mrf.mxu0
        %v3104 = vadd.f32 %v2712, %v3103
        %v3105 = vpop.f32.mrf.mxu0
        %3106 = vmatprep.mubr.bf16.mxu0 %v2616
        %3107 = vmatmul.mubr.bf16.gmra.mxu0 %v2615
        %v3108 = vpop.f32.mrf.mxu0
        %v3109 = vadd.f32 %v2712, %v3108
        %v3110 = vpop.f32.mrf.mxu0
        %v3111 = vpop.f32.mrf.mxu0
        %v3112 = vadd.f32 %v2712, %v3111
        %v3113 = vpop.f32.mrf.mxu0
        %3114 = vmatprep.mubr.bf16.mxu0 %v2621
        %3115 = vmatmul.mubr.bf16.gmra.mxu0 %v2620
        %v3116 = vpop.f32.mrf.mxu0
        %v3117 = vadd.f32 %v2712, %v3116
        %v3118 = vpop.f32.mrf.mxu0
        %v3119 = vpop.f32.mrf.mxu0
        %v3120 = vadd.f32 %v2712, %v3119
        %v3121 = vpop.f32.mrf.mxu0
        %3122 = vmatprep.mubr.bf16.mxu0 %v2626
        %3123 = vmatmul.mubr.bf16.gmra.mxu0 %v2625
        %v3124 = vpop.f32.mrf.mxu0
        %v3125 = vadd.f32 %v2712, %v3124
        %v3126 = vpop.f32.mrf.mxu0
        %v3127 = vpop.f32.mrf.mxu0
        %v3128 = vadd.f32 %v2712, %v3127
        %v3129 = vpop.f32.mrf.mxu0
        %3130 = vmatprep.mubr.bf16.mxu0 %v2631
        %3131 = vmatmul.mubr.bf16.gmra.mxu0 %v2630
        %v3132 = vpop.f32.mrf.mxu0
        %v3133 = vadd.f32 %v2712, %v3132
        %v3134 = vpop.f32.mrf.mxu0
        %v3135 = vpop.f32.mrf.mxu0
        %v3136 = vadd.f32 %v2712, %v3135
        %v3137 = vpop.f32.mrf.mxu0
        %3138 = vdwg.mxu0
        %3139 = vmatprep.subr.bf16.mxu0 0
        %3140 = vmatpush1.bf16.msra.mxu0 %v2881
        %3141 = vmatprep.subr.bf16.mxu0 0
        %3142 = vmatpush1.bf16.msra.mxu0 %v2880
        %3143 = vmatprep.subr.bf16.mxu0 0
        %3144 = vmatpush1.bf16.msra.mxu0 %v2879
        %3145 = vmatprep.subr.bf16.mxu0 0
        %3146 = vmatpush1.bf16.msra.mxu0 %v2878
        %3147 = vmatprep.subr.bf16.mxu0 0
        %3148 = vmatpush1.bf16.msra.mxu0 %v2877
        %3149 = vmatprep.subr.bf16.mxu0 0
        %3150 = vmatpush1.bf16.msra.mxu0 %v2876
        %3151 = vmatprep.subr.bf16.mxu0 0
        %3152 = vmatpush1.bf16.msra.mxu0 %v2875
        %3153 = vmatprep.subr.bf16.mxu0 0
        %3154 = vmatpush1.bf16.msra.mxu0 %v2874
        %3155 = vmatprep.subr.bf16.mxu0 0
        %3156 = vmatpush2.bf16.msra.mxu0 %v2889
        %3157 = vmatprep.subr.bf16.mxu0 0
        %3158 = vmatpush2.bf16.msra.mxu0 %v2888
        %3159 = vmatprep.subr.bf16.mxu0 0
        %3160 = vmatpush2.bf16.msra.mxu0 %v2887
        %3161 = vmatprep.subr.bf16.mxu0 0
        %3162 = vmatpush2.bf16.msra.mxu0 %v2886
        %3163 = vmatprep.subr.bf16.mxu0 0
        %3164 = vmatpush2.bf16.msra.mxu0 %v2885
        %3165 = vmatprep.subr.bf16.mxu0 0
        %3166 = vmatpush2.bf16.msra.mxu0 %v2884
        %3167 = vmatprep.subr.bf16.mxu0 0
        %3168 = vmatpush2.bf16.msra.mxu0 %v2883
        %3169 = vmatprep.subr.bf16.mxu0 0
        %3170 = vmatpush2.bf16.msra.mxu0 %v2882
        %3171 = vmatprep.mubr.bf16.mxu0 %v2558
        %3172 = vmatmul.mubr.bf16.gmra.mxu0 %v2557
        %v3173 = vpop.f32.mrf.mxu0
        %v3174 = vadd.f32 %v3013, %v3173
        %v3175 = vpop.f32.mrf.mxu0
        %v3176 = vpop.f32.mrf.mxu0
        %v3177 = vadd.f32 %v3016, %v3176
        %v3178 = vpop.f32.mrf.mxu0
        %3179 = vmatprep.mubr.bf16.mxu0 %v2563
        %3180 = vmatmul.mubr.bf16.gmra.mxu0 %v2562
        %v3181 = vpop.f32.mrf.mxu0
        %v3182 = vadd.f32 %v3021, %v3181
        %v3183 = vpop.f32.mrf.mxu0
        %v3184 = vpop.f32.mrf.mxu0
        %v3185 = vadd.f32 %v3024, %v3184
        %v3186 = vpop.f32.mrf.mxu0
        %3187 = vmatprep.mubr.bf16.mxu0 %v2568
        %3188 = vmatmul.mubr.bf16.gmra.mxu0 %v2567
        %v3189 = vpop.f32.mrf.mxu0
        %v3190 = vadd.f32 %v3029, %v3189
        %v3191 = vpop.f32.mrf.mxu0
        %v3192 = vpop.f32.mrf.mxu0
        %v3193 = vadd.f32 %v3032, %v3192
        %v3194 = vpop.f32.mrf.mxu0
        %3195 = vmatprep.mubr.bf16.mxu0 %v2573
        %3196 = vmatmul.mubr.bf16.gmra.mxu0 %v2572
        %v3197 = vpop.f32.mrf.mxu0
        %v3198 = vadd.f32 %v3037, %v3197
        %v3199 = vpop.f32.mrf.mxu0
        %v3200 = vpop.f32.mrf.mxu0
        %v3201 = vadd.f32 %v3040, %v3200
        %v3202 = vpop.f32.mrf.mxu0
        %3203 = vmatprep.mubr.bf16.mxu0 %v2578
        %3204 = vmatmul.mubr.bf16.gmra.mxu0 %v2577
        %v3205 = vpop.f32.mrf.mxu0
        %v3206 = vadd.f32 %v3045, %v3205
        %v3207 = vpop.f32.mrf.mxu0
        %v3208 = vpop.f32.mrf.mxu0
        %v3209 = vadd.f32 %v3048, %v3208
        %v3210 = vpop.f32.mrf.mxu0
        %3211 = vmatprep.mubr.bf16.mxu0 %v2583
        %3212 = vmatmul.mubr.bf16.gmra.mxu0 %v2582
        %v3213 = vpop.f32.mrf.mxu0
        %v3214 = vadd.f32 %v3053, %v3213
        %v3215 = vpop.f32.mrf.mxu0
        %v3216 = vpop.f32.mrf.mxu0
        %v3217 = vadd.f32 %v3056, %v3216
        %v3218 = vpop.f32.mrf.mxu0
        %3219 = vmatprep.mubr.bf16.mxu0 %v2588
        %3220 = vmatmul.mubr.bf16.gmra.mxu0 %v2587
        %v3221 = vpop.f32.mrf.mxu0
        %v3222 = vadd.f32 %v3061, %v3221
        %v3223 = vpop.f32.mrf.mxu0
        %v3224 = vpop.f32.mrf.mxu0
        %v3225 = vadd.f32 %v3064, %v3224
        %v3226 = vpop.f32.mrf.mxu0
        %3227 = vmatprep.mubr.bf16.mxu0 %v2593
        %3228 = vmatmul.mubr.bf16.gmra.mxu0 %v2592
        %v3229 = vpop.f32.mrf.mxu0
        %v3230 = vadd.f32 %v3069, %v3229
        %v3231 = vpop.f32.mrf.mxu0
        %v3232 = vpop.f32.mrf.mxu0
        %v3233 = vadd.f32 %v3072, %v3232
        %v3234 = vpop.f32.mrf.mxu0
        %3235 = vmatprep.mubr.bf16.mxu0 %v2598
        %3236 = vmatmul.mubr.bf16.gmra.mxu0 %v2597
        %v3237 = vpop.f32.mrf.mxu0
        %v3238 = vadd.f32 %v3077, %v3237
        %v3239 = vpop.f32.mrf.mxu0
        %v3240 = vpop.f32.mrf.mxu0
        %v3241 = vadd.f32 %v3080, %v3240
        %v3242 = vpop.f32.mrf.mxu0
        %3243 = vmatprep.mubr.bf16.mxu0 %v2603
        %3244 = vmatmul.mubr.bf16.gmra.mxu0 %v2602
        %v3245 = vpop.f32.mrf.mxu0
        %v3246 = vadd.f32 %v3085, %v3245
        %v3247 = vpop.f32.mrf.mxu0
        %v3248 = vpop.f32.mrf.mxu0
        %v3249 = vadd.f32 %v3088, %v3248
        %v3250 = vpop.f32.mrf.mxu0
        %3251 = vmatprep.mubr.bf16.mxu0 %v2608
        %3252 = vmatmul.mubr.bf16.gmra.mxu0 %v2607
        %v3253 = vpop.f32.mrf.mxu0
        %v3254 = vadd.f32 %v3093, %v3253
        %v3255 = vpop.f32.mrf.mxu0
        %v3256 = vpop.f32.mrf.mxu0
        %v3257 = vadd.f32 %v3096, %v3256
        %v3258 = vpop.f32.mrf.mxu0
        %3259 = vmatprep.mubr.bf16.mxu0 %v2613
        %3260 = vmatmul.mubr.bf16.gmra.mxu0 %v2612
        %v3261 = vpop.f32.mrf.mxu0
        %v3262 = vadd.f32 %v3101, %v3261
        %v3263 = vpop.f32.mrf.mxu0
        %v3264 = vpop.f32.mrf.mxu0
        %v3265 = vadd.f32 %v3104, %v3264
        %v3266 = vpop.f32.mrf.mxu0
        %3267 = vmatprep.mubr.bf16.mxu0 %v2618
        %3268 = vmatmul.mubr.bf16.gmra.mxu0 %v2617
        %v3269 = vpop.f32.mrf.mxu0
        %v3270 = vadd.f32 %v3109, %v3269
        %v3271 = vpop.f32.mrf.mxu0
        %v3272 = vpop.f32.mrf.mxu0
        %v3273 = vadd.f32 %v3112, %v3272
        %v3274 = vpop.f32.mrf.mxu0
        %3275 = vmatprep.mubr.bf16.mxu0 %v2623
        %3276 = vmatmul.mubr.bf16.gmra.mxu0 %v2622
        %v3277 = vpop.f32.mrf.mxu0
        %v3278 = vadd.f32 %v3117, %v3277
        %v3279 = vpop.f32.mrf.mxu0
        %v3280 = vpop.f32.mrf.mxu0
        %v3281 = vadd.f32 %v3120, %v3280
        %v3282 = vpop.f32.mrf.mxu0
        %3283 = vmatprep.mubr.bf16.mxu0 %v2628
        %3284 = vmatmul.mubr.bf16.gmra.mxu0 %v2627
        %v3285 = vpop.f32.mrf.mxu0
        %v3286 = vadd.f32 %v3125, %v3285
        %v3287 = vpop.f32.mrf.mxu0
        %v3288 = vpop.f32.mrf.mxu0
        %v3289 = vadd.f32 %v3128, %v3288
        %v3290 = vpop.f32.mrf.mxu0
        %3291 = vmatprep.mubr.bf16.mxu0 %v2633
        %3292 = vmatmul.mubr.bf16.gmra.mxu0 %v2632
        %v3293 = vpop.f32.mrf.mxu0
        %v3294 = vadd.f32 %v3133, %v3293
        %v3295 = vpop.f32.mrf.mxu0
        %v3296 = vpop.f32.mrf.mxu0
        %v3297 = vadd.f32 %v3136, %v3296
        %v3298 = vpop.f32.mrf.mxu0
        %3299 = vdwg.mxu0
        %3300 = vmatprep.subr.bf16.mxu0 0
        %3301 = vmatpush1.bf16.msra.mxu0 0
        %3302 = vmatprep.subr.bf16.mxu0 0
        %3303 = vmatpush1.bf16.msra.mxu0 0
        %3304 = vmatprep.subr.bf16.mxu0 0
        %3305 = vmatpush1.bf16.msra.mxu0 0
        %3306 = vmatprep.subr.bf16.mxu0 0
        %3307 = vmatpush1.bf16.msra.mxu0 0
        %3308 = vmatprep.subr.bf16.mxu0 0
        %3309 = vmatpush1.bf16.msra.mxu0 %v2893
        %3310 = vmatprep.subr.bf16.mxu0 0
        %3311 = vmatpush1.bf16.msra.mxu0 %v2892
        %3312 = vmatprep.subr.bf16.mxu0 0
        %3313 = vmatpush1.bf16.msra.mxu0 %v2891
        %3314 = vmatprep.subr.bf16.mxu0 0
        %3315 = vmatpush1.bf16.msra.mxu0 %v2890
        %3316 = vmatprep.subr.bf16.mxu0 0
        %3317 = vmatpush2.bf16.msra.mxu0 0
        %3318 = vmatprep.subr.bf16.mxu0 0
        %3319 = vmatpush2.bf16.msra.mxu0 0
        %3320 = vmatprep.subr.bf16.mxu0 0
        %3321 = vmatpush2.bf16.msra.mxu0 0
        %3322 = vmatprep.subr.bf16.mxu0 0
        %3323 = vmatpush2.bf16.msra.mxu0 0
        %3324 = vmatprep.subr.bf16.mxu0 0
        %3325 = vmatpush2.bf16.msra.mxu0 0
        %3326 = vmatprep.subr.bf16.mxu0 0
        %3327 = vmatpush2.bf16.msra.mxu0 0
        %3328 = vmatprep.subr.bf16.mxu0 0
        %3329 = vmatpush2.bf16.msra.mxu0 0
        %3330 = vmatprep.subr.bf16.mxu0 0
        %3331 = vmatpush2.bf16.msra.mxu0 0
        %3332 = vmatprep.mubr.bf16.mxu0 0
        %3333 = vmatmul.mubr.bf16.gmra.mxu0 %v2931
        %v3334 = vpop.f32.mrf.mxu0
        %v3335 = vadd.f32 %v3174, %v3334
        %v3336 = vpop.f32.mrf.mxu0
        %v3337 = vpop.f32.mrf.mxu0
        %v3338 = vadd.f32 %v3177, %v3337
        %v3339 = vpop.f32.mrf.mxu0
        %3340 = vmatprep.mubr.bf16.mxu0 0
        %3341 = vmatmul.mubr.bf16.gmra.mxu0 %v2934
        %v3342 = vpop.f32.mrf.mxu0
        %v3343 = vadd.f32 %v3182, %v3342
        %v3344 = vpop.f32.mrf.mxu0
        %v3345 = vpop.f32.mrf.mxu0
        %v3346 = vadd.f32 %v3185, %v3345
        %v3347 = vpop.f32.mrf.mxu0
        %3348 = vmatprep.mubr.bf16.mxu0 0
        %3349 = vmatmul.mubr.bf16.gmra.mxu0 %v2937
        %v3350 = vpop.f32.mrf.mxu0
        %v3351 = vadd.f32 %v3190, %v3350
        %v3352 = vpop.f32.mrf.mxu0
        %v3353 = vpop.f32.mrf.mxu0
        %v3354 = vadd.f32 %v3193, %v3353
        %v3355 = vpop.f32.mrf.mxu0
        %3356 = vmatprep.mubr.bf16.mxu0 0
        %3357 = vmatmul.mubr.bf16.gmra.mxu0 %v2940
        %v3358 = vpop.f32.mrf.mxu0
        %v3359 = vadd.f32 %v3198, %v3358
        %v3360 = vpop.f32.mrf.mxu0
        %v3361 = vpop.f32.mrf.mxu0
        %v3362 = vadd.f32 %v3201, %v3361
        %v3363 = vpop.f32.mrf.mxu0
        %3364 = vmatprep.mubr.bf16.mxu0 0
        %3365 = vmatmul.mubr.bf16.gmra.mxu0 %v2943
        %v3366 = vpop.f32.mrf.mxu0
        %v3367 = vadd.f32 %v3206, %v3366
        %v3368 = vpop.f32.mrf.mxu0
        %v3369 = vpop.f32.mrf.mxu0
        %v3370 = vadd.f32 %v3209, %v3369
        %v3371 = vpop.f32.mrf.mxu0
        %3372 = vmatprep.mubr.bf16.mxu0 0
        %3373 = vmatmul.mubr.bf16.gmra.mxu0 %v2946
        %v3374 = vpop.f32.mrf.mxu0
        %v3375 = vadd.f32 %v3214, %v3374
        %v3376 = vpop.f32.mrf.mxu0
        %v3377 = vpop.f32.mrf.mxu0
        %v3378 = vadd.f32 %v3217, %v3377
        %v3379 = vpop.f32.mrf.mxu0
        %3380 = vmatprep.mubr.bf16.mxu0 0
        %3381 = vmatmul.mubr.bf16.gmra.mxu0 %v2949
        %v3382 = vpop.f32.mrf.mxu0
        %v3383 = vadd.f32 %v3222, %v3382
        %v3384 = vpop.f32.mrf.mxu0
        %v3385 = vpop.f32.mrf.mxu0
        %v3386 = vadd.f32 %v3225, %v3385
        %v3387 = vpop.f32.mrf.mxu0
        %3388 = vmatprep.mubr.bf16.mxu0 0
        %3389 = vmatmul.mubr.bf16.gmra.mxu0 %v2952
        %v3390 = vpop.f32.mrf.mxu0
        %v3391 = vadd.f32 %v3230, %v3390
        %v3392 = vpop.f32.mrf.mxu0
        %v3393 = vpop.f32.mrf.mxu0
        %v3394 = vadd.f32 %v3233, %v3393
        %v3395 = vpop.f32.mrf.mxu0
        %3396 = vmatprep.mubr.bf16.mxu0 0
        %3397 = vmatmul.mubr.bf16.gmra.mxu0 %v2955
        %v3398 = vpop.f32.mrf.mxu0
        %v3399 = vadd.f32 %v3238, %v3398
        %v3400 = vpop.f32.mrf.mxu0
        %v3401 = vpop.f32.mrf.mxu0
        %v3402 = vadd.f32 %v3241, %v3401
        %v3403 = vpop.f32.mrf.mxu0
        %3404 = vmatprep.mubr.bf16.mxu0 0
        %3405 = vmatmul.mubr.bf16.gmra.mxu0 %v2958
        %v3406 = vpop.f32.mrf.mxu0
        %v3407 = vadd.f32 %v3246, %v3406
        %v3408 = vpop.f32.mrf.mxu0
        %v3409 = vpop.f32.mrf.mxu0
        %v3410 = vadd.f32 %v3249, %v3409
        %v3411 = vpop.f32.mrf.mxu0
        %3412 = vmatprep.mubr.bf16.mxu0 0
        %3413 = vmatmul.mubr.bf16.gmra.mxu0 %v2961
        %v3414 = vpop.f32.mrf.mxu0
        %v3415 = vadd.f32 %v3254, %v3414
        %v3416 = vpop.f32.mrf.mxu0
        %v3417 = vpop.f32.mrf.mxu0
        %v3418 = vadd.f32 %v3257, %v3417
        %v3419 = vpop.f32.mrf.mxu0
        %3420 = vmatprep.mubr.bf16.mxu0 0
        %3421 = vmatmul.mubr.bf16.gmra.mxu0 %v2964
        %v3422 = vpop.f32.mrf.mxu0
        %v3423 = vadd.f32 %v3262, %v3422
        %v3424 = vpop.f32.mrf.mxu0
        %v3425 = vpop.f32.mrf.mxu0
        %v3426 = vadd.f32 %v3265, %v3425
        %v3427 = vpop.f32.mrf.mxu0
        %3428 = vmatprep.mubr.bf16.mxu0 0
        %3429 = vmatmul.mubr.bf16.gmra.mxu0 %v2967
        %v3430 = vpop.f32.mrf.mxu0
        %v3431 = vadd.f32 %v3270, %v3430
        %v3432 = vpop.f32.mrf.mxu0
        %v3433 = vpop.f32.mrf.mxu0
        %v3434 = vadd.f32 %v3273, %v3433
        %v3435 = vpop.f32.mrf.mxu0
        %3436 = vmatprep.mubr.bf16.mxu0 0
        %3437 = vmatmul.mubr.bf16.gmra.mxu0 %v2970
        %v3438 = vpop.f32.mrf.mxu0
        %v3439 = vadd.f32 %v3278, %v3438
        %v3440 = vpop.f32.mrf.mxu0
        %v3441 = vpop.f32.mrf.mxu0
        %v3442 = vadd.f32 %v3281, %v3441
        %v3443 = vpop.f32.mrf.mxu0
        %3444 = vmatprep.mubr.bf16.mxu0 0
        %3445 = vmatmul.mubr.bf16.gmra.mxu0 %v2973
        %v3446 = vpop.f32.mrf.mxu0
        %v3447 = vadd.f32 %v3286, %v3446
        %v3448 = vpop.f32.mrf.mxu0
        %v3449 = vpop.f32.mrf.mxu0
        %v3450 = vadd.f32 %v3289, %v3449
        %v3451 = vpop.f32.mrf.mxu0
        %3452 = vmatprep.mubr.bf16.mxu0 0
        %3453 = vmatmul.mubr.bf16.gmra.mxu0 %v2976
        %v3454 = vpop.f32.mrf.mxu0
        %v3455 = vadd.f32 %v3294, %v3454
        %v3456 = vpop.f32.mrf.mxu0
        %v3457 = vpop.f32.mrf.mxu0
        %v3458 = vadd.f32 %v3297, %v3457
        %v3459 = vpop.f32.mrf.mxu0
        %3460 = vdwg.mxu0
        %v3461 = vmax.f32 %v3335, 0.0
        %v3462 = vmax.f32 %v3338, 0.0
        %v3463 = vmax.f32 %v3343, 0.0
        %v3464 = vmax.f32 %v3346, 0.0
        %v3465 = vmax.f32 %v3351, 0.0
        %v3466 = vmax.f32 %v3354, 0.0
        %v3467 = vmax.f32 %v3359, 0.0
        %v3468 = vmax.f32 %v3362, 0.0
        %v3469 = vmax.f32 %v3367, 0.0
        %v3470 = vmax.f32 %v3370, 0.0
        %v3471 = vmax.f32 %v3375, 0.0
        %v3472 = vmax.f32 %v3378, 0.0
        %v3473 = vmax.f32 %v3383, 0.0
        %v3474 = vmax.f32 %v3386, 0.0
        %v3475 = vmax.f32 %v3391, 0.0
        %v3476 = vmax.f32 %v3394, 0.0
        %v3477 = vmax.f32 %v3399, 0.0
        %v3478 = vmax.f32 %v3402, 0.0
        %v3479 = vmax.f32 %v3407, 0.0
        %v3480 = vmax.f32 %v3410, 0.0
        %v3481 = vmax.f32 %v3415, 0.0
        %v3482 = vmax.f32 %v3418, 0.0
        %v3483 = vmax.f32 %v3423, 0.0
        %v3484 = vmax.f32 %v3426, 0.0
        %v3485 = vmax.f32 %v3431, 0.0
        %v3486 = vmax.f32 %v3434, 0.0
        %v3487 = vmax.f32 %v3439, 0.0
        %v3488 = vmax.f32 %v3442, 0.0
        %v3489 = vmax.f32 %v3447, 0.0
        %v3490 = vmax.f32 %v3450, 0.0
        %v3491 = vmax.f32 %v3455, 0.0
        %v3492 = vmax.f32 %v3458, 0.0
        %3525 = vrot.lane.b32.xlu0 %v3461, 96
        %v3526 = vpop.permute.xlu0 %3525
        %3527 = vrot.lane.b32.xlu0 %v3462, 96
        %v3528 = vpop.permute.xlu0 %3527
        %3529 = vrot.lane.b32.xlu0 %v3463, 96
        %v3530 = vpop.permute.xlu0 %3529
        %3531 = vrot.lane.b32.xlu0 %v3464, 96
        %v3532 = vpop.permute.xlu0 %3531
        %3533 = vrot.lane.b32.xlu0 %v3465, 96
        %v3534 = vpop.permute.xlu0 %3533
        %3535 = vrot.lane.b32.xlu0 %v3466, 96
        %v3536 = vpop.permute.xlu0 %3535
        %3537 = vrot.lane.b32.xlu0 %v3467, 96
        %v3538 = vpop.permute.xlu0 %3537
        %3539 = vrot.lane.b32.xlu0 %v3468, 96
        %v3540 = vpop.permute.xlu0 %3539
        %3541 = vrot.lane.b32.xlu0 %v3469, 96
        %v3542 = vpop.permute.xlu0 %3541
        %3543 = vrot.lane.b32.xlu0 %v3470, 96
        %v3544 = vpop.permute.xlu0 %3543
        %3545 = vrot.lane.b32.xlu0 %v3471, 96
        %v3546 = vpop.permute.xlu0 %3545
        %3547 = vrot.lane.b32.xlu0 %v3472, 96
        %v3548 = vpop.permute.xlu0 %3547
        %3549 = vrot.lane.b32.xlu0 %v3473, 96
        %v3550 = vpop.permute.xlu0 %3549
        %3551 = vrot.lane.b32.xlu0 %v3474, 96
        %v3552 = vpop.permute.xlu0 %3551
        %3553 = vrot.lane.b32.xlu0 %v3475, 96
        %v3554 = vpop.permute.xlu0 %3553
        %3555 = vrot.lane.b32.xlu0 %v3476, 96
        %v3556 = vpop.permute.xlu0 %3555
        %3557 = vrot.lane.b32.xlu0 %v3477, 96
        %v3558 = vpop.permute.xlu0 %3557
        %3559 = vrot.lane.b32.xlu0 %v3478, 96
        %v3560 = vpop.permute.xlu0 %3559
        %3561 = vrot.lane.b32.xlu0 %v3479, 96
        %v3562 = vpop.permute.xlu0 %3561
        %3563 = vrot.lane.b32.xlu0 %v3480, 96
        %v3564 = vpop.permute.xlu0 %3563
        %3565 = vrot.lane.b32.xlu0 %v3481, 96
        %v3566 = vpop.permute.xlu0 %3565
        %3567 = vrot.lane.b32.xlu0 %v3482, 96
        %v3568 = vpop.permute.xlu0 %3567
        %3569 = vrot.lane.b32.xlu0 %v3483, 96
        %v3570 = vpop.permute.xlu0 %3569
        %3571 = vrot.lane.b32.xlu0 %v3484, 96
        %v3572 = vpop.permute.xlu0 %3571
        %3573 = vrot.lane.b32.xlu0 %v3485, 96
        %v3574 = vpop.permute.xlu0 %3573
        %3575 = vrot.lane.b32.xlu0 %v3486, 96
        %v3576 = vpop.permute.xlu0 %3575
        %3577 = vrot.lane.b32.xlu0 %v3487, 96
        %v3578 = vpop.permute.xlu0 %3577
        %3579 = vrot.lane.b32.xlu0 %v3488, 96
        %v3580 = vpop.permute.xlu0 %3579
        %3581 = vrot.lane.b32.xlu0 %v3489, 96
        %v3582 = vpop.permute.xlu0 %3581
        %3583 = vrot.lane.b32.xlu0 %v3490, 96
        %v3584 = vpop.permute.xlu0 %3583
        %3585 = vrot.lane.b32.xlu0 %v3491, 96
        %v3586 = vpop.permute.xlu0 %3585
        %3587 = vrot.lane.b32.xlu0 %v3492, 96
        %v3588 = vpop.permute.xlu0 %3587
        %v3621 = vrot.slane %v3526, 7
        %v3622 = vrot.slane %v3528, 7
        %v3623 = vrot.slane %v3530, 7
        %v3624 = vrot.slane %v3532, 7
        %v3625 = vrot.slane %v3534, 7
        %v3626 = vrot.slane %v3536, 7
        %v3627 = vrot.slane %v3538, 7
        %v3628 = vrot.slane %v3540, 7
        %v3629 = vrot.slane %v3542, 7
        %v3630 = vrot.slane %v3544, 7
        %v3631 = vrot.slane %v3546, 7
        %v3632 = vrot.slane %v3548, 7
        %v3633 = vrot.slane %v3550, 7
        %v3634 = vrot.slane %v3552, 7
        %v3635 = vrot.slane %v3554, 7
        %v3636 = vrot.slane %v3556, 7
        %v3637 = vrot.slane %v3558, 7
        %v3638 = vrot.slane %v3560, 7
        %v3639 = vrot.slane %v3562, 7
        %v3640 = vrot.slane %v3564, 7
        %v3641 = vrot.slane %v3566, 7
        %v3642 = vrot.slane %v3568, 7
        %v3643 = vrot.slane %v3570, 7
        %v3644 = vrot.slane %v3572, 7
        %v3645 = vrot.slane %v3574, 7
        %v3646 = vrot.slane %v3576, 7
        %v3647 = vrot.slane %v3578, 7
        %v3648 = vrot.slane %v3580, 7
        %v3649 = vrot.slane %v3582, 7
        %v3650 = vrot.slane %v3584, 7
        %v3651 = vrot.slane %v3586, 7
        %v3652 = vrot.slane %v3588, 7
        %v3653 = vsel %vm1273, %v3651, %v3652
        %v3654 = vsel %vm1273, %v3650, %v3651
        %v3655 = vsel %vm1273, %v3649, %v3650
        %v3656 = vsel %vm1273, %v3648, %v3649
        %v3657 = vsel %vm1273, %v3647, %v3648
        %v3658 = vsel %vm1273, %v3646, %v3647
        %v3659 = vsel %vm1273, %v3645, %v3646
        %v3660 = vsel %vm1273, %v3644, %v3645
        %v3661 = vsel %vm1273, %v3643, %v3644
        %v3662 = vsel %vm1273, %v3642, %v3643
        %v3663 = vsel %vm1273, %v3641, %v3642
        %v3664 = vsel %vm1273, %v3640, %v3641
        %v3665 = vsel %vm1273, %v3639, %v3640
        %v3666 = vsel %vm1273, %v3638, %v3639
        %v3667 = vsel %vm1273, %v3637, %v3638
        %v3668 = vsel %vm1273, %v3636, %v3637
        %v3669 = vsel %vm1273, %v3635, %v3636
        %v3670 = vsel %vm1273, %v3634, %v3635
        %v3671 = vsel %vm1273, %v3633, %v3634
        %v3672 = vsel %vm1273, %v3632, %v3633
        %v3673 = vsel %vm1273, %v3631, %v3632
        %v3674 = vsel %vm1273, %v3630, %v3631
        %v3675 = vsel %vm1273, %v3629, %v3630
        %v3676 = vsel %vm1273, %v3628, %v3629
        %v3677 = vsel %vm1273, %v3627, %v3628
        %v3678 = vsel %vm1273, %v3626, %v3627
        %v3679 = vsel %vm1273, %v3625, %v3626
        %v3680 = vsel %vm1273, %v3624, %v3625
        %v3681 = vsel %vm1273, %v3623, %v3624
        %v3682 = vsel %vm1273, %v3622, %v3623
        %v3683 = vsel %vm1273, %v3621, %v3622
        %v3684 = vsel %vm1273, %v3652, %v3621
        %v3685 = vmul.f32 %v3684, %v1309
        %v3686 = vmul.f32 %v3683, %v1314
        %v3687 = vmul.f32 %v3682, %v1319
        %v3688 = vmul.f32 %v3681, %v1324
        %v3689 = vmul.f32 %v3680, %v1329
        %v3690 = vmul.f32 %v3679, %v1334
        %v3691 = vmul.f32 %v3678, %v1339
        %v3692 = vmul.f32 %v3677, %v1344
        %v3693 = vmul.f32 %v3676, %v1349
        %v3694 = vmul.f32 %v3675, %v1354
        %v3695 = vmul.f32 %v3674, %v1359
        %v3696 = vmul.f32 %v3673, %v1364
        %v3697 = vmul.f32 %v3672, %v1369
        %v3698 = vmul.f32 %v3671, %v1374
        %v3699 = vmul.f32 %v3670, %v1379
        %v3700 = vmul.f32 %v3669, %v1384
        %v3701 = vmul.f32 %v3668, %v1389
        %v3702 = vmul.f32 %v3667, %v1394
        %v3703 = vmul.f32 %v3666, %v1399
        %v3704 = vmul.f32 %v3665, %v1404
        %v3705 = vmul.f32 %v3664, %v1409
        %v3706 = vmul.f32 %v3663, %v1414
        %v3707 = vmul.f32 %v3662, %v1419
        %v3708 = vmul.f32 %v3661, %v1424
        %v3709 = vmul.f32 %v3660, %v1429
        %v3710 = vmul.f32 %v3659, %v1434
        %v3711 = vmul.f32 %v3658, %v1439
        %v3712 = vmul.f32 %v3657, %v1444
        %v3713 = vmul.f32 %v3656, %v1449
        %v3714 = vmul.f32 %v3655, %v1454
        %v3715 = vmul.f32 %v3654, %v1459
        %v3716 = vmul.f32 %v3653, %v1464
        %v3717 = vrot.slane %v3526, 1
        %v3718 = vrot.slane %v3528, 1
        %v3719 = vrot.slane %v3530, 1
        %v3720 = vrot.slane %v3532, 1
        %v3721 = vrot.slane %v3534, 1
        %v3722 = vrot.slane %v3536, 1
        %v3723 = vrot.slane %v3538, 1
        %v3724 = vrot.slane %v3540, 1
        %v3725 = vrot.slane %v3542, 1
        %v3726 = vrot.slane %v3544, 1
        %v3727 = vrot.slane %v3546, 1
        %v3728 = vrot.slane %v3548, 1
        %v3729 = vrot.slane %v3550, 1
        %v3730 = vrot.slane %v3552, 1
        %v3731 = vrot.slane %v3554, 1
        %v3732 = vrot.slane %v3556, 1
        %v3733 = vrot.slane %v3558, 1
        %v3734 = vrot.slane %v3560, 1
        %v3735 = vrot.slane %v3562, 1
        %v3736 = vrot.slane %v3564, 1
        %v3737 = vrot.slane %v3566, 1
        %v3738 = vrot.slane %v3568, 1
        %v3739 = vrot.slane %v3570, 1
        %v3740 = vrot.slane %v3572, 1
        %v3741 = vrot.slane %v3574, 1
        %v3742 = vrot.slane %v3576, 1
        %v3743 = vrot.slane %v3578, 1
        %v3744 = vrot.slane %v3580, 1
        %v3745 = vrot.slane %v3582, 1
        %v3746 = vrot.slane %v3584, 1
        %v3747 = vrot.slane %v3586, 1
        %v3748 = vrot.slane %v3588, 1
        %v3749 = vsel %vm1530, %v3747, %v3748
        %v3750 = vsel %vm1530, %v3746, %v3747
        %v3751 = vsel %vm1530, %v3745, %v3746
        %v3752 = vsel %vm1530, %v3744, %v3745
        %v3753 = vsel %vm1530, %v3743, %v3744
        %v3754 = vsel %vm1530, %v3742, %v3743
        %v3755 = vsel %vm1530, %v3741, %v3742
        %v3756 = vsel %vm1530, %v3740, %v3741
        %v3757 = vsel %vm1530, %v3739, %v3740
        %v3758 = vsel %vm1530, %v3738, %v3739
        %v3759 = vsel %vm1530, %v3737, %v3738
        %v3760 = vsel %vm1530, %v3736, %v3737
        %v3761 = vsel %vm1530, %v3735, %v3736
        %v3762 = vsel %vm1530, %v3734, %v3735
        %v3763 = vsel %vm1530, %v3733, %v3734
        %v3764 = vsel %vm1530, %v3732, %v3733
        %v3765 = vsel %vm1530, %v3731, %v3732
        %v3766 = vsel %vm1530, %v3730, %v3731
        %v3767 = vsel %vm1530, %v3729, %v3730
        %v3768 = vsel %vm1530, %v3728, %v3729
        %v3769 = vsel %vm1530, %v3727, %v3728
        %v3770 = vsel %vm1530, %v3726, %v3727
        %v3771 = vsel %vm1530, %v3725, %v3726
        %v3772 = vsel %vm1530, %v3724, %v3725
        %v3773 = vsel %vm1530, %v3723, %v3724
        %v3774 = vsel %vm1530, %v3722, %v3723
        %v3775 = vsel %vm1530, %v3721, %v3722
        %v3776 = vsel %vm1530, %v3720, %v3721
        %v3777 = vsel %vm1530, %v3719, %v3720
        %v3778 = vsel %vm1530, %v3718, %v3719
        %v3779 = vsel %vm1530, %v3717, %v3718
        %v3780 = vsel %vm1530, %v3748, %v3717
        %v3781 = vmul.f32 %v3779, %v1565
        %v3782 = vmul.f32 %v3778, %v1569
        %v3783 = vmul.f32 %v3777, %v1573
        %v3784 = vmul.f32 %v3776, %v1577
        %v3785 = vmul.f32 %v3775, %v1581
        %v3786 = vmul.f32 %v3774, %v1585
        %v3787 = vmul.f32 %v3773, %v1589
        %v3788 = vmul.f32 %v3772, %v1593
        %v3789 = vmul.f32 %v3771, %v1597
        %v3790 = vmul.f32 %v3770, %v1601
        %v3791 = vmul.f32 %v3769, %v1605
        %v3792 = vmul.f32 %v3768, %v1609
        %v3793 = vmul.f32 %v3767, %v1613
        %v3794 = vmul.f32 %v3766, %v1617
        %v3795 = vmul.f32 %v3765, %v1621
        %v3796 = vmul.f32 %v3764, %v1625
        %v3797 = vmul.f32 %v3763, %v1629
        %v3798 = vmul.f32 %v3762, %v1633
        %v3799 = vmul.f32 %v3761, %v1637
        %v3800 = vmul.f32 %v3760, %v1641
        %v3801 = vmul.f32 %v3759, %v1645
        %v3802 = vmul.f32 %v3758, %v1649
        %v3803 = vmul.f32 %v3757, %v1653
        %v3804 = vmul.f32 %v3756, %v1657
        %v3805 = vmul.f32 %v3755, %v1661
        %v3806 = vmul.f32 %v3754, %v1665
        %v3807 = vmul.f32 %v3753, %v1669
        %v3808 = vmul.f32 %v3752, %v1673
        %v3809 = vmul.f32 %v3751, %v1677
        %v3810 = vmul.f32 %v3750, %v1681
        %v3811 = vmul.f32 %v3749, %v1685
        %v3812 = vmul.f32 %v3780, %v1689
        %3813 = vrot.lane.b32.xlu0 %v3461, 16
        %v3814 = vpop.permute.xlu0 %3813
        %3815 = vrot.lane.b32.xlu0 %v3462, 16
        %v3816 = vpop.permute.xlu0 %3815
        %3817 = vrot.lane.b32.xlu0 %v3463, 16
        %v3818 = vpop.permute.xlu0 %3817
        %3819 = vrot.lane.b32.xlu0 %v3464, 16
        %v3820 = vpop.permute.xlu0 %3819
        %3821 = vrot.lane.b32.xlu0 %v3465, 16
        %v3822 = vpop.permute.xlu0 %3821
        %3823 = vrot.lane.b32.xlu0 %v3466, 16
        %v3824 = vpop.permute.xlu0 %3823
        %3825 = vrot.lane.b32.xlu0 %v3467, 16
        %v3826 = vpop.permute.xlu0 %3825
        %3827 = vrot.lane.b32.xlu0 %v3468, 16
        %v3828 = vpop.permute.xlu0 %3827
        %3829 = vrot.lane.b32.xlu0 %v3469, 16
        %v3830 = vpop.permute.xlu0 %3829
        %3831 = vrot.lane.b32.xlu0 %v3470, 16
        %v3832 = vpop.permute.xlu0 %3831
        %3833 = vrot.lane.b32.xlu0 %v3471, 16
        %v3834 = vpop.permute.xlu0 %3833
        %3835 = vrot.lane.b32.xlu0 %v3472, 16
        %v3836 = vpop.permute.xlu0 %3835
        %3837 = vrot.lane.b32.xlu0 %v3473, 16
        %v3838 = vpop.permute.xlu0 %3837
        %3839 = vrot.lane.b32.xlu0 %v3474, 16
        %v3840 = vpop.permute.xlu0 %3839
        %3841 = vrot.lane.b32.xlu0 %v3475, 16
        %v3842 = vpop.permute.xlu0 %3841
        %3843 = vrot.lane.b32.xlu0 %v3476, 16
        %v3844 = vpop.permute.xlu0 %3843
        %3845 = vrot.lane.b32.xlu0 %v3477, 16
        %v3846 = vpop.permute.xlu0 %3845
        %3847 = vrot.lane.b32.xlu0 %v3478, 16
        %v3848 = vpop.permute.xlu0 %3847
        %3849 = vrot.lane.b32.xlu0 %v3479, 16
        %v3850 = vpop.permute.xlu0 %3849
        %3851 = vrot.lane.b32.xlu0 %v3480, 16
        %v3852 = vpop.permute.xlu0 %3851
        %3853 = vrot.lane.b32.xlu0 %v3481, 16
        %v3854 = vpop.permute.xlu0 %3853
        %3855 = vrot.lane.b32.xlu0 %v3482, 16
        %v3856 = vpop.permute.xlu0 %3855
        %3857 = vrot.lane.b32.xlu0 %v3483, 16
        %v3858 = vpop.permute.xlu0 %3857
        %3859 = vrot.lane.b32.xlu0 %v3484, 16
        %v3860 = vpop.permute.xlu0 %3859
        %3861 = vrot.lane.b32.xlu0 %v3485, 16
        %v3862 = vpop.permute.xlu0 %3861
        %3863 = vrot.lane.b32.xlu0 %v3486, 16
        %v3864 = vpop.permute.xlu0 %3863
        %3865 = vrot.lane.b32.xlu0 %v3487, 16
        %v3866 = vpop.permute.xlu0 %3865
        %3867 = vrot.lane.b32.xlu0 %v3488, 16
        %v3868 = vpop.permute.xlu0 %3867
        %3869 = vrot.lane.b32.xlu0 %v3489, 16
        %v3870 = vpop.permute.xlu0 %3869
        %3871 = vrot.lane.b32.xlu0 %v3490, 16
        %v3872 = vpop.permute.xlu0 %3871
        %3873 = vrot.lane.b32.xlu0 %v3491, 16
        %v3874 = vpop.permute.xlu0 %3873
        %3875 = vrot.lane.b32.xlu0 %v3492, 16
        %v3876 = vpop.permute.xlu0 %3875
        %3941 = vrot.lane.b32.xlu0 %v3781, 96
        %v3942 = vpop.permute.xlu0 %3941
        %3943 = vrot.lane.b32.xlu0 %v3782, 96
        %v3944 = vpop.permute.xlu0 %3943
        %3945 = vrot.lane.b32.xlu0 %v3783, 96
        %v3946 = vpop.permute.xlu0 %3945
        %3947 = vrot.lane.b32.xlu0 %v3784, 96
        %v3948 = vpop.permute.xlu0 %3947
        %3949 = vrot.lane.b32.xlu0 %v3785, 96
        %v3950 = vpop.permute.xlu0 %3949
        %3951 = vrot.lane.b32.xlu0 %v3786, 96
        %v3952 = vpop.permute.xlu0 %3951
        %3953 = vrot.lane.b32.xlu0 %v3787, 96
        %v3954 = vpop.permute.xlu0 %3953
        %3955 = vrot.lane.b32.xlu0 %v3788, 96
        %v3956 = vpop.permute.xlu0 %3955
        %3957 = vrot.lane.b32.xlu0 %v3789, 96
        %v3958 = vpop.permute.xlu0 %3957
        %3959 = vrot.lane.b32.xlu0 %v3790, 96
        %v3960 = vpop.permute.xlu0 %3959
        %3961 = vrot.lane.b32.xlu0 %v3791, 96
        %v3962 = vpop.permute.xlu0 %3961
        %3963 = vrot.lane.b32.xlu0 %v3792, 96
        %v3964 = vpop.permute.xlu0 %3963
        %3965 = vrot.lane.b32.xlu0 %v3793, 96
        %v3966 = vpop.permute.xlu0 %3965
        %3967 = vrot.lane.b32.xlu0 %v3794, 96
        %v3968 = vpop.permute.xlu0 %3967
        %3969 = vrot.lane.b32.xlu0 %v3795, 96
        %v3970 = vpop.permute.xlu0 %3969
        %3971 = vrot.lane.b32.xlu0 %v3796, 96
        %v3972 = vpop.permute.xlu0 %3971
        %3973 = vrot.lane.b32.xlu0 %v3797, 96
        %v3974 = vpop.permute.xlu0 %3973
        %3975 = vrot.lane.b32.xlu0 %v3798, 96
        %v3976 = vpop.permute.xlu0 %3975
        %3977 = vrot.lane.b32.xlu0 %v3799, 96
        %v3978 = vpop.permute.xlu0 %3977
        %3979 = vrot.lane.b32.xlu0 %v3800, 96
        %v3980 = vpop.permute.xlu0 %3979
        %3981 = vrot.lane.b32.xlu0 %v3801, 96
        %v3982 = vpop.permute.xlu0 %3981
        %3983 = vrot.lane.b32.xlu0 %v3802, 96
        %v3984 = vpop.permute.xlu0 %3983
        %3985 = vrot.lane.b32.xlu0 %v3803, 96
        %v3986 = vpop.permute.xlu0 %3985
        %3987 = vrot.lane.b32.xlu0 %v3804, 96
        %v3988 = vpop.permute.xlu0 %3987
        %3989 = vrot.lane.b32.xlu0 %v3805, 96
        %v3990 = vpop.permute.xlu0 %3989
        %3991 = vrot.lane.b32.xlu0 %v3806, 96
        %v3992 = vpop.permute.xlu0 %3991
        %3993 = vrot.lane.b32.xlu0 %v3807, 96
        %v3994 = vpop.permute.xlu0 %3993
        %3995 = vrot.lane.b32.xlu0 %v3808, 96
        %v3996 = vpop.permute.xlu0 %3995
        %3997 = vrot.lane.b32.xlu0 %v3809, 96
        %v3998 = vpop.permute.xlu0 %3997
        %3999 = vrot.lane.b32.xlu0 %v3810, 96
        %v4000 = vpop.permute.xlu0 %3999
        %4001 = vrot.lane.b32.xlu0 %v3811, 96
        %v4002 = vpop.permute.xlu0 %4001
        %4003 = vrot.lane.b32.xlu0 %v3812, 96
        %v4004 = vpop.permute.xlu0 %4003
        %vm4037 = vcmask 392192
        %v4038 = vsel %vm4037, %v3685, %v3814
        %v4039 = vsel %vm4037, %v3686, %v3816
        %v4040 = vsel %vm4037, %v3687, %v3818
        %v4041 = vsel %vm4037, %v3688, %v3820
        %v4042 = vsel %vm4037, %v3689, %v3822
        %v4043 = vsel %vm4037, %v3690, %v3824
        %v4044 = vsel %vm4037, %v3691, %v3826
        %v4045 = vsel %vm4037, %v3692, %v3828
        %v4046 = vsel %vm4037, %v3693, %v3830
        %v4047 = vsel %vm4037, %v3694, %v3832
        %v4048 = vsel %vm4037, %v3695, %v3834
        %v4049 = vsel %vm4037, %v3696, %v3836
        %v4050 = vsel %vm4037, %v3697, %v3838
        %v4051 = vsel %vm4037, %v3698, %v3840
        %v4052 = vsel %vm4037, %v3699, %v3842
        %v4053 = vsel %vm4037, %v3700, %v3844
        %v4054 = vsel %vm4037, %v3701, %v3846
        %v4055 = vsel %vm4037, %v3702, %v3848
        %v4056 = vsel %vm4037, %v3703, %v3850
        %v4057 = vsel %vm4037, %v3704, %v3852
        %v4058 = vsel %vm4037, %v3705, %v3854
        %v4059 = vsel %vm4037, %v3706, %v3856
        %v4060 = vsel %vm4037, %v3707, %v3858
        %v4061 = vsel %vm4037, %v3708, %v3860
        %v4062 = vsel %vm4037, %v3709, %v3862
        %v4063 = vsel %vm4037, %v3710, %v3864
        %v4064 = vsel %vm4037, %v3711, %v3866
        %v4065 = vsel %vm4037, %v3712, %v3868
        %v4066 = vsel %vm4037, %v3713, %v3870
        %v4067 = vsel %vm4037, %v3714, %v3872
        %v4068 = vsel %vm4037, %v3715, %v3874
        %v4069 = vsel %vm4037, %v3716, %v3876
        %vm4070 = vcmask 785408
        %v4071 = vsel %vm4070, %v4038, %v3942
        %v4072 = vsel %vm4070, %v4039, %v3944
        %v4073 = vsel %vm4070, %v4040, %v3946
        %v4074 = vsel %vm4070, %v4041, %v3948
        %v4075 = vsel %vm4070, %v4042, %v3950
        %v4076 = vsel %vm4070, %v4043, %v3952
        %v4077 = vsel %vm4070, %v4044, %v3954
        %v4078 = vsel %vm4070, %v4045, %v3956
        %v4079 = vsel %vm4070, %v4046, %v3958
        %v4080 = vsel %vm4070, %v4047, %v3960
        %v4081 = vsel %vm4070, %v4048, %v3962
        %v4082 = vsel %vm4070, %v4049, %v3964
        %v4083 = vsel %vm4070, %v4050, %v3966
        %v4084 = vsel %vm4070, %v4051, %v3968
        %v4085 = vsel %vm4070, %v4052, %v3970
        %v4086 = vsel %vm4070, %v4053, %v3972
        %v4087 = vsel %vm4070, %v4054, %v3974
        %v4088 = vsel %vm4070, %v4055, %v3976
        %v4089 = vsel %vm4070, %v4056, %v3978
        %v4090 = vsel %vm4070, %v4057, %v3980
        %v4091 = vsel %vm4070, %v4058, %v3982
        %v4092 = vsel %vm4070, %v4059, %v3984
        %v4093 = vsel %vm4070, %v4060, %v3986
        %v4094 = vsel %vm4070, %v4061, %v3988
        %v4095 = vsel %vm4070, %v4062, %v3990
        %v4096 = vsel %vm4070, %v4063, %v3992
        %v4097 = vsel %vm4070, %v4064, %v3994
        %v4098 = vsel %vm4070, %v4065, %v3996
        %v4099 = vsel %vm4070, %v4066, %v3998
        %v4100 = vsel %vm4070, %v4067, %v4000
        %v4101 = vsel %vm4070, %v4068, %v4002
        %v4102 = vsel %vm4070, %v4069, %v4004
        %v4103 = vmul.f32 %v4102, %v1853
        %v4104 = vmul.f32 %v4004, %v1853
        %v4105 = vmul.f32 %v4071, %v1857
        %v4106 = vmul.f32 %v3942, %v1857
        %v4107 = vmul.f32 %v4072, %v1861
        %v4108 = vmul.f32 %v3944, %v1861
        %v4109 = vmul.f32 %v4073, %v1865
        %v4110 = vmul.f32 %v3946, %v1865
        %v4111 = vmul.f32 %v4074, %v1869
        %v4112 = vmul.f32 %v3948, %v1869
        %v4113 = vmul.f32 %v4075, %v1873
        %v4114 = vmul.f32 %v3950, %v1873
        %v4115 = vmul.f32 %v4076, %v1877
        %v4116 = vmul.f32 %v3952, %v1877
        %v4117 = vmul.f32 %v4077, %v1881
        %v4118 = vmul.f32 %v3954, %v1881
        %v4119 = vmul.f32 %v4078, %v1885
        %v4120 = vmul.f32 %v3956, %v1885
        %v4121 = vmul.f32 %v4079, %v1889
        %v4122 = vmul.f32 %v3958, %v1889
        %v4123 = vmul.f32 %v4080, %v1893
        %v4124 = vmul.f32 %v3960, %v1893
        %v4125 = vmul.f32 %v4081, %v1897
        %v4126 = vmul.f32 %v3962, %v1897
        %v4127 = vmul.f32 %v4082, %v1901
        %v4128 = vmul.f32 %v3964, %v1901
        %v4129 = vmul.f32 %v4083, %v1905
        %v4130 = vmul.f32 %v3966, %v1905
        %v4131 = vmul.f32 %v4084, %v1909
        %v4132 = vmul.f32 %v3968, %v1909
        %v4133 = vmul.f32 %v4085, %v1913
        %v4134 = vmul.f32 %v3970, %v1913
        %v4135 = vmul.f32 %v4086, %v1917
        %v4136 = vmul.f32 %v3972, %v1917
        %v4137 = vmul.f32 %v4087, %v1921
        %v4138 = vmul.f32 %v3974, %v1921
        %v4139 = vmul.f32 %v4088, %v1925
        %v4140 = vmul.f32 %v3976, %v1925
        %v4141 = vmul.f32 %v4089, %v1929
        %v4142 = vmul.f32 %v3978, %v1929
        %v4143 = vmul.f32 %v4090, %v1933
        %v4144 = vmul.f32 %v3980, %v1933
        %v4145 = vmul.f32 %v4091, %v1937
        %v4146 = vmul.f32 %v3982, %v1937
        %v4147 = vmul.f32 %v4092, %v1941
        %v4148 = vmul.f32 %v3984, %v1941
        %v4149 = vmul.f32 %v4093, %v1945
        %v4150 = vmul.f32 %v3986, %v1945
        %v4151 = vmul.f32 %v4094, %v1949
        %v4152 = vmul.f32 %v3988, %v1949
        %v4153 = vmul.f32 %v4095, %v1953
        %v4154 = vmul.f32 %v3990, %v1953
        %v4155 = vmul.f32 %v4096, %v1957
        %v4156 = vmul.f32 %v3992, %v1957
        %v4157 = vmul.f32 %v4097, %v1961
        %v4158 = vmul.f32 %v3994, %v1961
        %v4159 = vmul.f32 %v4098, %v1965
        %v4160 = vmul.f32 %v3996, %v1965
        %v4161 = vmul.f32 %v4099, %v1969
        %v4162 = vmul.f32 %v3998, %v1969
        %v4163 = vmul.f32 %v4100, %v1973
        %v4164 = vmul.f32 %v4000, %v1973
        %v4165 = vmul.f32 %v4101, %v1977
        %v4166 = vmul.f32 %v4002, %v1977
        %v4167 = vmul.f32 %v4072, %v2045
        %v4168 = vmul.f32 %v3944, %v2045
        %v4169 = vmul.f32 %v4073, %v2049
        %v4170 = vmul.f32 %v3946, %v2049
        %v4171 = vmul.f32 %v4074, %v2053
        %v4172 = vmul.f32 %v3948, %v2053
        %v4173 = vmul.f32 %v4075, %v2057
        %v4174 = vmul.f32 %v3950, %v2057
        %v4175 = vmul.f32 %v4076, %v2061
        %v4176 = vmul.f32 %v3952, %v2061
        %v4177 = vmul.f32 %v4077, %v2065
        %v4178 = vmul.f32 %v3954, %v2065
        %v4179 = vmul.f32 %v4078, %v2069
        %v4180 = vmul.f32 %v3956, %v2069
        %v4181 = vmul.f32 %v4079, %v2073
        %v4182 = vmul.f32 %v3958, %v2073
        %v4183 = vmul.f32 %v4080, %v2077
        %v4184 = vmul.f32 %v3960, %v2077
        %v4185 = vmul.f32 %v4081, %v2081
        %v4186 = vmul.f32 %v3962, %v2081
        %v4187 = vmul.f32 %v4082, %v2085
        %v4188 = vmul.f32 %v3964, %v2085
        %v4189 = vmul.f32 %v4083, %v2089
        %v4190 = vmul.f32 %v3966, %v2089
        %v4191 = vmul.f32 %v4084, %v2093
        %v4192 = vmul.f32 %v3968, %v2093
        %v4193 = vmul.f32 %v4085, %v2097
        %v4194 = vmul.f32 %v3970, %v2097
        %v4195 = vmul.f32 %v4086, %v2101
        %v4196 = vmul.f32 %v3972, %v2101
        %v4197 = vmul.f32 %v4087, %v2105
        %v4198 = vmul.f32 %v3974, %v2105
        %v4199 = vmul.f32 %v4088, %v2109
        %v4200 = vmul.f32 %v3976, %v2109
        %v4201 = vmul.f32 %v4089, %v2113
        %v4202 = vmul.f32 %v3978, %v2113
        %v4203 = vmul.f32 %v4090, %v2117
        %v4204 = vmul.f32 %v3980, %v2117
        %v4205 = vmul.f32 %v4091, %v2121
        %v4206 = vmul.f32 %v3982, %v2121
        %v4207 = vmul.f32 %v4092, %v2125
        %v4208 = vmul.f32 %v3984, %v2125
        %v4209 = vmul.f32 %v4093, %v2129
        %v4210 = vmul.f32 %v3986, %v2129
        %v4211 = vmul.f32 %v4094, %v2133
        %v4212 = vmul.f32 %v3988, %v2133
        %v4213 = vmul.f32 %v4095, %v2137
        %v4214 = vmul.f32 %v3990, %v2137
        %v4215 = vmul.f32 %v4096, %v2141
        %v4216 = vmul.f32 %v3992, %v2141
        %v4217 = vmul.f32 %v4097, %v2145
        %v4218 = vmul.f32 %v3994, %v2145
        %v4219 = vmul.f32 %v4098, %v2149
        %v4220 = vmul.f32 %v3996, %v2149
        %v4221 = vmul.f32 %v4099, %v2153
        %v4222 = vmul.f32 %v3998, %v2153
        %v4223 = vmul.f32 %v4100, %v2157
        %v4224 = vmul.f32 %v4000, %v2157
        %v4225 = vmul.f32 %v4101, %v2161
        %v4226 = vmul.f32 %v4002, %v2161
        %v4227 = vmul.f32 %v4102, %v2165
        %v4228 = vmul.f32 %v4004, %v2165
        %v4229 = vmul.f32 %v4071, %v2169
        %v4230 = vmul.f32 %v3942, %v2169
        %4263 = vrot.lane.b32.xlu0 %v4071, 16
        %v4264 = vpop.permute.xlu0 %4263
        %4265 = vrot.lane.b32.xlu0 %v3942, 16
        %v4266 = vpop.permute.xlu0 %4265
        %4267 = vrot.lane.b32.xlu0 %v4072, 16
        %v4268 = vpop.permute.xlu0 %4267
        %4269 = vrot.lane.b32.xlu0 %v3944, 16
        %v4270 = vpop.permute.xlu0 %4269
        %4271 = vrot.lane.b32.xlu0 %v4073, 16
        %v4272 = vpop.permute.xlu0 %4271
        %4273 = vrot.lane.b32.xlu0 %v3946, 16
        %v4274 = vpop.permute.xlu0 %4273
        %4275 = vrot.lane.b32.xlu0 %v4074, 16
        %v4276 = vpop.permute.xlu0 %4275
        %4277 = vrot.lane.b32.xlu0 %v3948, 16
        %v4278 = vpop.permute.xlu0 %4277
        %4279 = vrot.lane.b32.xlu0 %v4075, 16
        %v4280 = vpop.permute.xlu0 %4279
        %4281 = vrot.lane.b32.xlu0 %v3950, 16
        %v4282 = vpop.permute.xlu0 %4281
        %4283 = vrot.lane.b32.xlu0 %v4076, 16
        %v4284 = vpop.permute.xlu0 %4283
        %4285 = vrot.lane.b32.xlu0 %v3952, 16
        %v4286 = vpop.permute.xlu0 %4285
        %4287 = vrot.lane.b32.xlu0 %v4077, 16
        %v4288 = vpop.permute.xlu0 %4287
        %4289 = vrot.lane.b32.xlu0 %v3954, 16
        %v4290 = vpop.permute.xlu0 %4289
        %4291 = vrot.lane.b32.xlu0 %v4078, 16
        %v4292 = vpop.permute.xlu0 %4291
        %4293 = vrot.lane.b32.xlu0 %v3956, 16
        %v4294 = vpop.permute.xlu0 %4293
        %4295 = vrot.lane.b32.xlu0 %v4079, 16
        %v4296 = vpop.permute.xlu0 %4295
        %4297 = vrot.lane.b32.xlu0 %v3958, 16
        %v4298 = vpop.permute.xlu0 %4297
        %4299 = vrot.lane.b32.xlu0 %v4080, 16
        %v4300 = vpop.permute.xlu0 %4299
        %4301 = vrot.lane.b32.xlu0 %v3960, 16
        %v4302 = vpop.permute.xlu0 %4301
        %4303 = vrot.lane.b32.xlu0 %v4081, 16
        %v4304 = vpop.permute.xlu0 %4303
        %4305 = vrot.lane.b32.xlu0 %v3962, 16
        %v4306 = vpop.permute.xlu0 %4305
        %4307 = vrot.lane.b32.xlu0 %v4082, 16
        %v4308 = vpop.permute.xlu0 %4307
        %4309 = vrot.lane.b32.xlu0 %v3964, 16
        %v4310 = vpop.permute.xlu0 %4309
        %4311 = vrot.lane.b32.xlu0 %v4083, 16
        %v4312 = vpop.permute.xlu0 %4311
        %4313 = vrot.lane.b32.xlu0 %v3966, 16
        %v4314 = vpop.permute.xlu0 %4313
        %4315 = vrot.lane.b32.xlu0 %v4084, 16
        %v4316 = vpop.permute.xlu0 %4315
        %4317 = vrot.lane.b32.xlu0 %v3968, 16
        %v4318 = vpop.permute.xlu0 %4317
        %4319 = vrot.lane.b32.xlu0 %v4085, 16
        %v4320 = vpop.permute.xlu0 %4319
        %4321 = vrot.lane.b32.xlu0 %v3970, 16
        %v4322 = vpop.permute.xlu0 %4321
        %4323 = vrot.lane.b32.xlu0 %v4086, 16
        %v4324 = vpop.permute.xlu0 %4323
        %4325 = vrot.lane.b32.xlu0 %v3972, 16
        %v4326 = vpop.permute.xlu0 %4325
        %4327 = vrot.lane.b32.xlu0 %v4087, 16
        %v4328 = vpop.permute.xlu0 %4327
        %4329 = vrot.lane.b32.xlu0 %v3974, 16
        %v4330 = vpop.permute.xlu0 %4329
        %4331 = vrot.lane.b32.xlu0 %v4088, 16
        %v4332 = vpop.permute.xlu0 %4331
        %4333 = vrot.lane.b32.xlu0 %v3976, 16
        %v4334 = vpop.permute.xlu0 %4333
        %4335 = vrot.lane.b32.xlu0 %v4089, 16
        %v4336 = vpop.permute.xlu0 %4335
        %4337 = vrot.lane.b32.xlu0 %v3978, 16
        %v4338 = vpop.permute.xlu0 %4337
        %4339 = vrot.lane.b32.xlu0 %v4090, 16
        %v4340 = vpop.permute.xlu0 %4339
        %4341 = vrot.lane.b32.xlu0 %v3980, 16
        %v4342 = vpop.permute.xlu0 %4341
        %4343 = vrot.lane.b32.xlu0 %v4091, 16
        %v4344 = vpop.permute.xlu0 %4343
        %4345 = vrot.lane.b32.xlu0 %v3982, 16
        %v4346 = vpop.permute.xlu0 %4345
        %4347 = vrot.lane.b32.xlu0 %v4092, 16
        %v4348 = vpop.permute.xlu0 %4347
        %4349 = vrot.lane.b32.xlu0 %v3984, 16
        %v4350 = vpop.permute.xlu0 %4349
        %4351 = vrot.lane.b32.xlu0 %v4093, 16
        %v4352 = vpop.permute.xlu0 %4351
        %4353 = vrot.lane.b32.xlu0 %v3986, 16
        %v4354 = vpop.permute.xlu0 %4353
        %4355 = vrot.lane.b32.xlu0 %v4094, 16
        %v4356 = vpop.permute.xlu0 %4355
        %4357 = vrot.lane.b32.xlu0 %v3988, 16
        %v4358 = vpop.permute.xlu0 %4357
        %4359 = vrot.lane.b32.xlu0 %v4095, 16
        %v4360 = vpop.permute.xlu0 %4359
        %4361 = vrot.lane.b32.xlu0 %v3990, 16
        %v4362 = vpop.permute.xlu0 %4361
        %4363 = vrot.lane.b32.xlu0 %v4096, 16
        %v4364 = vpop.permute.xlu0 %4363
        %4365 = vrot.lane.b32.xlu0 %v3992, 16
        %v4366 = vpop.permute.xlu0 %4365
        %4367 = vrot.lane.b32.xlu0 %v4097, 16
        %v4368 = vpop.permute.xlu0 %4367
        %4369 = vrot.lane.b32.xlu0 %v3994, 16
        %v4370 = vpop.permute.xlu0 %4369
        %4371 = vrot.lane.b32.xlu0 %v4098, 16
        %v4372 = vpop.permute.xlu0 %4371
        %4373 = vrot.lane.b32.xlu0 %v3996, 16
        %v4374 = vpop.permute.xlu0 %4373
        %4375 = vrot.lane.b32.xlu0 %v4099, 16
        %v4376 = vpop.permute.xlu0 %4375
        %4377 = vrot.lane.b32.xlu0 %v3998, 16
        %v4378 = vpop.permute.xlu0 %4377
        %4379 = vrot.lane.b32.xlu0 %v4100, 16
        %v4380 = vpop.permute.xlu0 %4379
        %4381 = vrot.lane.b32.xlu0 %v4000, 16
        %v4382 = vpop.permute.xlu0 %4381
        %4383 = vrot.lane.b32.xlu0 %v4101, 16
        %v4384 = vpop.permute.xlu0 %4383
        %4385 = vrot.lane.b32.xlu0 %v4002, 16
        %v4386 = vpop.permute.xlu0 %4385
        %4387 = vrot.lane.b32.xlu0 %v4102, 16
        %v4388 = vpop.permute.xlu0 %4387
        %4389 = vrot.lane.b32.xlu0 %v4004, 16
        %v4390 = vpop.permute.xlu0 %4389
        %vm4391 = vcmask 130048
        %v4392 = vsel %vm4391, %v4264, %v4266
        %v4393 = vsel %vm4391, %v4268, %v4270
        %v4394 = vsel %vm4391, %v4272, %v4274
        %v4395 = vsel %vm4391, %v4276, %v4278
        %v4396 = vsel %vm4391, %v4280, %v4282
        %v4397 = vsel %vm4391, %v4284, %v4286
        %v4398 = vsel %vm4391, %v4288, %v4290
        %v4399 = vsel %vm4391, %v4292, %v4294
        %v4400 = vsel %vm4391, %v4296, %v4298
        %v4401 = vsel %vm4391, %v4300, %v4302
        %v4402 = vsel %vm4391, %v4304, %v4306
        %v4403 = vsel %vm4391, %v4308, %v4310
        %v4404 = vsel %vm4391, %v4312, %v4314
        %v4405 = vsel %vm4391, %v4316, %v4318
        %v4406 = vsel %vm4391, %v4320, %v4322
        %v4407 = vsel %vm4391, %v4324, %v4326
        %v4408 = vsel %vm4391, %v4328, %v4330
        %v4409 = vsel %vm4391, %v4332, %v4334
        %v4410 = vsel %vm4391, %v4336, %v4338
        %v4411 = vsel %vm4391, %v4340, %v4342
        %v4412 = vsel %vm4391, %v4344, %v4346
        %v4413 = vsel %vm4391, %v4348, %v4350
        %v4414 = vsel %vm4391, %v4352, %v4354
        %v4415 = vsel %vm4391, %v4356, %v4358
        %v4416 = vsel %vm4391, %v4360, %v4362
        %v4417 = vsel %vm4391, %v4364, %v4366
        %v4418 = vsel %vm4391, %v4368, %v4370
        %v4419 = vsel %vm4391, %v4372, %v4374
        %v4420 = vsel %vm4391, %v4376, %v4378
        %v4421 = vsel %vm4391, %v4380, %v4382
        %v4422 = vsel %vm4391, %v4384, %v4386
        %v4423 = vsel %vm4391, %v4388, %v4390
        %4552 = vrot.lane.b32.xlu0 %v4167, 32
        %v4553 = vpop.permute.xlu0 %4552
        %4554 = vrot.lane.b32.xlu0 %v4168, 32
        %v4555 = vpop.permute.xlu0 %4554
        %4556 = vrot.lane.b32.xlu0 %v4169, 32
        %v4557 = vpop.permute.xlu0 %4556
        %4558 = vrot.lane.b32.xlu0 %v4170, 32
        %v4559 = vpop.permute.xlu0 %4558
        %4560 = vrot.lane.b32.xlu0 %v4171, 32
        %v4561 = vpop.permute.xlu0 %4560
        %4562 = vrot.lane.b32.xlu0 %v4172, 32
        %v4563 = vpop.permute.xlu0 %4562
        %4564 = vrot.lane.b32.xlu0 %v4173, 32
        %v4565 = vpop.permute.xlu0 %4564
        %4566 = vrot.lane.b32.xlu0 %v4174, 32
        %v4567 = vpop.permute.xlu0 %4566
        %4568 = vrot.lane.b32.xlu0 %v4175, 32
        %v4569 = vpop.permute.xlu0 %4568
        %4570 = vrot.lane.b32.xlu0 %v4176, 32
        %v4571 = vpop.permute.xlu0 %4570
        %4572 = vrot.lane.b32.xlu0 %v4177, 32
        %v4573 = vpop.permute.xlu0 %4572
        %4574 = vrot.lane.b32.xlu0 %v4178, 32
        %v4575 = vpop.permute.xlu0 %4574
        %4576 = vrot.lane.b32.xlu0 %v4179, 32
        %v4577 = vpop.permute.xlu0 %4576
        %4578 = vrot.lane.b32.xlu0 %v4180, 32
        %v4579 = vpop.permute.xlu0 %4578
        %4580 = vrot.lane.b32.xlu0 %v4181, 32
        %v4581 = vpop.permute.xlu0 %4580
        %4582 = vrot.lane.b32.xlu0 %v4182, 32
        %v4583 = vpop.permute.xlu0 %4582
        %4584 = vrot.lane.b32.xlu0 %v4183, 32
        %v4585 = vpop.permute.xlu0 %4584
        %4586 = vrot.lane.b32.xlu0 %v4184, 32
        %v4587 = vpop.permute.xlu0 %4586
        %4588 = vrot.lane.b32.xlu0 %v4185, 32
        %v4589 = vpop.permute.xlu0 %4588
        %4590 = vrot.lane.b32.xlu0 %v4186, 32
        %v4591 = vpop.permute.xlu0 %4590
        %4592 = vrot.lane.b32.xlu0 %v4187, 32
        %v4593 = vpop.permute.xlu0 %4592
        %4594 = vrot.lane.b32.xlu0 %v4188, 32
        %v4595 = vpop.permute.xlu0 %4594
        %4596 = vrot.lane.b32.xlu0 %v4189, 32
        %v4597 = vpop.permute.xlu0 %4596
        %4598 = vrot.lane.b32.xlu0 %v4190, 32
        %v4599 = vpop.permute.xlu0 %4598
        %4600 = vrot.lane.b32.xlu0 %v4191, 32
        %v4601 = vpop.permute.xlu0 %4600
        %4602 = vrot.lane.b32.xlu0 %v4192, 32
        %v4603 = vpop.permute.xlu0 %4602
        %4604 = vrot.lane.b32.xlu0 %v4193, 32
        %v4605 = vpop.permute.xlu0 %4604
        %4606 = vrot.lane.b32.xlu0 %v4194, 32
        %v4607 = vpop.permute.xlu0 %4606
        %4608 = vrot.lane.b32.xlu0 %v4195, 32
        %v4609 = vpop.permute.xlu0 %4608
        %4610 = vrot.lane.b32.xlu0 %v4196, 32
        %v4611 = vpop.permute.xlu0 %4610
        %4612 = vrot.lane.b32.xlu0 %v4197, 32
        %v4613 = vpop.permute.xlu0 %4612
        %4614 = vrot.lane.b32.xlu0 %v4198, 32
        %v4615 = vpop.permute.xlu0 %4614
        %4616 = vrot.lane.b32.xlu0 %v4199, 32
        %v4617 = vpop.permute.xlu0 %4616
        %4618 = vrot.lane.b32.xlu0 %v4200, 32
        %v4619 = vpop.permute.xlu0 %4618
        %4620 = vrot.lane.b32.xlu0 %v4201, 32
        %v4621 = vpop.permute.xlu0 %4620
        %4622 = vrot.lane.b32.xlu0 %v4202, 32
        %v4623 = vpop.permute.xlu0 %4622
        %4624 = vrot.lane.b32.xlu0 %v4203, 32
        %v4625 = vpop.permute.xlu0 %4624
        %4626 = vrot.lane.b32.xlu0 %v4204, 32
        %v4627 = vpop.permute.xlu0 %4626
        %4628 = vrot.lane.b32.xlu0 %v4205, 32
        %v4629 = vpop.permute.xlu0 %4628
        %4630 = vrot.lane.b32.xlu0 %v4206, 32
        %v4631 = vpop.permute.xlu0 %4630
        %4632 = vrot.lane.b32.xlu0 %v4207, 32
        %v4633 = vpop.permute.xlu0 %4632
        %4634 = vrot.lane.b32.xlu0 %v4208, 32
        %v4635 = vpop.permute.xlu0 %4634
        %4636 = vrot.lane.b32.xlu0 %v4209, 32
        %v4637 = vpop.permute.xlu0 %4636
        %4638 = vrot.lane.b32.xlu0 %v4210, 32
        %v4639 = vpop.permute.xlu0 %4638
        %4640 = vrot.lane.b32.xlu0 %v4211, 32
        %v4641 = vpop.permute.xlu0 %4640
        %4642 = vrot.lane.b32.xlu0 %v4212, 32
        %v4643 = vpop.permute.xlu0 %4642
        %4644 = vrot.lane.b32.xlu0 %v4213, 32
        %v4645 = vpop.permute.xlu0 %4644
        %4646 = vrot.lane.b32.xlu0 %v4214, 32
        %v4647 = vpop.permute.xlu0 %4646
        %4648 = vrot.lane.b32.xlu0 %v4215, 32
        %v4649 = vpop.permute.xlu0 %4648
        %4650 = vrot.lane.b32.xlu0 %v4216, 32
        %v4651 = vpop.permute.xlu0 %4650
        %4652 = vrot.lane.b32.xlu0 %v4217, 32
        %v4653 = vpop.permute.xlu0 %4652
        %4654 = vrot.lane.b32.xlu0 %v4218, 32
        %v4655 = vpop.permute.xlu0 %4654
        %4656 = vrot.lane.b32.xlu0 %v4219, 32
        %v4657 = vpop.permute.xlu0 %4656
        %4658 = vrot.lane.b32.xlu0 %v4220, 32
        %v4659 = vpop.permute.xlu0 %4658
        %4660 = vrot.lane.b32.xlu0 %v4221, 32
        %v4661 = vpop.permute.xlu0 %4660
        %4662 = vrot.lane.b32.xlu0 %v4222, 32
        %v4663 = vpop.permute.xlu0 %4662
        %4664 = vrot.lane.b32.xlu0 %v4223, 32
        %v4665 = vpop.permute.xlu0 %4664
        %4666 = vrot.lane.b32.xlu0 %v4224, 32
        %v4667 = vpop.permute.xlu0 %4666
        %4668 = vrot.lane.b32.xlu0 %v4225, 32
        %v4669 = vpop.permute.xlu0 %4668
        %4670 = vrot.lane.b32.xlu0 %v4226, 32
        %v4671 = vpop.permute.xlu0 %4670
        %4672 = vrot.lane.b32.xlu0 %v4227, 32
        %v4673 = vpop.permute.xlu0 %4672
        %4674 = vrot.lane.b32.xlu0 %v4228, 32
        %v4675 = vpop.permute.xlu0 %4674
        %4676 = vrot.lane.b32.xlu0 %v4229, 32
        %v4677 = vpop.permute.xlu0 %4676
        %4678 = vrot.lane.b32.xlu0 %v4230, 32
        %v4679 = vpop.permute.xlu0 %4678
        %vm4680 = vcmask 261120
        %v4681 = vsel %vm4680, %v4553, %v4555
        %v4682 = vsel %vm4680, %v4557, %v4559
        %v4683 = vsel %vm4680, %v4561, %v4563
        %v4684 = vsel %vm4680, %v4565, %v4567
        %v4685 = vsel %vm4680, %v4569, %v4571
        %v4686 = vsel %vm4680, %v4573, %v4575
        %v4687 = vsel %vm4680, %v4577, %v4579
        %v4688 = vsel %vm4680, %v4581, %v4583
        %v4689 = vsel %vm4680, %v4585, %v4587
        %v4690 = vsel %vm4680, %v4589, %v4591
        %v4691 = vsel %vm4680, %v4593, %v4595
        %v4692 = vsel %vm4680, %v4597, %v4599
        %v4693 = vsel %vm4680, %v4601, %v4603
        %v4694 = vsel %vm4680, %v4605, %v4607
        %v4695 = vsel %vm4680, %v4609, %v4611
        %v4696 = vsel %vm4680, %v4613, %v4615
        %v4697 = vsel %vm4680, %v4617, %v4619
        %v4698 = vsel %vm4680, %v4621, %v4623
        %v4699 = vsel %vm4680, %v4625, %v4627
        %v4700 = vsel %vm4680, %v4629, %v4631
        %v4701 = vsel %vm4680, %v4633, %v4635
        %v4702 = vsel %vm4680, %v4637, %v4639
        %v4703 = vsel %vm4680, %v4641, %v4643
        %v4704 = vsel %vm4680, %v4645, %v4647
        %v4705 = vsel %vm4680, %v4649, %v4651
        %v4706 = vsel %vm4680, %v4653, %v4655
        %v4707 = vsel %vm4680, %v4657, %v4659
        %v4708 = vsel %vm4680, %v4661, %v4663
        %v4709 = vsel %vm4680, %v4665, %v4667
        %v4710 = vsel %vm4680, %v4669, %v4671
        %v4711 = vsel %vm4680, %v4673, %v4675
        %v4712 = vsel %vm4680, %v4677, %v4679
        %v4777 = vsel %vm4391, %v4104, %v4264
        %v4778 = vsel %vm4391, %v4106, %v4268
        %v4779 = vsel %vm4391, %v4108, %v4272
        %v4780 = vsel %vm4391, %v4110, %v4276
        %v4781 = vsel %vm4391, %v4112, %v4280
        %v4782 = vsel %vm4391, %v4114, %v4284
        %v4783 = vsel %vm4391, %v4116, %v4288
        %v4784 = vsel %vm4391, %v4118, %v4292
        %v4785 = vsel %vm4391, %v4120, %v4296
        %v4786 = vsel %vm4391, %v4122, %v4300
        %v4787 = vsel %vm4391, %v4124, %v4304
        %v4788 = vsel %vm4391, %v4126, %v4308
        %v4789 = vsel %vm4391, %v4128, %v4312
        %v4790 = vsel %vm4391, %v4130, %v4316
        %v4791 = vsel %vm4391, %v4132, %v4320
        %v4792 = vsel %vm4391, %v4134, %v4324
        %v4793 = vsel %vm4391, %v4136, %v4328
        %v4794 = vsel %vm4391, %v4138, %v4332
        %v4795 = vsel %vm4391, %v4140, %v4336
        %v4796 = vsel %vm4391, %v4142, %v4340
        %v4797 = vsel %vm4391, %v4144, %v4344
        %v4798 = vsel %vm4391, %v4146, %v4348
        %v4799 = vsel %vm4391, %v4148, %v4352
        %v4800 = vsel %vm4391, %v4150, %v4356
        %v4801 = vsel %vm4391, %v4152, %v4360
        %v4802 = vsel %vm4391, %v4154, %v4364
        %v4803 = vsel %vm4391, %v4156, %v4368
        %v4804 = vsel %vm4391, %v4158, %v4372
        %v4805 = vsel %vm4391, %v4160, %v4376
        %v4806 = vsel %vm4391, %v4162, %v4380
        %v4807 = vsel %vm4391, %v4164, %v4384
        %v4808 = vsel %vm4391, %v4166, %v4388
        %v4809 = vsel %vm4680, %v4392, %v4553
        %v4810 = vsel %vm4680, %v4393, %v4557
        %v4811 = vsel %vm4680, %v4394, %v4561
        %v4812 = vsel %vm4680, %v4395, %v4565
        %v4813 = vsel %vm4680, %v4396, %v4569
        %v4814 = vsel %vm4680, %v4397, %v4573
        %v4815 = vsel %vm4680, %v4398, %v4577
        %v4816 = vsel %vm4680, %v4399, %v4581
        %v4817 = vsel %vm4680, %v4400, %v4585
        %v4818 = vsel %vm4680, %v4401, %v4589
        %v4819 = vsel %vm4680, %v4402, %v4593
        %v4820 = vsel %vm4680, %v4403, %v4597
        %v4821 = vsel %vm4680, %v4404, %v4601
        %v4822 = vsel %vm4680, %v4405, %v4605
        %v4823 = vsel %vm4680, %v4406, %v4609
        %v4824 = vsel %vm4680, %v4407, %v4613
        %v4825 = vsel %vm4680, %v4408, %v4617
        %v4826 = vsel %vm4680, %v4409, %v4621
        %v4827 = vsel %vm4680, %v4410, %v4625
        %v4828 = vsel %vm4680, %v4411, %v4629
        %v4829 = vsel %vm4680, %v4412, %v4633
        %v4830 = vsel %vm4680, %v4413, %v4637
        %v4831 = vsel %vm4680, %v4414, %v4641
        %v4832 = vsel %vm4680, %v4415, %v4645
        %v4833 = vsel %vm4680, %v4416, %v4649
        %v4834 = vsel %vm4680, %v4417, %v4653
        %v4835 = vsel %vm4680, %v4418, %v4657
        %v4836 = vsel %vm4680, %v4419, %v4661
        %v4837 = vsel %vm4680, %v4420, %v4665
        %v4838 = vsel %vm4680, %v4421, %v4669
        %v4839 = vsel %vm4680, %v4422, %v4673
        %v4840 = vsel %vm4680, %v4423, %v4677
        %v4841 = vpack.c.bf16 %v4105, %v4103
        %v4842 = vpack.c.bf16 %v4778, %v4777
        %v4843 = vpack.c.bf16 %v4810, %v4809
        %v4844 = vpack.c.bf16 %v4682, %v4681
        %v4845 = vpack.c.bf16 %v4109, %v4107
        %v4846 = vpack.c.bf16 %v4780, %v4779
        %v4847 = vpack.c.bf16 %v4812, %v4811
        %v4848 = vpack.c.bf16 %v4684, %v4683
        %v4849 = vpack.c.bf16 %v4113, %v4111
        %v4850 = vpack.c.bf16 %v4782, %v4781
        %v4851 = vpack.c.bf16 %v4814, %v4813
        %v4852 = vpack.c.bf16 %v4686, %v4685
        %v4853 = vpack.c.bf16 %v4117, %v4115
        %v4854 = vpack.c.bf16 %v4784, %v4783
        %v4855 = vpack.c.bf16 %v4816, %v4815
        %v4856 = vpack.c.bf16 %v4688, %v4687
        %v4857 = vpack.c.bf16 %v4121, %v4119
        %v4858 = vpack.c.bf16 %v4786, %v4785
        %v4859 = vpack.c.bf16 %v4818, %v4817
        %v4860 = vpack.c.bf16 %v4690, %v4689
        %v4861 = vpack.c.bf16 %v4125, %v4123
        %v4862 = vpack.c.bf16 %v4788, %v4787
        %v4863 = vpack.c.bf16 %v4820, %v4819
        %v4864 = vpack.c.bf16 %v4692, %v4691
        %v4865 = vpack.c.bf16 %v4129, %v4127
        %v4866 = vpack.c.bf16 %v4790, %v4789
        %v4867 = vpack.c.bf16 %v4822, %v4821
        %v4868 = vpack.c.bf16 %v4694, %v4693
        %v4869 = vpack.c.bf16 %v4133, %v4131
        %v4870 = vpack.c.bf16 %v4792, %v4791
        %v4871 = vpack.c.bf16 %v4824, %v4823
        %v4872 = vpack.c.bf16 %v4696, %v4695
        %v4873 = vpack.c.bf16 %v4137, %v4135
        %v4874 = vpack.c.bf16 %v4794, %v4793
        %v4875 = vpack.c.bf16 %v4826, %v4825
        %v4876 = vpack.c.bf16 %v4698, %v4697
        %v4877 = vpack.c.bf16 %v4141, %v4139
        %v4878 = vpack.c.bf16 %v4796, %v4795
        %v4879 = vpack.c.bf16 %v4828, %v4827
        %v4880 = vpack.c.bf16 %v4700, %v4699
        %v4881 = vpack.c.bf16 %v4145, %v4143
        %v4882 = vpack.c.bf16 %v4798, %v4797
        %v4883 = vpack.c.bf16 %v4830, %v4829
        %v4884 = vpack.c.bf16 %v4702, %v4701
        %v4885 = vpack.c.bf16 %v4149, %v4147
        %v4886 = vpack.c.bf16 %v4800, %v4799
        %v4887 = vpack.c.bf16 %v4832, %v4831
        %v4888 = vpack.c.bf16 %v4704, %v4703
        %v4889 = vpack.c.bf16 %v4153, %v4151
        %v4890 = vpack.c.bf16 %v4802, %v4801
        %v4891 = vpack.c.bf16 %v4834, %v4833
        %v4892 = vpack.c.bf16 %v4706, %v4705
        %v4893 = vpack.c.bf16 %v4157, %v4155
        %v4894 = vpack.c.bf16 %v4804, %v4803
        %v4895 = vpack.c.bf16 %v4836, %v4835
        %v4896 = vpack.c.bf16 %v4708, %v4707
        %v4897 = vpack.c.bf16 %v4161, %v4159
        %v4898 = vpack.c.bf16 %v4806, %v4805
        %v4899 = vpack.c.bf16 %v4838, %v4837
        %v4900 = vpack.c.bf16 %v4710, %v4709
        %v4901 = vpack.c.bf16 %v4165, %v4163
        %v4902 = vpack.c.bf16 %v4808, %v4807
        %v4903 = vpack.c.bf16 %v4840, %v4839
        %v4904 = vpack.c.bf16 %v4712, %v4711
        %v4905 = vld [vmem:[%s6] sm:$0xf]
        %v4906 = vld [vmem:[%s6 + $0x4] sm:$0xf]
        %v4907 = vld [vmem:[%s6 + $0x8] sm:$0xf]
        %v4908 = vld [vmem:[%s6 + $0xc] sm:$0xf]
        %v4909 = vld [vmem:[%s6 + $0x10] sm:$0xf]
        %v4910 = vld [vmem:[%s6 + $0x14] sm:$0xf]
        %v4911 = vld [vmem:[%s6 + $0x18] sm:$0xf]
        %v4912 = vld [vmem:[%s6 + $0x1c] sm:$0xf]
        %v4913 = vld [vmem:[%s6 + $0x20] sm:$0xf]
        %v4914 = vld [vmem:[%s6 + $0x24] sm:$0xf]
        %v4915 = vld [vmem:[%s6 + $0x28] sm:$0xf]
        %v4916 = vld [vmem:[%s6 + $0x2c] sm:$0xf]
        %v4917 = vld [vmem:[%s6 + $0x30] sm:$0xf]
        %v4918 = vld [vmem:[%s6 + $0x34] sm:$0xf]
        %v4919 = vld [vmem:[%s6 + $0x38] sm:$0xf]
        %v4920 = vld [vmem:[%s6 + $0x3c] sm:$0xf]
        %v4921 = vld [vmem:[%s6 + $0x40] sm:$0xf]
        %v4922 = vld [vmem:[%s6 + $0x44] sm:$0xf]
        %v4923 = vld [vmem:[%s6 + $0x48] sm:$0xf]
        %v4924 = vld [vmem:[%s6 + $0x4c] sm:$0xf]
        %v4925 = vld [vmem:[%s6 + $0x50] sm:$0xf]
        %v4926 = vld [vmem:[%s6 + $0x54] sm:$0xf]
        %v4927 = vld [vmem:[%s6 + $0x58] sm:$0xf]
        %v4928 = vld [vmem:[%s6 + $0x5c] sm:$0xf]
        %v4929 = vld [vmem:[%s6 + $0x60] sm:$0xf]
        %v4930 = vld [vmem:[%s6 + $0x64] sm:$0xf]
        %v4931 = vld [vmem:[%s6 + $0x68] sm:$0xf]
        %v4932 = vld [vmem:[%s6 + $0x6c] sm:$0xf]
        %v4933 = vld [vmem:[%s6 + $0x70] sm:$0xf]
        %v4934 = vld [vmem:[%s6 + $0x74] sm:$0xf]
        %v4935 = vld [vmem:[%s6 + $0x78] sm:$0xf]
        %v4936 = vld [vmem:[%s6 + $0x7c] sm:$0xf]
        %v4937 = vld [vmem:[%s6 + $0x80] sm:$0xf]
        %v4938 = vld [vmem:[%s6 + $0x84] sm:$0xf]
        %v4939 = vld [vmem:[%s6 + $0x88] sm:$0xf]
        %v4940 = vld [vmem:[%s6 + $0x8c] sm:$0xf]
        %v4941 = vld [vmem:[%s6 + $0x90] sm:$0xf]
        %v4942 = vld [vmem:[%s6 + $0x94] sm:$0xf]
        %v4943 = vld [vmem:[%s6 + $0x98] sm:$0xf]
        %v4944 = vld [vmem:[%s6 + $0x9c] sm:$0xf]
        %v4945 = vld [vmem:[%s6 + $0xa0] sm:$0xf]
        %v4946 = vld [vmem:[%s6 + $0xa4] sm:$0xf]
        %v4947 = vld [vmem:[%s6 + $0xa8] sm:$0xf]
        %v4948 = vld [vmem:[%s6 + $0xac] sm:$0xf]
        %v4949 = vld [vmem:[%s6 + $0xb0] sm:$0xf]
        %v4950 = vld [vmem:[%s6 + $0xb4] sm:$0xf]
        %v4951 = vld [vmem:[%s6 + $0xb8] sm:$0xf]
        %v4952 = vld [vmem:[%s6 + $0xbc] sm:$0xf]
        %v4953 = vld [vmem:[%s6 + $0xc0] sm:$0xf]
        %v4954 = vld [vmem:[%s6 + $0xc4] sm:$0xf]
        %v4955 = vld [vmem:[%s6 + $0xc8] sm:$0xf]
        %v4956 = vld [vmem:[%s6 + $0xcc] sm:$0xf]
        %v4957 = vld [vmem:[%s6 + $0xd0] sm:$0xf]
        %v4958 = vld [vmem:[%s6 + $0xd4] sm:$0xf]
        %v4959 = vld [vmem:[%s7] sm:$0x1]
        %v4961 = vlaneseq
        %v4962 = vshrl.u32 %v4961, 7
        %v4963 = vsub.s32 0, %v4962
        %v4964 = vrot.slane %v4959, %v4963
        %v5020 = vunpack.c.l.b16 %v4905
        %v5021 = vunpack.c.l.b16 %v4906
        %v5022 = vunpack.c.l.b16 %v4907
        %v5023 = vunpack.c.l.b16 %v4908
        %v5024 = vunpack.c.l.b16 %v4909
        %v5025 = vunpack.c.l.b16 %v4910
        %v5026 = vunpack.c.l.b16 %v4911
        %v5027 = vunpack.c.l.b16 %v4912
        %v5028 = vunpack.c.l.b16 %v4913
        %v5029 = vunpack.c.l.b16 %v4914
        %v5030 = vunpack.c.l.b16 %v4915
        %v5031 = vunpack.c.l.b16 %v4916
        %v5032 = vunpack.c.l.b16 %v4917
        %v5033 = vunpack.c.l.b16 %v4918
        %v5034 = vunpack.c.l.b16 %v4919
        %v5035 = vunpack.c.l.b16 %v4920
        %v5036 = vunpack.c.l.b16 %v4921
        %v5037 = vunpack.c.l.b16 %v4922
        %v5038 = vunpack.c.l.b16 %v4923
        %v5039 = vunpack.c.l.b16 %v4924
        %v5040 = vunpack.c.l.b16 %v4925
        %v5041 = vunpack.c.l.b16 %v4926
        %v5042 = vunpack.c.l.b16 %v4927
        %v5043 = vunpack.c.l.b16 %v4928
        %v5044 = vunpack.c.l.b16 %v4929
        %v5045 = vunpack.c.l.b16 %v4930
        %v5046 = vunpack.c.l.b16 %v4931
        %v5047 = vunpack.c.l.b16 %v4932
        %v5048 = vunpack.c.l.b16 %v4933
        %v5049 = vunpack.c.l.b16 %v4934
        %v5050 = vunpack.c.l.b16 %v4935
        %v5051 = vunpack.c.l.b16 %v4936
        %v5052 = vunpack.c.l.b16 %v4937
        %v5053 = vunpack.c.l.b16 %v4938
        %v5054 = vunpack.c.l.b16 %v4939
        %v5055 = vunpack.c.l.b16 %v4940
        %v5056 = vunpack.c.l.b16 %v4941
        %v5057 = vunpack.c.l.b16 %v4942
        %v5058 = vunpack.c.l.b16 %v4943
        %v5059 = vunpack.c.l.b16 %v4944
        %v5060 = vunpack.c.l.b16 %v4945
        %v5061 = vunpack.c.l.b16 %v4946
        %v5062 = vunpack.c.l.b16 %v4947
        %v5063 = vunpack.c.l.b16 %v4948
        %v5064 = vunpack.c.l.b16 %v4949
        %v5065 = vunpack.c.l.b16 %v4950
        %v5066 = vunpack.c.l.b16 %v4951
        %v5067 = vunpack.c.l.b16 %v4952
        %v5068 = vunpack.c.l.b16 %v4953
        %v5069 = vunpack.c.l.b16 %v4954
        %v5070 = vunpack.c.l.b16 %v4955
        %v5071 = vunpack.c.l.b16 %v4956
        %v5072 = vunpack.c.l.b16 %v4957
        %v5073 = vunpack.c.l.b16 %v4958
        %v5074 = vpack.c.b16 %v5021, %v5020
        %v5075 = vpack.c.b16 %v5023, %v5022
        %v5076 = vpack.c.b16 %v5025, %v5024
        %v5077 = vpack.c.b16 %v5027, %v5026
        %v5078 = vpack.c.b16 %v5029, %v5028
        %v5079 = vpack.c.b16 %v5031, %v5030
        %v5080 = vpack.c.b16 %v5033, %v5032
        %v5081 = vpack.c.b16 %v5035, %v5034
        %v5082 = vpack.c.b16 %v5037, %v5036
        %v5083 = vpack.c.b16 %v5039, %v5038
        %v5084 = vpack.c.b16 %v5041, %v5040
        %v5085 = vpack.c.b16 %v5043, %v5042
        %v5086 = vpack.c.b16 %v5045, %v5044
        %v5087 = vpack.c.b16 %v5047, %v5046
        %v5088 = vpack.c.b16 %v5049, %v5048
        %v5089 = vpack.c.b16 %v5051, %v5050
        %v5090 = vpack.c.b16 %v5053, %v5052
        %v5091 = vpack.c.b16 %v5055, %v5054
        %v5092 = vpack.c.b16 %v5057, %v5056
        %v5093 = vpack.c.b16 %v5059, %v5058
        %v5094 = vpack.c.b16 %v5061, %v5060
        %v5095 = vpack.c.b16 %v5063, %v5062
        %v5096 = vpack.c.b16 %v5065, %v5064
        %v5097 = vpack.c.b16 %v5067, %v5066
        %v5098 = vpack.c.b16 %v5069, %v5068
        %v5099 = vpack.c.b16 %v5071, %v5070
        %v5100 = vpack.c.b16 %v5073, %v5072
        %v5129 = vsel %vm4037, %v4844, 0
        %v5132 = vsel %vm4037, %v4848, 0
        %v5135 = vsel %vm4037, %v4852, 0
        %v5138 = vsel %vm4037, %v4856, 0
        %v5141 = vsel %vm4037, %v4860, 0
        %v5144 = vsel %vm4037, %v4864, 0
        %v5147 = vsel %vm4037, %v4868, 0
        %v5150 = vsel %vm4037, %v4872, 0
        %v5153 = vsel %vm4037, %v4876, 0
        %v5156 = vsel %vm4037, %v4880, 0
        %v5159 = vsel %vm4037, %v4884, 0
        %v5162 = vsel %vm4037, %v4888, 0
        %v5165 = vsel %vm4037, %v4892, 0
        %v5168 = vsel %vm4037, %v4896, 0
        %v5171 = vsel %vm4037, %v4900, 0
        %v5174 = vsel %vm4037, %v4904, 0
        %5176 = vmatprep.subr.bf16.mxu0 0
        %5177 = vmatpush1.bf16.msra.mxu0 %v5081
        %5178 = vmatprep.subr.bf16.mxu0 0
        %5179 = vmatpush1.bf16.msra.mxu0 %v5080
        %5180 = vmatprep.subr.bf16.mxu0 0
        %5181 = vmatpush1.bf16.msra.mxu0 %v5079
        %5182 = vmatprep.subr.bf16.mxu0 0
        %5183 = vmatpush1.bf16.msra.mxu0 %v5078
        %5184 = vmatprep.subr.bf16.mxu0 0
        %5185 = vmatpush1.bf16.msra.mxu0 %v5077
        %5186 = vmatprep.subr.bf16.mxu0 0
        %5187 = vmatpush1.bf16.msra.mxu0 %v5076
        %5188 = vmatprep.subr.bf16.mxu0 0
        %5189 = vmatpush1.bf16.msra.mxu0 %v5075
        %5190 = vmatprep.subr.bf16.mxu0 0
        %5191 = vmatpush1.bf16.msra.mxu0 %v5074
        %5192 = vmatprep.subr.bf16.mxu0 0
        %5193 = vmatpush2.bf16.msra.mxu0 %v5089
        %5194 = vmatprep.subr.bf16.mxu0 0
        %5195 = vmatpush2.bf16.msra.mxu0 %v5088
        %5196 = vmatprep.subr.bf16.mxu0 0
        %5197 = vmatpush2.bf16.msra.mxu0 %v5087
        %5198 = vmatprep.subr.bf16.mxu0 0
        %5199 = vmatpush2.bf16.msra.mxu0 %v5086
        %5200 = vmatprep.subr.bf16.mxu0 0
        %5201 = vmatpush2.bf16.msra.mxu0 %v5085
        %5202 = vmatprep.subr.bf16.mxu0 0
        %5203 = vmatpush2.bf16.msra.mxu0 %v5084
        %5204 = vmatprep.subr.bf16.mxu0 0
        %5205 = vmatpush2.bf16.msra.mxu0 %v5083
        %5206 = vmatprep.subr.bf16.mxu0 0
        %5207 = vmatpush2.bf16.msra.mxu0 %v5082
        %5208 = vmatprep.mubr.bf16.mxu0 %v4842
        %5209 = vmatmul.mubr.bf16.gmra.mxu0 %v4841
        %v5210 = vpop.f32.mrf.mxu0
        %v5211 = vadd.f32 %v4964, %v5210
        %v5212 = vpop.f32.mrf.mxu0
        %v5213 = vpop.f32.mrf.mxu0
        %v5214 = vadd.f32 %v4964, %v5213
        %v5215 = vpop.f32.mrf.mxu0
        %5216 = vmatprep.mubr.bf16.mxu0 %v4846
        %5217 = vmatmul.mubr.bf16.gmra.mxu0 %v4845
        %v5218 = vpop.f32.mrf.mxu0
        %v5219 = vadd.f32 %v4964, %v5218
        %v5220 = vpop.f32.mrf.mxu0
        %v5221 = vpop.f32.mrf.mxu0
        %v5222 = vadd.f32 %v4964, %v5221
        %v5223 = vpop.f32.mrf.mxu0
        %5224 = vmatprep.mubr.bf16.mxu0 %v4850
        %5225 = vmatmul.mubr.bf16.gmra.mxu0 %v4849
        %v5226 = vpop.f32.mrf.mxu0
        %v5227 = vadd.f32 %v4964, %v5226
        %v5228 = vpop.f32.mrf.mxu0
        %v5229 = vpop.f32.mrf.mxu0
        %v5230 = vadd.f32 %v4964, %v5229
        %v5231 = vpop.f32.mrf.mxu0
        %5232 = vmatprep.mubr.bf16.mxu0 %v4854
        %5233 = vmatmul.mubr.bf16.gmra.mxu0 %v4853
        %v5234 = vpop.f32.mrf.mxu0
        %v5235 = vadd.f32 %v4964, %v5234
        %v5236 = vpop.f32.mrf.mxu0
        %v5237 = vpop.f32.mrf.mxu0
        %v5238 = vadd.f32 %v4964, %v5237
        %v5239 = vpop.f32.mrf.mxu0
        %5240 = vmatprep.mubr.bf16.mxu0 %v4858
        %5241 = vmatmul.mubr.bf16.gmra.mxu0 %v4857
        %v5242 = vpop.f32.mrf.mxu0
        %v5243 = vadd.f32 %v4964, %v5242
        %v5244 = vpop.f32.mrf.mxu0
        %v5245 = vpop.f32.mrf.mxu0
        %v5246 = vadd.f32 %v4964, %v5245
        %v5247 = vpop.f32.mrf.mxu0
        %5248 = vmatprep.mubr.bf16.mxu0 %v4862
        %5249 = vmatmul.mubr.bf16.gmra.mxu0 %v4861
        %v5250 = vpop.f32.mrf.mxu0
        %v5251 = vadd.f32 %v4964, %v5250
        %v5252 = vpop.f32.mrf.mxu0
        %v5253 = vpop.f32.mrf.mxu0
        %v5254 = vadd.f32 %v4964, %v5253
        %v5255 = vpop.f32.mrf.mxu0
        %5256 = vmatprep.mubr.bf16.mxu0 %v4866
        %5257 = vmatmul.mubr.bf16.gmra.mxu0 %v4865
        %v5258 = vpop.f32.mrf.mxu0
        %v5259 = vadd.f32 %v4964, %v5258
        %v5260 = vpop.f32.mrf.mxu0
        %v5261 = vpop.f32.mrf.mxu0
        %v5262 = vadd.f32 %v4964, %v5261
        %v5263 = vpop.f32.mrf.mxu0
        %5264 = vmatprep.mubr.bf16.mxu0 %v4870
        %5265 = vmatmul.mubr.bf16.gmra.mxu0 %v4869
        %v5266 = vpop.f32.mrf.mxu0
        %v5267 = vadd.f32 %v4964, %v5266
        %v5268 = vpop.f32.mrf.mxu0
        %v5269 = vpop.f32.mrf.mxu0
        %v5270 = vadd.f32 %v4964, %v5269
        %v5271 = vpop.f32.mrf.mxu0
        %5272 = vmatprep.mubr.bf16.mxu0 %v4874
        %5273 = vmatmul.mubr.bf16.gmra.mxu0 %v4873
        %v5274 = vpop.f32.mrf.mxu0
        %v5275 = vadd.f32 %v4964, %v5274
        %v5276 = vpop.f32.mrf.mxu0
        %v5277 = vpop.f32.mrf.mxu0
        %v5278 = vadd.f32 %v4964, %v5277
        %v5279 = vpop.f32.mrf.mxu0
        %5280 = vmatprep.mubr.bf16.mxu0 %v4878
        %5281 = vmatmul.mubr.bf16.gmra.mxu0 %v4877
        %v5282 = vpop.f32.mrf.mxu0
        %v5283 = vadd.f32 %v4964, %v5282
        %v5284 = vpop.f32.mrf.mxu0
        %v5285 = vpop.f32.mrf.mxu0
        %v5286 = vadd.f32 %v4964, %v5285
        %v5287 = vpop.f32.mrf.mxu0
        %5288 = vmatprep.mubr.bf16.mxu0 %v4882
        %5289 = vmatmul.mubr.bf16.gmra.mxu0 %v4881
        %v5290 = vpop.f32.mrf.mxu0
        %v5291 = vadd.f32 %v4964, %v5290
        %v5292 = vpop.f32.mrf.mxu0
        %v5293 = vpop.f32.mrf.mxu0
        %v5294 = vadd.f32 %v4964, %v5293
        %v5295 = vpop.f32.mrf.mxu0
        %5296 = vmatprep.mubr.bf16.mxu0 %v4886
        %5297 = vmatmul.mubr.bf16.gmra.mxu0 %v4885
        %v5298 = vpop.f32.mrf.mxu0
        %v5299 = vadd.f32 %v4964, %v5298
        %v5300 = vpop.f32.mrf.mxu0
        %v5301 = vpop.f32.mrf.mxu0
        %v5302 = vadd.f32 %v4964, %v5301
        %v5303 = vpop.f32.mrf.mxu0
        %5304 = vmatprep.mubr.bf16.mxu0 %v4890
        %5305 = vmatmul.mubr.bf16.gmra.mxu0 %v4889
        %v5306 = vpop.f32.mrf.mxu0
        %v5307 = vadd.f32 %v4964, %v5306
        %v5308 = vpop.f32.mrf.mxu0
        %v5309 = vpop.f32.mrf.mxu0
        %v5310 = vadd.f32 %v4964, %v5309
        %v5311 = vpop.f32.mrf.mxu0
        %5312 = vmatprep.mubr.bf16.mxu0 %v4894
        %5313 = vmatmul.mubr.bf16.gmra.mxu0 %v4893
        %v5314 = vpop.f32.mrf.mxu0
        %v5315 = vadd.f32 %v4964, %v5314
        %v5316 = vpop.f32.mrf.mxu0
        %v5317 = vpop.f32.mrf.mxu0
        %v5318 = vadd.f32 %v4964, %v5317
        %v5319 = vpop.f32.mrf.mxu0
        %5320 = vmatprep.mubr.bf16.mxu0 %v4898
        %5321 = vmatmul.mubr.bf16.gmra.mxu0 %v4897
        %v5322 = vpop.f32.mrf.mxu0
        %v5323 = vadd.f32 %v4964, %v5322
        %v5324 = vpop.f32.mrf.mxu0
        %v5325 = vpop.f32.mrf.mxu0
        %v5326 = vadd.f32 %v4964, %v5325
        %v5327 = vpop.f32.mrf.mxu0
        %5328 = vmatprep.mubr.bf16.mxu0 %v4902
        %5329 = vmatmul.mubr.bf16.gmra.mxu0 %v4901
        %v5330 = vpop.f32.mrf.mxu0
        %v5331 = vadd.f32 %v4964, %v5330
        %v5332 = vpop.f32.mrf.mxu0
        %v5333 = vpop.f32.mrf.mxu0
        %v5334 = vadd.f32 %v4964, %v5333
        %v5335 = vpop.f32.mrf.mxu0
        %5336 = vdwg.mxu0
        %5337 = vmatprep.subr.bf16.mxu0 0
        %5338 = vmatpush1.bf16.msra.mxu0 %v5097
        %5339 = vmatprep.subr.bf16.mxu0 0
        %5340 = vmatpush1.bf16.msra.mxu0 %v5096
        %5341 = vmatprep.subr.bf16.mxu0 0
        %5342 = vmatpush1.bf16.msra.mxu0 %v5095
        %5343 = vmatprep.subr.bf16.mxu0 0
        %5344 = vmatpush1.bf16.msra.mxu0 %v5094
        %5345 = vmatprep.subr.bf16.mxu0 0
        %5346 = vmatpush1.bf16.msra.mxu0 %v5093
        %5347 = vmatprep.subr.bf16.mxu0 0
        %5348 = vmatpush1.bf16.msra.mxu0 %v5092
        %5349 = vmatprep.subr.bf16.mxu0 0
        %5350 = vmatpush1.bf16.msra.mxu0 %v5091
        %5351 = vmatprep.subr.bf16.mxu0 0
        %5352 = vmatpush1.bf16.msra.mxu0 %v5090
        %5353 = vmatprep.subr.bf16.mxu0 0
        %5354 = vmatpush2.bf16.msra.mxu0 0
        %5355 = vmatprep.subr.bf16.mxu0 0
        %5356 = vmatpush2.bf16.msra.mxu0 0
        %5357 = vmatprep.subr.bf16.mxu0 0
        %5358 = vmatpush2.bf16.msra.mxu0 0
        %5359 = vmatprep.subr.bf16.mxu0 0
        %5360 = vmatpush2.bf16.msra.mxu0 0
        %5361 = vmatprep.subr.bf16.mxu0 0
        %5362 = vmatpush2.bf16.msra.mxu0 0
        %5363 = vmatprep.subr.bf16.mxu0 0
        %5364 = vmatpush2.bf16.msra.mxu0 %v5100
        %5365 = vmatprep.subr.bf16.mxu0 0
        %5366 = vmatpush2.bf16.msra.mxu0 %v5099
        %5367 = vmatprep.subr.bf16.mxu0 0
        %5368 = vmatpush2.bf16.msra.mxu0 %v5098
        %5369 = vmatprep.mubr.bf16.mxu0 %v5129
        %5370 = vmatmul.mubr.bf16.gmra.mxu0 %v4843
        %v5371 = vpop.f32.mrf.mxu0
        %v5372 = vadd.f32 %v5211, %v5371
        %v5373 = vpop.f32.mrf.mxu0
        %v5374 = vpop.f32.mrf.mxu0
        %v5375 = vadd.f32 %v5214, %v5374
        %v5376 = vpop.f32.mrf.mxu0
        %5377 = vmatprep.mubr.bf16.mxu0 %v5132
        %5378 = vmatmul.mubr.bf16.gmra.mxu0 %v4847
        %v5379 = vpop.f32.mrf.mxu0
        %v5380 = vadd.f32 %v5219, %v5379
        %v5381 = vpop.f32.mrf.mxu0
        %v5382 = vpop.f32.mrf.mxu0
        %v5383 = vadd.f32 %v5222, %v5382
        %v5384 = vpop.f32.mrf.mxu0
        %5385 = vmatprep.mubr.bf16.mxu0 %v5135
        %5386 = vmatmul.mubr.bf16.gmra.mxu0 %v4851
        %v5387 = vpop.f32.mrf.mxu0
        %v5388 = vadd.f32 %v5227, %v5387
        %v5389 = vpop.f32.mrf.mxu0
        %v5390 = vpop.f32.mrf.mxu0
        %v5391 = vadd.f32 %v5230, %v5390
        %v5392 = vpop.f32.mrf.mxu0
        %5393 = vmatprep.mubr.bf16.mxu0 %v5138
        %5394 = vmatmul.mubr.bf16.gmra.mxu0 %v4855
        %v5395 = vpop.f32.mrf.mxu0
        %v5396 = vadd.f32 %v5235, %v5395
        %v5397 = vpop.f32.mrf.mxu0
        %v5398 = vpop.f32.mrf.mxu0
        %v5399 = vadd.f32 %v5238, %v5398
        %v5400 = vpop.f32.mrf.mxu0
        %5401 = vmatprep.mubr.bf16.mxu0 %v5141
        %5402 = vmatmul.mubr.bf16.gmra.mxu0 %v4859
        %v5403 = vpop.f32.mrf.mxu0
        %v5404 = vadd.f32 %v5243, %v5403
        %v5405 = vpop.f32.mrf.mxu0
        %v5406 = vpop.f32.mrf.mxu0
        %v5407 = vadd.f32 %v5246, %v5406
        %v5408 = vpop.f32.mrf.mxu0
        %5409 = vmatprep.mubr.bf16.mxu0 %v5144
        %5410 = vmatmul.mubr.bf16.gmra.mxu0 %v4863
        %v5411 = vpop.f32.mrf.mxu0
        %v5412 = vadd.f32 %v5251, %v5411
        %v5413 = vpop.f32.mrf.mxu0
        %v5414 = vpop.f32.mrf.mxu0
        %v5415 = vadd.f32 %v5254, %v5414
        %v5416 = vpop.f32.mrf.mxu0
        %5417 = vmatprep.mubr.bf16.mxu0 %v5147
        %5418 = vmatmul.mubr.bf16.gmra.mxu0 %v4867
        %v5419 = vpop.f32.mrf.mxu0
        %v5420 = vadd.f32 %v5259, %v5419
        %v5421 = vpop.f32.mrf.mxu0
        %v5422 = vpop.f32.mrf.mxu0
        %v5423 = vadd.f32 %v5262, %v5422
        %v5424 = vpop.f32.mrf.mxu0
        %5425 = vmatprep.mubr.bf16.mxu0 %v5150
        %5426 = vmatmul.mubr.bf16.gmra.mxu0 %v4871
        %v5427 = vpop.f32.mrf.mxu0
        %v5428 = vadd.f32 %v5267, %v5427
        %v5429 = vpop.f32.mrf.mxu0
        %v5430 = vpop.f32.mrf.mxu0
        %v5431 = vadd.f32 %v5270, %v5430
        %v5432 = vpop.f32.mrf.mxu0
        %5433 = vmatprep.mubr.bf16.mxu0 %v5153
        %5434 = vmatmul.mubr.bf16.gmra.mxu0 %v4875
        %v5435 = vpop.f32.mrf.mxu0
        %v5436 = vadd.f32 %v5275, %v5435
        %v5437 = vpop.f32.mrf.mxu0
        %v5438 = vpop.f32.mrf.mxu0
        %v5439 = vadd.f32 %v5278, %v5438
        %v5440 = vpop.f32.mrf.mxu0
        %5441 = vmatprep.mubr.bf16.mxu0 %v5156
        %5442 = vmatmul.mubr.bf16.gmra.mxu0 %v4879
        %v5443 = vpop.f32.mrf.mxu0
        %v5444 = vadd.f32 %v5283, %v5443
        %v5445 = vpop.f32.mrf.mxu0
        %v5446 = vpop.f32.mrf.mxu0
        %v5447 = vadd.f32 %v5286, %v5446
        %v5448 = vpop.f32.mrf.mxu0
        %5449 = vmatprep.mubr.bf16.mxu0 %v5159
        %5450 = vmatmul.mubr.bf16.gmra.mxu0 %v4883
        %v5451 = vpop.f32.mrf.mxu0
        %v5452 = vadd.f32 %v5291, %v5451
        %v5453 = vpop.f32.mrf.mxu0
        %v5454 = vpop.f32.mrf.mxu0
        %v5455 = vadd.f32 %v5294, %v5454
        %v5456 = vpop.f32.mrf.mxu0
        %5457 = vmatprep.mubr.bf16.mxu0 %v5162
        %5458 = vmatmul.mubr.bf16.gmra.mxu0 %v4887
        %v5459 = vpop.f32.mrf.mxu0
        %v5460 = vadd.f32 %v5299, %v5459
        %v5461 = vpop.f32.mrf.mxu0
        %v5462 = vpop.f32.mrf.mxu0
        %v5463 = vadd.f32 %v5302, %v5462
        %v5464 = vpop.f32.mrf.mxu0
        %5465 = vmatprep.mubr.bf16.mxu0 %v5165
        %5466 = vmatmul.mubr.bf16.gmra.mxu0 %v4891
        %v5467 = vpop.f32.mrf.mxu0
        %v5468 = vadd.f32 %v5307, %v5467
        %v5469 = vpop.f32.mrf.mxu0
        %v5470 = vpop.f32.mrf.mxu0
        %v5471 = vadd.f32 %v5310, %v5470
        %v5472 = vpop.f32.mrf.mxu0
        %5473 = vmatprep.mubr.bf16.mxu0 %v5168
        %5474 = vmatmul.mubr.bf16.gmra.mxu0 %v4895
        %v5475 = vpop.f32.mrf.mxu0
        %v5476 = vadd.f32 %v5315, %v5475
        %v5477 = vpop.f32.mrf.mxu0
        %v5478 = vpop.f32.mrf.mxu0
        %v5479 = vadd.f32 %v5318, %v5478
        %v5480 = vpop.f32.mrf.mxu0
        %5481 = vmatprep.mubr.bf16.mxu0 %v5171
        %5482 = vmatmul.mubr.bf16.gmra.mxu0 %v4899
        %v5483 = vpop.f32.mrf.mxu0
        %v5484 = vadd.f32 %v5323, %v5483
        %v5485 = vpop.f32.mrf.mxu0
        %v5486 = vpop.f32.mrf.mxu0
        %v5487 = vadd.f32 %v5326, %v5486
        %v5488 = vpop.f32.mrf.mxu0
        %5489 = vmatprep.mubr.bf16.mxu0 %v5174
        %5490 = vmatmul.mubr.bf16.gmra.mxu0 %v4903
        %v5491 = vpop.f32.mrf.mxu0
        %v5492 = vadd.f32 %v5331, %v5491
        %v5493 = vpop.f32.mrf.mxu0
        %v5494 = vpop.f32.mrf.mxu0
        %v5495 = vadd.f32 %v5334, %v5494
        %v5496 = vpop.f32.mrf.mxu0
        %5497 = vdwg.mxu0
        %v5498 = vmax.f32 %v5372, 0.0
        %v5499 = vmax.f32 %v5375, 0.0
        %v5500 = vmax.f32 %v5380, 0.0
        %v5501 = vmax.f32 %v5383, 0.0
        %v5502 = vmax.f32 %v5388, 0.0
        %v5503 = vmax.f32 %v5391, 0.0
        %v5504 = vmax.f32 %v5396, 0.0
        %v5505 = vmax.f32 %v5399, 0.0
        %v5506 = vmax.f32 %v5404, 0.0
        %v5507 = vmax.f32 %v5407, 0.0
        %v5508 = vmax.f32 %v5412, 0.0
        %v5509 = vmax.f32 %v5415, 0.0
        %v5510 = vmax.f32 %v5420, 0.0
        %v5511 = vmax.f32 %v5423, 0.0
        %v5512 = vmax.f32 %v5428, 0.0
        %v5513 = vmax.f32 %v5431, 0.0
        %v5514 = vmax.f32 %v5436, 0.0
        %v5515 = vmax.f32 %v5439, 0.0
        %v5516 = vmax.f32 %v5444, 0.0
        %v5517 = vmax.f32 %v5447, 0.0
        %v5518 = vmax.f32 %v5452, 0.0
        %v5519 = vmax.f32 %v5455, 0.0
        %v5520 = vmax.f32 %v5460, 0.0
        %v5521 = vmax.f32 %v5463, 0.0
        %v5522 = vmax.f32 %v5468, 0.0
        %v5523 = vmax.f32 %v5471, 0.0
        %v5524 = vmax.f32 %v5476, 0.0
        %v5525 = vmax.f32 %v5479, 0.0
        %v5526 = vmax.f32 %v5484, 0.0
        %v5527 = vmax.f32 %v5487, 0.0
        %v5528 = vmax.f32 %v5492, 0.0
        %v5529 = vmax.f32 %v5495, 0.0
        %5530 = vrot.lane.b32.xlu0 %v3461, 32
        %v5531 = vpop.permute.xlu0 %5530
        %5532 = vrot.lane.b32.xlu0 %v3462, 32
        %v5533 = vpop.permute.xlu0 %5532
        %5534 = vrot.lane.b32.xlu0 %v3463, 32
        %v5535 = vpop.permute.xlu0 %5534
        %5536 = vrot.lane.b32.xlu0 %v3464, 32
        %v5537 = vpop.permute.xlu0 %5536
        %5538 = vrot.lane.b32.xlu0 %v3465, 32
        %v5539 = vpop.permute.xlu0 %5538
        %5540 = vrot.lane.b32.xlu0 %v3466, 32
        %v5541 = vpop.permute.xlu0 %5540
        %5542 = vrot.lane.b32.xlu0 %v3467, 32
        %v5543 = vpop.permute.xlu0 %5542
        %5544 = vrot.lane.b32.xlu0 %v3468, 32
        %v5545 = vpop.permute.xlu0 %5544
        %5546 = vrot.lane.b32.xlu0 %v3469, 32
        %v5547 = vpop.permute.xlu0 %5546
        %5548 = vrot.lane.b32.xlu0 %v3470, 32
        %v5549 = vpop.permute.xlu0 %5548
        %5550 = vrot.lane.b32.xlu0 %v3471, 32
        %v5551 = vpop.permute.xlu0 %5550
        %5552 = vrot.lane.b32.xlu0 %v3472, 32
        %v5553 = vpop.permute.xlu0 %5552
        %5554 = vrot.lane.b32.xlu0 %v3473, 32
        %v5555 = vpop.permute.xlu0 %5554
        %5556 = vrot.lane.b32.xlu0 %v3474, 32
        %v5557 = vpop.permute.xlu0 %5556
        %5558 = vrot.lane.b32.xlu0 %v3475, 32
        %v5559 = vpop.permute.xlu0 %5558
        %5560 = vrot.lane.b32.xlu0 %v3476, 32
        %v5561 = vpop.permute.xlu0 %5560
        %5562 = vrot.lane.b32.xlu0 %v3477, 32
        %v5563 = vpop.permute.xlu0 %5562
        %5564 = vrot.lane.b32.xlu0 %v3478, 32
        %v5565 = vpop.permute.xlu0 %5564
        %5566 = vrot.lane.b32.xlu0 %v3479, 32
        %v5567 = vpop.permute.xlu0 %5566
        %5568 = vrot.lane.b32.xlu0 %v3480, 32
        %v5569 = vpop.permute.xlu0 %5568
        %5570 = vrot.lane.b32.xlu0 %v3481, 32
        %v5571 = vpop.permute.xlu0 %5570
        %5572 = vrot.lane.b32.xlu0 %v3482, 32
        %v5573 = vpop.permute.xlu0 %5572
        %5574 = vrot.lane.b32.xlu0 %v3483, 32
        %v5575 = vpop.permute.xlu0 %5574
        %5576 = vrot.lane.b32.xlu0 %v3484, 32
        %v5577 = vpop.permute.xlu0 %5576
        %5578 = vrot.lane.b32.xlu0 %v3485, 32
        %v5579 = vpop.permute.xlu0 %5578
        %5580 = vrot.lane.b32.xlu0 %v3486, 32
        %v5581 = vpop.permute.xlu0 %5580
        %5582 = vrot.lane.b32.xlu0 %v3487, 32
        %v5583 = vpop.permute.xlu0 %5582
        %5584 = vrot.lane.b32.xlu0 %v3488, 32
        %v5585 = vpop.permute.xlu0 %5584
        %5586 = vrot.lane.b32.xlu0 %v3489, 32
        %v5587 = vpop.permute.xlu0 %5586
        %5588 = vrot.lane.b32.xlu0 %v3490, 32
        %v5589 = vpop.permute.xlu0 %5588
        %5590 = vrot.lane.b32.xlu0 %v3491, 32
        %v5591 = vpop.permute.xlu0 %5590
        %5592 = vrot.lane.b32.xlu0 %v3492, 32
        %v5593 = vpop.permute.xlu0 %5592
        %5658 = vrot.lane.b32.xlu0 %v5498, 64
        %v5659 = vpop.permute.xlu0 %5658
        %5660 = vrot.lane.b32.xlu0 %v5499, 64
        %v5661 = vpop.permute.xlu0 %5660
        %5662 = vrot.lane.b32.xlu0 %v5500, 64
        %v5663 = vpop.permute.xlu0 %5662
        %5664 = vrot.lane.b32.xlu0 %v5501, 64
        %v5665 = vpop.permute.xlu0 %5664
        %5666 = vrot.lane.b32.xlu0 %v5502, 64
        %v5667 = vpop.permute.xlu0 %5666
        %5668 = vrot.lane.b32.xlu0 %v5503, 64
        %v5669 = vpop.permute.xlu0 %5668
        %5670 = vrot.lane.b32.xlu0 %v5504, 64
        %v5671 = vpop.permute.xlu0 %5670
        %5672 = vrot.lane.b32.xlu0 %v5505, 64
        %v5673 = vpop.permute.xlu0 %5672
        %5674 = vrot.lane.b32.xlu0 %v5506, 64
        %v5675 = vpop.permute.xlu0 %5674
        %5676 = vrot.lane.b32.xlu0 %v5507, 64
        %v5677 = vpop.permute.xlu0 %5676
        %5678 = vrot.lane.b32.xlu0 %v5508, 64
        %v5679 = vpop.permute.xlu0 %5678
        %5680 = vrot.lane.b32.xlu0 %v5509, 64
        %v5681 = vpop.permute.xlu0 %5680
        %5682 = vrot.lane.b32.xlu0 %v5510, 64
        %v5683 = vpop.permute.xlu0 %5682
        %5684 = vrot.lane.b32.xlu0 %v5511, 64
        %v5685 = vpop.permute.xlu0 %5684
        %5686 = vrot.lane.b32.xlu0 %v5512, 64
        %v5687 = vpop.permute.xlu0 %5686
        %5688 = vrot.lane.b32.xlu0 %v5513, 64
        %v5689 = vpop.permute.xlu0 %5688
        %5690 = vrot.lane.b32.xlu0 %v5514, 64
        %v5691 = vpop.permute.xlu0 %5690
        %5692 = vrot.lane.b32.xlu0 %v5515, 64
        %v5693 = vpop.permute.xlu0 %5692
        %5694 = vrot.lane.b32.xlu0 %v5516, 64
        %v5695 = vpop.permute.xlu0 %5694
        %5696 = vrot.lane.b32.xlu0 %v5517, 64
        %v5697 = vpop.permute.xlu0 %5696
        %5698 = vrot.lane.b32.xlu0 %v5518, 64
        %v5699 = vpop.permute.xlu0 %5698
        %5700 = vrot.lane.b32.xlu0 %v5519, 64
        %v5701 = vpop.permute.xlu0 %5700
        %5702 = vrot.lane.b32.xlu0 %v5520, 64
        %v5703 = vpop.permute.xlu0 %5702
        %5704 = vrot.lane.b32.xlu0 %v5521, 64
        %v5705 = vpop.permute.xlu0 %5704
        %5706 = vrot.lane.b32.xlu0 %v5522, 64
        %v5707 = vpop.permute.xlu0 %5706
        %5708 = vrot.lane.b32.xlu0 %v5523, 64
        %v5709 = vpop.permute.xlu0 %5708
        %5710 = vrot.lane.b32.xlu0 %v5524, 64
        %v5711 = vpop.permute.xlu0 %5710
        %5712 = vrot.lane.b32.xlu0 %v5525, 64
        %v5713 = vpop.permute.xlu0 %5712
        %5714 = vrot.lane.b32.xlu0 %v5526, 64
        %v5715 = vpop.permute.xlu0 %5714
        %5716 = vrot.lane.b32.xlu0 %v5527, 64
        %v5717 = vpop.permute.xlu0 %5716
        %5718 = vrot.lane.b32.xlu0 %v5528, 64
        %v5719 = vpop.permute.xlu0 %5718
        %5720 = vrot.lane.b32.xlu0 %v5529, 64
        %v5721 = vpop.permute.xlu0 %5720
        %v5754 = vsel %vm4680, %v1079, %v5531
        %v5755 = vsel %vm4680, %v1080, %v5533
        %v5756 = vsel %vm4680, %v1081, %v5535
        %v5757 = vsel %vm4680, %v1082, %v5537
        %v5758 = vsel %vm4680, %v1083, %v5539
        %v5759 = vsel %vm4680, %v1084, %v5541
        %v5760 = vsel %vm4680, %v1085, %v5543
        %v5761 = vsel %vm4680, %v1086, %v5545
        %v5762 = vsel %vm4680, %v1087, %v5547
        %v5763 = vsel %vm4680, %v1088, %v5549
        %v5764 = vsel %vm4680, %v1089, %v5551
        %v5765 = vsel %vm4680, %v1090, %v5553
        %v5766 = vsel %vm4680, %v1091, %v5555
        %v5767 = vsel %vm4680, %v1092, %v5557
        %v5768 = vsel %vm4680, %v1093, %v5559
        %v5769 = vsel %vm4680, %v1094, %v5561
        %v5770 = vsel %vm4680, %v1095, %v5563
        %v5771 = vsel %vm4680, %v1096, %v5565
        %v5772 = vsel %vm4680, %v1097, %v5567
        %v5773 = vsel %vm4680, %v1098, %v5569
        %v5774 = vsel %vm4680, %v1099, %v5571
        %v5775 = vsel %vm4680, %v1100, %v5573
        %v5776 = vsel %vm4680, %v1101, %v5575
        %v5777 = vsel %vm4680, %v1102, %v5577
        %v5778 = vsel %vm4680, %v1103, %v5579
        %v5779 = vsel %vm4680, %v1104, %v5581
        %v5780 = vsel %vm4680, %v1105, %v5583
        %v5781 = vsel %vm4680, %v1106, %v5585
        %v5782 = vsel %vm4680, %v1107, %v5587
        %v5783 = vsel %vm4680, %v1108, %v5589
        %v5784 = vsel %vm4680, %v1109, %v5591
        %v5785 = vsel %vm4680, %v1110, %v5593
        %v5786 = vsel %vm708, %v5754, %v5659
        %v5787 = vsel %vm708, %v5755, %v5661
        %v5788 = vsel %vm708, %v5756, %v5663
        %v5789 = vsel %vm708, %v5757, %v5665
        %v5790 = vsel %vm708, %v5758, %v5667
        %v5791 = vsel %vm708, %v5759, %v5669
        %v5792 = vsel %vm708, %v5760, %v5671
        %v5793 = vsel %vm708, %v5761, %v5673
        %v5794 = vsel %vm708, %v5762, %v5675
        %v5795 = vsel %vm708, %v5763, %v5677
        %v5796 = vsel %vm708, %v5764, %v5679
        %v5797 = vsel %vm708, %v5765, %v5681
        %v5798 = vsel %vm708, %v5766, %v5683
        %v5799 = vsel %vm708, %v5767, %v5685
        %v5800 = vsel %vm708, %v5768, %v5687
        %v5801 = vsel %vm708, %v5769, %v5689
        %v5802 = vsel %vm708, %v5770, %v5691
        %v5803 = vsel %vm708, %v5771, %v5693
        %v5804 = vsel %vm708, %v5772, %v5695
        %v5805 = vsel %vm708, %v5773, %v5697
        %v5806 = vsel %vm708, %v5774, %v5699
        %v5807 = vsel %vm708, %v5775, %v5701
        %v5808 = vsel %vm708, %v5776, %v5703
        %v5809 = vsel %vm708, %v5777, %v5705
        %v5810 = vsel %vm708, %v5778, %v5707
        %v5811 = vsel %vm708, %v5779, %v5709
        %v5812 = vsel %vm708, %v5780, %v5711
        %v5813 = vsel %vm708, %v5781, %v5713
        %v5814 = vsel %vm708, %v5782, %v5715
        %v5815 = vsel %vm708, %v5783, %v5717
        %v5816 = vsel %vm708, %v5784, %v5719
        %v5817 = vsel %vm708, %v5785, %v5721
        %v5818 = vpack.c.bf16 %v5787, %v5786
        %v5819 = vpack.c.bf16 %v5789, %v5788
        %v5820 = vpack.c.bf16 %v5791, %v5790
        %v5821 = vpack.c.bf16 %v5793, %v5792
        %v5822 = vpack.c.bf16 %v5795, %v5794
        %v5823 = vpack.c.bf16 %v5797, %v5796
        %v5824 = vpack.c.bf16 %v5799, %v5798
        %v5825 = vpack.c.bf16 %v5801, %v5800
        %v5826 = vpack.c.bf16 %v5803, %v5802
        %v5827 = vpack.c.bf16 %v5805, %v5804
        %v5828 = vpack.c.bf16 %v5807, %v5806
        %v5829 = vpack.c.bf16 %v5809, %v5808
        %v5830 = vpack.c.bf16 %v5811, %v5810
        %v5831 = vpack.c.bf16 %v5813, %v5812
        %v5832 = vpack.c.bf16 %v5815, %v5814
        %v5833 = vpack.c.bf16 %v5817, %v5816
        %v5834 = vld [vmem:[%s8] sm:$0xff]
        %v5835 = vld [vmem:[%s8 + $0x8] sm:$0xf]
        %v5836 = vld [vmem:[%s8 + $0xc] sm:$0xff]
        %v5837 = vld [vmem:[%s8 + $0x14] sm:$0xf]
        %v5838 = vld [vmem:[%s8 + $0x18] sm:$0xff]
        %v5839 = vld [vmem:[%s8 + $0x20] sm:$0xf]
        %v5840 = vld [vmem:[%s8 + $0x24] sm:$0xff]
        %v5841 = vld [vmem:[%s8 + $0x2c] sm:$0xf]
        %v5842 = vld [vmem:[%s8 + $0x30] sm:$0xff]
        %v5843 = vld [vmem:[%s8 + $0x38] sm:$0xf]
        %v5844 = vld [vmem:[%s8 + $0x3c] sm:$0xff]
        %v5845 = vld [vmem:[%s8 + $0x44] sm:$0xf]
        %v5846 = vld [vmem:[%s8 + $0x48] sm:$0xff]
        %v5847 = vld [vmem:[%s8 + $0x50] sm:$0xf]
        %v5848 = vld [vmem:[%s8 + $0x54] sm:$0xff]
        %v5849 = vld [vmem:[%s8 + $0x5c] sm:$0xf]
        %v5850 = vld [vmem:[%s8 + $0x60] sm:$0xff]
        %v5851 = vld [vmem:[%s8 + $0x68] sm:$0xf]
        %v5852 = vld [vmem:[%s8 + $0x6c] sm:$0xff]
        %v5853 = vld [vmem:[%s8 + $0x74] sm:$0xf]
        %v5854 = vld [vmem:[%s8 + $0x78] sm:$0xff]
        %v5855 = vld [vmem:[%s8 + $0x80] sm:$0xf]
        %v5856 = vld [vmem:[%s8 + $0x84] sm:$0xff]
        %v5857 = vld [vmem:[%s8 + $0x8c] sm:$0xf]
        %v5858 = vld [vmem:[%s8 + $0x90] sm:$0xff]
        %v5859 = vld [vmem:[%s8 + $0x98] sm:$0xf]
        %v5860 = vld [vmem:[%s8 + $0x9c] sm:$0xff]
        %v5861 = vld [vmem:[%s8 + $0xa4] sm:$0xf]
        %v5862 = vld [vmem:[%s8 + $0xa8] sm:$0xff]
        %v5863 = vld [vmem:[%s8 + $0xb0] sm:$0xf]
        %v5864 = vld [vmem:[%s8 + $0xb4] sm:$0xff]
        %v5865 = vld [vmem:[%s8 + $0xbc] sm:$0xf]
        %v5866 = vld [vmem:[%s9] sm:$0x7]
        %v5868 = vlaneseq
        %v5869 = vshrl.u32 %v5868, 7
        %v5870 = vsub.s32 0, %v5869
        %v5871 = vrot.slane %v5866, %v5870
        %v5872 = vlaneseq
        %v5873 = vshrl.u32 %v5872, 7
        %v5874 = vsub.s32 1, %v5873
        %v5875 = vrot.slane %v5866, %v5874
        %v5876 = vlaneseq
        %v5877 = vshrl.u32 %v5876, 7
        %v5878 = vsub.s32 2, %v5877
        %v5879 = vrot.slane %v5866, %v5878
        %v5915 = vunpack.c.l.b16 %v5834
        %v5916 = vunpack.c.h.b16 %v5834
        %v5917 = vunpack.c.l.b16 %v5835
        %v5918 = vunpack.c.l.b16 %v5836
        %v5919 = vunpack.c.h.b16 %v5836
        %v5920 = vunpack.c.l.b16 %v5837
        %v5921 = vunpack.c.l.b16 %v5838
        %v5922 = vunpack.c.h.b16 %v5838
        %v5923 = vunpack.c.l.b16 %v5839
        %v5924 = vunpack.c.l.b16 %v5840
        %v5925 = vunpack.c.h.b16 %v5840
        %v5926 = vunpack.c.l.b16 %v5841
        %v5927 = vunpack.c.l.b16 %v5842
        %v5928 = vunpack.c.h.b16 %v5842
        %v5929 = vunpack.c.l.b16 %v5843
        %v5930 = vunpack.c.l.b16 %v5844
        %v5931 = vunpack.c.h.b16 %v5844
        %v5932 = vunpack.c.l.b16 %v5845
        %v5933 = vunpack.c.l.b16 %v5846
        %v5934 = vunpack.c.h.b16 %v5846
        %v5935 = vunpack.c.l.b16 %v5847
        %v5936 = vunpack.c.l.b16 %v5848
        %v5937 = vunpack.c.h.b16 %v5848
        %v5938 = vunpack.c.l.b16 %v5849
        %v5939 = vunpack.c.l.b16 %v5850
        %v5940 = vunpack.c.h.b16 %v5850
        %v5941 = vunpack.c.l.b16 %v5851
        %v5942 = vunpack.c.l.b16 %v5852
        %v5943 = vunpack.c.h.b16 %v5852
        %v5944 = vunpack.c.l.b16 %v5853
        %v5945 = vunpack.c.l.b16 %v5854
        %v5946 = vunpack.c.h.b16 %v5854
        %v5947 = vunpack.c.l.b16 %v5855
        %v5948 = vunpack.c.l.b16 %v5856
        %v5949 = vunpack.c.h.b16 %v5856
        %v5950 = vunpack.c.l.b16 %v5857
        %v5951 = vunpack.c.l.b16 %v5858
        %v5952 = vunpack.c.h.b16 %v5858
        %v5953 = vunpack.c.l.b16 %v5859
        %v5954 = vunpack.c.l.b16 %v5860
        %v5955 = vunpack.c.h.b16 %v5860
        %v5956 = vunpack.c.l.b16 %v5861
        %v5957 = vunpack.c.l.b16 %v5862
        %v5958 = vunpack.c.h.b16 %v5862
        %v5959 = vunpack.c.l.b16 %v5863
        %v5960 = vunpack.c.l.b16 %v5864
        %v5961 = vunpack.c.h.b16 %v5864
        %v5962 = vunpack.c.l.b16 %v5865
        %v5963 = vpack.c.b16 %v5918, %v5915
        %v5964 = vpack.c.b16 %v5919, %v5916
        %v5965 = vpack.c.b16 %v5920, %v5917
        %v5966 = vpack.c.b16 %v5924, %v5921
        %v5967 = vpack.c.b16 %v5925, %v5922
        %v5968 = vpack.c.b16 %v5926, %v5923
        %v5969 = vpack.c.b16 %v5930, %v5927
        %v5970 = vpack.c.b16 %v5931, %v5928
        %v5971 = vpack.c.b16 %v5932, %v5929
        %v5972 = vpack.c.b16 %v5936, %v5933
        %v5973 = vpack.c.b16 %v5937, %v5934
        %v5974 = vpack.c.b16 %v5938, %v5935
        %v5975 = vpack.c.b16 %v5942, %v5939
        %v5976 = vpack.c.b16 %v5943, %v5940
        %v5977 = vpack.c.b16 %v5944, %v5941
        %v5978 = vpack.c.b16 %v5948, %v5945
        %v5979 = vpack.c.b16 %v5949, %v5946
        %v5980 = vpack.c.b16 %v5950, %v5947
        %v5981 = vpack.c.b16 %v5954, %v5951
        %v5982 = vpack.c.b16 %v5955, %v5952
        %v5983 = vpack.c.b16 %v5956, %v5953
        %v5984 = vpack.c.b16 %v5960, %v5957
        %v5985 = vpack.c.b16 %v5961, %v5958
        %v5986 = vpack.c.b16 %v5962, %v5959
        %6011 = vmatprep.subr.bf16.mxu0 %v5985
        %6012 = vmatpush1.bf16.msra.mxu0 %v5984
        %6013 = vmatprep.subr.bf16.mxu0 %v5982
        %6014 = vmatpush1.bf16.msra.mxu0 %v5981
        %6015 = vmatprep.subr.bf16.mxu0 %v5979
        %6016 = vmatpush1.bf16.msra.mxu0 %v5978
        %6017 = vmatprep.subr.bf16.mxu0 %v5976
        %6018 = vmatpush1.bf16.msra.mxu0 %v5975
        %6019 = vmatprep.subr.bf16.mxu0 %v5973
        %6020 = vmatpush1.bf16.msra.mxu0 %v5972
        %6021 = vmatprep.subr.bf16.mxu0 %v5970
        %6022 = vmatpush1.bf16.msra.mxu0 %v5969
        %6023 = vmatprep.subr.bf16.mxu0 %v5967
        %6024 = vmatpush1.bf16.msra.mxu0 %v5966
        %6025 = vmatprep.subr.bf16.mxu0 %v5964
        %6026 = vmatpush1.bf16.msra.mxu0 %v5963
        %6027 = vmatprep.subr.bf16.mxu0 0
        %6028 = vmatpush2.bf16.msra.mxu0 0
        %6029 = vmatprep.subr.bf16.mxu0 0
        %6030 = vmatpush2.bf16.msra.mxu0 0
        %6031 = vmatprep.subr.bf16.mxu0 0
        %6032 = vmatpush2.bf16.msra.mxu0 0
        %6033 = vmatprep.subr.bf16.mxu0 0
        %6034 = vmatpush2.bf16.msra.mxu0 0
        %6035 = vmatprep.subr.bf16.mxu0 0
        %6036 = vmatpush2.bf16.msra.mxu0 0
        %6037 = vmatprep.subr.bf16.mxu0 0
        %6038 = vmatpush2.bf16.msra.mxu0 0
        %6039 = vmatprep.subr.bf16.mxu0 0
        %6040 = vmatpush2.bf16.msra.mxu0 0
        %6041 = vmatprep.subr.bf16.mxu0 0
        %6042 = vmatpush2.bf16.msra.mxu0 0
        %6043 = vmatprep.mubr.bf16.mxu0 0
        %6044 = vmatmul.mubr.bf16.gmra.mxu0 %v5818
        %v6045 = vpop.f32.mrf.mxu0
        %v6046 = vadd.f32 %v5871, %v6045
        %v6047 = vpop.f32.mrf.mxu0
        %v6048 = vadd.f32 %v5875, %v6047
        %v6049 = vpop.f32.mrf.mxu0
        %v6050 = vadd.f32 %v5871, %v6049
        %v6051 = vpop.f32.mrf.mxu0
        %v6052 = vadd.f32 %v5875, %v6051
        %6053 = vmatprep.mubr.bf16.mxu0 0
        %6054 = vmatmul.mubr.bf16.gmra.mxu0 %v5819
        %v6055 = vpop.f32.mrf.mxu0
        %v6056 = vadd.f32 %v5871, %v6055
        %v6057 = vpop.f32.mrf.mxu0
        %v6058 = vadd.f32 %v5875, %v6057
        %v6059 = vpop.f32.mrf.mxu0
        %v6060 = vadd.f32 %v5871, %v6059
        %v6061 = vpop.f32.mrf.mxu0
        %v6062 = vadd.f32 %v5875, %v6061
        %6063 = vmatprep.mubr.bf16.mxu0 0
        %6064 = vmatmul.mubr.bf16.gmra.mxu0 %v5820
        %v6065 = vpop.f32.mrf.mxu0
        %v6066 = vadd.f32 %v5871, %v6065
        %v6067 = vpop.f32.mrf.mxu0
        %v6068 = vadd.f32 %v5875, %v6067
        %v6069 = vpop.f32.mrf.mxu0
        %v6070 = vadd.f32 %v5871, %v6069
        %v6071 = vpop.f32.mrf.mxu0
        %v6072 = vadd.f32 %v5875, %v6071
        %6073 = vmatprep.mubr.bf16.mxu0 0
        %6074 = vmatmul.mubr.bf16.gmra.mxu0 %v5821
        %v6075 = vpop.f32.mrf.mxu0
        %v6076 = vadd.f32 %v5871, %v6075
        %v6077 = vpop.f32.mrf.mxu0
        %v6078 = vadd.f32 %v5875, %v6077
        %v6079 = vpop.f32.mrf.mxu0
        %v6080 = vadd.f32 %v5871, %v6079
        %v6081 = vpop.f32.mrf.mxu0
        %v6082 = vadd.f32 %v5875, %v6081
        %6083 = vmatprep.mubr.bf16.mxu0 0
        %6084 = vmatmul.mubr.bf16.gmra.mxu0 %v5822
        %v6085 = vpop.f32.mrf.mxu0
        %v6086 = vadd.f32 %v5871, %v6085
        %v6087 = vpop.f32.mrf.mxu0
        %v6088 = vadd.f32 %v5875, %v6087
        %v6089 = vpop.f32.mrf.mxu0
        %v6090 = vadd.f32 %v5871, %v6089
        %v6091 = vpop.f32.mrf.mxu0
        %v6092 = vadd.f32 %v5875, %v6091
        %6093 = vmatprep.mubr.bf16.mxu0 0
        %6094 = vmatmul.mubr.bf16.gmra.mxu0 %v5823
        %v6095 = vpop.f32.mrf.mxu0
        %v6096 = vadd.f32 %v5871, %v6095
        %v6097 = vpop.f32.mrf.mxu0
        %v6098 = vadd.f32 %v5875, %v6097
        %v6099 = vpop.f32.mrf.mxu0
        %v6100 = vadd.f32 %v5871, %v6099
        %v6101 = vpop.f32.mrf.mxu0
        %v6102 = vadd.f32 %v5875, %v6101
        %6103 = vmatprep.mubr.bf16.mxu0 0
        %6104 = vmatmul.mubr.bf16.gmra.mxu0 %v5824
        %v6105 = vpop.f32.mrf.mxu0
        %v6106 = vadd.f32 %v5871, %v6105
        %v6107 = vpop.f32.mrf.mxu0
        %v6108 = vadd.f32 %v5875, %v6107
        %v6109 = vpop.f32.mrf.mxu0
        %v6110 = vadd.f32 %v5871, %v6109
        %v6111 = vpop.f32.mrf.mxu0
        %v6112 = vadd.f32 %v5875, %v6111
        %6113 = vmatprep.mubr.bf16.mxu0 0
        %6114 = vmatmul.mubr.bf16.gmra.mxu0 %v5825
        %v6115 = vpop.f32.mrf.mxu0
        %v6116 = vadd.f32 %v5871, %v6115
        %v6117 = vpop.f32.mrf.mxu0
        %v6118 = vadd.f32 %v5875, %v6117
        %v6119 = vpop.f32.mrf.mxu0
        %v6120 = vadd.f32 %v5871, %v6119
        %v6121 = vpop.f32.mrf.mxu0
        %v6122 = vadd.f32 %v5875, %v6121
        %6123 = vmatprep.mubr.bf16.mxu0 0
        %6124 = vmatmul.mubr.bf16.gmra.mxu0 %v5826
        %v6125 = vpop.f32.mrf.mxu0
        %v6126 = vadd.f32 %v5871, %v6125
        %v6127 = vpop.f32.mrf.mxu0
        %v6128 = vadd.f32 %v5875, %v6127
        %v6129 = vpop.f32.mrf.mxu0
        %v6130 = vadd.f32 %v5871, %v6129
        %v6131 = vpop.f32.mrf.mxu0
        %v6132 = vadd.f32 %v5875, %v6131
        %6133 = vmatprep.mubr.bf16.mxu0 0
        %6134 = vmatmul.mubr.bf16.gmra.mxu0 %v5827
        %v6135 = vpop.f32.mrf.mxu0
        %v6136 = vadd.f32 %v5871, %v6135
        %v6137 = vpop.f32.mrf.mxu0
        %v6138 = vadd.f32 %v5875, %v6137
        %v6139 = vpop.f32.mrf.mxu0
        %v6140 = vadd.f32 %v5871, %v6139
        %v6141 = vpop.f32.mrf.mxu0
        %v6142 = vadd.f32 %v5875, %v6141
        %6143 = vmatprep.mubr.bf16.mxu0 0
        %6144 = vmatmul.mubr.bf16.gmra.mxu0 %v5828
        %v6145 = vpop.f32.mrf.mxu0
        %v6146 = vadd.f32 %v5871, %v6145
        %v6147 = vpop.f32.mrf.mxu0
        %v6148 = vadd.f32 %v5875, %v6147
        %v6149 = vpop.f32.mrf.mxu0
        %v6150 = vadd.f32 %v5871, %v6149
        %v6151 = vpop.f32.mrf.mxu0
        %v6152 = vadd.f32 %v5875, %v6151
        %6153 = vmatprep.mubr.bf16.mxu0 0
        %6154 = vmatmul.mubr.bf16.gmra.mxu0 %v5829
        %v6155 = vpop.f32.mrf.mxu0
        %v6156 = vadd.f32 %v5871, %v6155
        %v6157 = vpop.f32.mrf.mxu0
        %v6158 = vadd.f32 %v5875, %v6157
        %v6159 = vpop.f32.mrf.mxu0
        %v6160 = vadd.f32 %v5871, %v6159
        %v6161 = vpop.f32.mrf.mxu0
        %v6162 = vadd.f32 %v5875, %v6161
        %6163 = vmatprep.mubr.bf16.mxu0 0
        %6164 = vmatmul.mubr.bf16.gmra.mxu0 %v5830
        %v6165 = vpop.f32.mrf.mxu0
        %v6166 = vadd.f32 %v5871, %v6165
        %v6167 = vpop.f32.mrf.mxu0
        %v6168 = vadd.f32 %v5875, %v6167
        %v6169 = vpop.f32.mrf.mxu0
        %v6170 = vadd.f32 %v5871, %v6169
        %v6171 = vpop.f32.mrf.mxu0
        %v6172 = vadd.f32 %v5875, %v6171
        %6173 = vmatprep.mubr.bf16.mxu0 0
        %6174 = vmatmul.mubr.bf16.gmra.mxu0 %v5831
        %v6175 = vpop.f32.mrf.mxu0
        %v6176 = vadd.f32 %v5871, %v6175
        %v6177 = vpop.f32.mrf.mxu0
        %v6178 = vadd.f32 %v5875, %v6177
        %v6179 = vpop.f32.mrf.mxu0
        %v6180 = vadd.f32 %v5871, %v6179
        %v6181 = vpop.f32.mrf.mxu0
        %v6182 = vadd.f32 %v5875, %v6181
        %6183 = vmatprep.mubr.bf16.mxu0 0
        %6184 = vmatmul.mubr.bf16.gmra.mxu0 %v5832
        %v6185 = vpop.f32.mrf.mxu0
        %v6186 = vadd.f32 %v5871, %v6185
        %v6187 = vpop.f32.mrf.mxu0
        %v6188 = vadd.f32 %v5875, %v6187
        %v6189 = vpop.f32.mrf.mxu0
        %v6190 = vadd.f32 %v5871, %v6189
        %v6191 = vpop.f32.mrf.mxu0
        %v6192 = vadd.f32 %v5875, %v6191
        %6193 = vmatprep.mubr.bf16.mxu0 0
        %6194 = vmatmul.mubr.bf16.gmra.mxu0 %v5833
        %v6195 = vpop.f32.mrf.mxu0
        %v6196 = vadd.f32 %v5871, %v6195
        %v6197 = vpop.f32.mrf.mxu0
        %v6198 = vadd.f32 %v5875, %v6197
        %v6199 = vpop.f32.mrf.mxu0
        %v6200 = vadd.f32 %v5871, %v6199
        %v6201 = vpop.f32.mrf.mxu0
        %v6202 = vadd.f32 %v5875, %v6201
        %6203 = vdwg.mxu0
        %6204 = vmatprep.subr.bf16.mxu0 0
        %6205 = vmatpush1.bf16.msra.mxu0 %v5986
        %6206 = vmatprep.subr.bf16.mxu0 0
        %6207 = vmatpush1.bf16.msra.mxu0 %v5983
        %6208 = vmatprep.subr.bf16.mxu0 0
        %6209 = vmatpush1.bf16.msra.mxu0 %v5980
        %6210 = vmatprep.subr.bf16.mxu0 0
        %6211 = vmatpush1.bf16.msra.mxu0 %v5977
        %6212 = vmatprep.subr.bf16.mxu0 0
        %6213 = vmatpush1.bf16.msra.mxu0 %v5974
        %6214 = vmatprep.subr.bf16.mxu0 0
        %6215 = vmatpush1.bf16.msra.mxu0 %v5971
        %6216 = vmatprep.subr.bf16.mxu0 0
        %6217 = vmatpush1.bf16.msra.mxu0 %v5968
        %6218 = vmatprep.subr.bf16.mxu0 0
        %6219 = vmatpush1.bf16.msra.mxu0 %v5965
        %6220 = vmatprep.subr.bf16.mxu0 0
        %6221 = vmatpush2.bf16.msra.mxu0 0
        %6222 = vmatprep.subr.bf16.mxu0 0
        %6223 = vmatpush2.bf16.msra.mxu0 0
        %6224 = vmatprep.subr.bf16.mxu0 0
        %6225 = vmatpush2.bf16.msra.mxu0 0
        %6226 = vmatprep.subr.bf16.mxu0 0
        %6227 = vmatpush2.bf16.msra.mxu0 0
        %6228 = vmatprep.subr.bf16.mxu0 0
        %6229 = vmatpush2.bf16.msra.mxu0 0
        %6230 = vmatprep.subr.bf16.mxu0 0
        %6231 = vmatpush2.bf16.msra.mxu0 0
        %6232 = vmatprep.subr.bf16.mxu0 0
        %6233 = vmatpush2.bf16.msra.mxu0 0
        %6234 = vmatprep.subr.bf16.mxu0 0
        %6235 = vmatpush2.bf16.msra.mxu0 0
        %6236 = vmatprep.mubr.bf16.mxu0 0
        %6237 = vmatmul.mubr.bf16.gmra.mxu0 %v5818
        %v6238 = vpop.f32.mrf.mxu0
        %v6239 = vadd.f32 %v5879, %v6238
        %v6240 = vpop.f32.mrf.mxu0
        %v6241 = vpop.f32.mrf.mxu0
        %v6242 = vadd.f32 %v5879, %v6241
        %v6243 = vpop.f32.mrf.mxu0
        %6244 = vmatprep.mubr.bf16.mxu0 0
        %6245 = vmatmul.mubr.bf16.gmra.mxu0 %v5819
        %v6246 = vpop.f32.mrf.mxu0
        %v6247 = vadd.f32 %v5879, %v6246
        %v6248 = vpop.f32.mrf.mxu0
        %v6249 = vpop.f32.mrf.mxu0
        %v6250 = vadd.f32 %v5879, %v6249
        %v6251 = vpop.f32.mrf.mxu0
        %6252 = vmatprep.mubr.bf16.mxu0 0
        %6253 = vmatmul.mubr.bf16.gmra.mxu0 %v5820
        %v6254 = vpop.f32.mrf.mxu0
        %v6255 = vadd.f32 %v5879, %v6254
        %v6256 = vpop.f32.mrf.mxu0
        %v6257 = vpop.f32.mrf.mxu0
        %v6258 = vadd.f32 %v5879, %v6257
        %v6259 = vpop.f32.mrf.mxu0
        %6260 = vmatprep.mubr.bf16.mxu0 0
        %6261 = vmatmul.mubr.bf16.gmra.mxu0 %v5821
        %v6262 = vpop.f32.mrf.mxu0
        %v6263 = vadd.f32 %v5879, %v6262
        %v6264 = vpop.f32.mrf.mxu0
        %v6265 = vpop.f32.mrf.mxu0
        %v6266 = vadd.f32 %v5879, %v6265
        %v6267 = vpop.f32.mrf.mxu0
        %6268 = vmatprep.mubr.bf16.mxu0 0
        %6269 = vmatmul.mubr.bf16.gmra.mxu0 %v5822
        %v6270 = vpop.f32.mrf.mxu0
        %v6271 = vadd.f32 %v5879, %v6270
        %v6272 = vpop.f32.mrf.mxu0
        %v6273 = vpop.f32.mrf.mxu0
        %v6274 = vadd.f32 %v5879, %v6273
        %v6275 = vpop.f32.mrf.mxu0
        %6276 = vmatprep.mubr.bf16.mxu0 0
        %6277 = vmatmul.mubr.bf16.gmra.mxu0 %v5823
        %v6278 = vpop.f32.mrf.mxu0
        %v6279 = vadd.f32 %v5879, %v6278
        %v6280 = vpop.f32.mrf.mxu0
        %v6281 = vpop.f32.mrf.mxu0
        %v6282 = vadd.f32 %v5879, %v6281
        %v6283 = vpop.f32.mrf.mxu0
        %6284 = vmatprep.mubr.bf16.mxu0 0
        %6285 = vmatmul.mubr.bf16.gmra.mxu0 %v5824
        %v6286 = vpop.f32.mrf.mxu0
        %v6287 = vadd.f32 %v5879, %v6286
        %v6288 = vpop.f32.mrf.mxu0
        %v6289 = vpop.f32.mrf.mxu0
        %v6290 = vadd.f32 %v5879, %v6289
        %v6291 = vpop.f32.mrf.mxu0
        %6292 = vmatprep.mubr.bf16.mxu0 0
        %6293 = vmatmul.mubr.bf16.gmra.mxu0 %v5825
        %v6294 = vpop.f32.mrf.mxu0
        %v6295 = vadd.f32 %v5879, %v6294
        %v6296 = vpop.f32.mrf.mxu0
        %v6297 = vpop.f32.mrf.mxu0
        %v6298 = vadd.f32 %v5879, %v6297
        %v6299 = vpop.f32.mrf.mxu0
        %6300 = vmatprep.mubr.bf16.mxu0 0
        %6301 = vmatmul.mubr.bf16.gmra.mxu0 %v5826
        %v6302 = vpop.f32.mrf.mxu0
        %v6303 = vadd.f32 %v5879, %v6302
        %v6304 = vpop.f32.mrf.mxu0
        %v6305 = vpop.f32.mrf.mxu0
        %v6306 = vadd.f32 %v5879, %v6305
        %v6307 = vpop.f32.mrf.mxu0
        %6308 = vmatprep.mubr.bf16.mxu0 0
        %6309 = vmatmul.mubr.bf16.gmra.mxu0 %v5827
        %v6310 = vpop.f32.mrf.mxu0
        %v6311 = vadd.f32 %v5879, %v6310
        %v6312 = vpop.f32.mrf.mxu0
        %v6313 = vpop.f32.mrf.mxu0
        %v6314 = vadd.f32 %v5879, %v6313
        %v6315 = vpop.f32.mrf.mxu0
        %6316 = vmatprep.mubr.bf16.mxu0 0
        %6317 = vmatmul.mubr.bf16.gmra.mxu0 %v5828
        %v6318 = vpop.f32.mrf.mxu0
        %v6319 = vadd.f32 %v5879, %v6318
        %v6320 = vpop.f32.mrf.mxu0
        %v6321 = vpop.f32.mrf.mxu0
        %v6322 = vadd.f32 %v5879, %v6321
        %v6323 = vpop.f32.mrf.mxu0
        %6324 = vmatprep.mubr.bf16.mxu0 0
        %6325 = vmatmul.mubr.bf16.gmra.mxu0 %v5829
        %v6326 = vpop.f32.mrf.mxu0
        %v6327 = vadd.f32 %v5879, %v6326
        %v6328 = vpop.f32.mrf.mxu0
        %v6329 = vpop.f32.mrf.mxu0
        %v6330 = vadd.f32 %v5879, %v6329
        %v6331 = vpop.f32.mrf.mxu0
        %6332 = vmatprep.mubr.bf16.mxu0 0
        %6333 = vmatmul.mubr.bf16.gmra.mxu0 %v5830
        %v6334 = vpop.f32.mrf.mxu0
        %v6335 = vadd.f32 %v5879, %v6334
        %v6336 = vpop.f32.mrf.mxu0
        %v6337 = vpop.f32.mrf.mxu0
        %v6338 = vadd.f32 %v5879, %v6337
        %v6339 = vpop.f32.mrf.mxu0
        %6340 = vmatprep.mubr.bf16.mxu0 0
        %6341 = vmatmul.mubr.bf16.gmra.mxu0 %v5831
        %v6342 = vpop.f32.mrf.mxu0
        %v6343 = vadd.f32 %v5879, %v6342
        %v6344 = vpop.f32.mrf.mxu0
        %v6345 = vpop.f32.mrf.mxu0
        %v6346 = vadd.f32 %v5879, %v6345
        %v6347 = vpop.f32.mrf.mxu0
        %6348 = vmatprep.mubr.bf16.mxu0 0
        %6349 = vmatmul.mubr.bf16.gmra.mxu0 %v5832
        %v6350 = vpop.f32.mrf.mxu0
        %v6351 = vadd.f32 %v5879, %v6350
        %v6352 = vpop.f32.mrf.mxu0
        %v6353 = vpop.f32.mrf.mxu0
        %v6354 = vadd.f32 %v5879, %v6353
        %v6355 = vpop.f32.mrf.mxu0
        %6356 = vmatprep.mubr.bf16.mxu0 0
        %6357 = vmatmul.mubr.bf16.gmra.mxu0 %v5833
        %v6358 = vpop.f32.mrf.mxu0
        %v6359 = vadd.f32 %v5879, %v6358
        %v6360 = vpop.f32.mrf.mxu0
        %v6361 = vpop.f32.mrf.mxu0
        %v6362 = vadd.f32 %v5879, %v6361
        %v6363 = vpop.f32.mrf.mxu0
        %6364 = vdwg.mxu0
        %v6365 = vadd.f32 %v6046, %v397
        %v6366 = vadd.f32 %v6048, %v398
        %v6367 = vadd.f32 %v6239, %v399
        %v6368 = vadd.f32 %v6050, %v400
        %v6369 = vadd.f32 %v6052, %v401
        %v6370 = vadd.f32 %v6242, %v402
        %v6371 = vadd.f32 %v6056, %v403
        %v6372 = vadd.f32 %v6058, %v404
        %v6373 = vadd.f32 %v6247, %v405
        %v6374 = vadd.f32 %v6060, %v406
        %v6375 = vadd.f32 %v6062, %v407
        %v6376 = vadd.f32 %v6250, %v408
        %v6377 = vadd.f32 %v6066, %v409
        %v6378 = vadd.f32 %v6068, %v410
        %v6379 = vadd.f32 %v6255, %v411
        %v6380 = vadd.f32 %v6070, %v412
        %v6381 = vadd.f32 %v6072, %v413
        %v6382 = vadd.f32 %v6258, %v414
        %v6383 = vadd.f32 %v6076, %v415
        %v6384 = vadd.f32 %v6078, %v416
        %v6385 = vadd.f32 %v6263, %v417
        %v6386 = vadd.f32 %v6080, %v418
        %v6387 = vadd.f32 %v6082, %v419
        %v6388 = vadd.f32 %v6266, %v420
        %v6389 = vadd.f32 %v6086, %v421
        %v6390 = vadd.f32 %v6088, %v422
        %v6391 = vadd.f32 %v6271, %v423
        %v6392 = vadd.f32 %v6090, %v424
        %v6393 = vadd.f32 %v6092, %v425
        %v6394 = vadd.f32 %v6274, %v426
        %v6395 = vadd.f32 %v6096, %v427
        %v6396 = vadd.f32 %v6098, %v428
        %v6397 = vadd.f32 %v6279, %v429
        %v6398 = vadd.f32 %v6100, %v430
        %v6399 = vadd.f32 %v6102, %v431
        %v6400 = vadd.f32 %v6282, %v432
        %v6401 = vadd.f32 %v6106, %v433
        %v6402 = vadd.f32 %v6108, %v434
        %v6403 = vadd.f32 %v6287, %v435
        %v6404 = vadd.f32 %v6110, %v436
        %v6405 = vadd.f32 %v6112, %v437
        %v6406 = vadd.f32 %v6290, %v438
        %v6407 = vadd.f32 %v6116, %v439
        %v6408 = vadd.f32 %v6118, %v440
        %v6409 = vadd.f32 %v6295, %v441
        %v6410 = vadd.f32 %v6120, %v442
        %v6411 = vadd.f32 %v6122, %v443
        %v6412 = vadd.f32 %v6298, %v444
        %v6413 = vadd.f32 %v6126, %v445
        %v6414 = vadd.f32 %v6128, %v446
        %v6415 = vadd.f32 %v6303, %v447
        %v6416 = vadd.f32 %v6130, %v448
        %v6417 = vadd.f32 %v6132, %v449
        %v6418 = vadd.f32 %v6306, %v450
        %v6419 = vadd.f32 %v6136, %v451
        %v6420 = vadd.f32 %v6138, %v452
        %v6421 = vadd.f32 %v6311, %v453
        %v6422 = vadd.f32 %v6140, %v454
        %v6423 = vadd.f32 %v6142, %v455
        %v6424 = vadd.f32 %v6314, %v456
        %v6425 = vadd.f32 %v6146, %v457
        %v6426 = vadd.f32 %v6148, %v458
        %v6427 = vadd.f32 %v6319, %v459
        %v6428 = vadd.f32 %v6150, %v460
        %v6429 = vadd.f32 %v6152, %v461
        %v6430 = vadd.f32 %v6322, %v462
        %v6431 = vadd.f32 %v6156, %v463
        %v6432 = vadd.f32 %v6158, %v464
        %v6433 = vadd.f32 %v6327, %v465
        %v6434 = vadd.f32 %v6160, %v466
        %v6435 = vadd.f32 %v6162, %v467
        %v6436 = vadd.f32 %v6330, %v468
        %v6437 = vadd.f32 %v6166, %v469
        %v6438 = vadd.f32 %v6168, %v470
        %v6439 = vadd.f32 %v6335, %v471
        %v6440 = vadd.f32 %v6170, %v472
        %v6441 = vadd.f32 %v6172, %v473
        %v6442 = vadd.f32 %v6338, %v474
        %v6443 = vadd.f32 %v6176, %v475
        %v6444 = vadd.f32 %v6178, %v476
        %v6445 = vadd.f32 %v6343, %v477
        %v6446 = vadd.f32 %v6180, %v478
        %v6447 = vadd.f32 %v6182, %v479
        %v6448 = vadd.f32 %v6346, %v480
        %v6449 = vadd.f32 %v6186, %v481
        %v6450 = vadd.f32 %v6188, %v482
        %v6451 = vadd.f32 %v6351, %v483
        %v6452 = vadd.f32 %v6190, %v484
        %v6453 = vadd.f32 %v6192, %v485
        %v6454 = vadd.f32 %v6354, %v486
        %v6455 = vadd.f32 %v6196, %v487
        %v6456 = vadd.f32 %v6198, %v488
        %v6457 = vadd.f32 %v6359, %v489
        %v6458 = vadd.f32 %v6200, %v490
        %v6459 = vadd.f32 %v6202, %v491
        %v6460 = vadd.f32 %v6362, %v492
        %v6461 = vmax.f32 %v6365, 0.0
        %v6462 = vmax.f32 %v6366, 0.0
        %v6463 = vmax.f32 %v6367, 0.0
        %v6464 = vmax.f32 %v6368, 0.0
        %v6465 = vmax.f32 %v6369, 0.0
        %v6466 = vmax.f32 %v6370, 0.0
        %v6467 = vmax.f32 %v6371, 0.0
        %v6468 = vmax.f32 %v6372, 0.0
        %v6469 = vmax.f32 %v6373, 0.0
        %v6470 = vmax.f32 %v6374, 0.0
        %v6471 = vmax.f32 %v6375, 0.0
        %v6472 = vmax.f32 %v6376, 0.0
        %v6473 = vmax.f32 %v6377, 0.0
        %v6474 = vmax.f32 %v6378, 0.0
        %v6475 = vmax.f32 %v6379, 0.0
        %v6476 = vmax.f32 %v6380, 0.0
        %v6477 = vmax.f32 %v6381, 0.0
        %v6478 = vmax.f32 %v6382, 0.0
        %v6479 = vmax.f32 %v6383, 0.0
        %v6480 = vmax.f32 %v6384, 0.0
        %v6481 = vmax.f32 %v6385, 0.0
        %v6482 = vmax.f32 %v6386, 0.0
        %v6483 = vmax.f32 %v6387, 0.0
        %v6484 = vmax.f32 %v6388, 0.0
        %v6485 = vmax.f32 %v6389, 0.0
        %v6486 = vmax.f32 %v6390, 0.0
        %v6487 = vmax.f32 %v6391, 0.0
        %v6488 = vmax.f32 %v6392, 0.0
        %v6489 = vmax.f32 %v6393, 0.0
        %v6490 = vmax.f32 %v6394, 0.0
        %v6491 = vmax.f32 %v6395, 0.0
        %v6492 = vmax.f32 %v6396, 0.0
        %v6493 = vmax.f32 %v6397, 0.0
        %v6494 = vmax.f32 %v6398, 0.0
        %v6495 = vmax.f32 %v6399, 0.0
        %v6496 = vmax.f32 %v6400, 0.0
        %v6497 = vmax.f32 %v6401, 0.0
        %v6498 = vmax.f32 %v6402, 0.0
        %v6499 = vmax.f32 %v6403, 0.0
        %v6500 = vmax.f32 %v6404, 0.0
        %v6501 = vmax.f32 %v6405, 0.0
        %v6502 = vmax.f32 %v6406, 0.0
        %v6503 = vmax.f32 %v6407, 0.0
        %v6504 = vmax.f32 %v6408, 0.0
        %v6505 = vmax.f32 %v6409, 0.0
        %v6506 = vmax.f32 %v6410, 0.0
        %v6507 = vmax.f32 %v6411, 0.0
        %v6508 = vmax.f32 %v6412, 0.0
        %v6509 = vmax.f32 %v6413, 0.0
        %v6510 = vmax.f32 %v6414, 0.0
        %v6511 = vmax.f32 %v6415, 0.0
        %v6512 = vmax.f32 %v6416, 0.0
        %v6513 = vmax.f32 %v6417, 0.0
        %v6514 = vmax.f32 %v6418, 0.0
        %v6515 = vmax.f32 %v6419, 0.0
        %v6516 = vmax.f32 %v6420, 0.0
        %v6517 = vmax.f32 %v6421, 0.0
        %v6518 = vmax.f32 %v6422, 0.0
        %v6519 = vmax.f32 %v6423, 0.0
        %v6520 = vmax.f32 %v6424, 0.0
        %v6521 = vmax.f32 %v6425, 0.0
        %v6522 = vmax.f32 %v6426, 0.0
        %v6523 = vmax.f32 %v6427, 0.0
        %v6524 = vmax.f32 %v6428, 0.0
        %v6525 = vmax.f32 %v6429, 0.0
        %v6526 = vmax.f32 %v6430, 0.0
        %v6527 = vmax.f32 %v6431, 0.0
        %v6528 = vmax.f32 %v6432, 0.0
        %v6529 = vmax.f32 %v6433, 0.0
        %v6530 = vmax.f32 %v6434, 0.0
        %v6531 = vmax.f32 %v6435, 0.0
        %v6532 = vmax.f32 %v6436, 0.0
        %v6533 = vmax.f32 %v6437, 0.0
        %v6534 = vmax.f32 %v6438, 0.0
        %v6535 = vmax.f32 %v6439, 0.0
        %v6536 = vmax.f32 %v6440, 0.0
        %v6537 = vmax.f32 %v6441, 0.0
        %v6538 = vmax.f32 %v6442, 0.0
        %v6539 = vmax.f32 %v6443, 0.0
        %v6540 = vmax.f32 %v6444, 0.0
        %v6541 = vmax.f32 %v6445, 0.0
        %v6542 = vmax.f32 %v6446, 0.0
        %v6543 = vmax.f32 %v6447, 0.0
        %v6544 = vmax.f32 %v6448, 0.0
        %v6545 = vmax.f32 %v6449, 0.0
        %v6546 = vmax.f32 %v6450, 0.0
        %v6547 = vmax.f32 %v6451, 0.0
        %v6548 = vmax.f32 %v6452, 0.0
        %v6549 = vmax.f32 %v6453, 0.0
        %v6550 = vmax.f32 %v6454, 0.0
        %v6551 = vmax.f32 %v6455, 0.0
        %v6552 = vmax.f32 %v6456, 0.0
        %v6553 = vmax.f32 %v6457, 0.0
        %v6554 = vmax.f32 %v6458, 0.0
        %v6555 = vmax.f32 %v6459, 0.0
        %v6556 = vmax.f32 %v6460, 0.0
        %6557 = vst [vmem:[%s355] sm:$0xff] %v6461
        %6558 = vst [vmem:[%s355 + $0x8] sm:$0xff] %v6462
        %6559 = vst.msk [vmem:[%s355 + $0x10] sm:$0xff] %vm708, %v6463
        %6560 = vst [vmem:[%s355 + $0x18] sm:$0xff] %v6464
        %6561 = vst [vmem:[%s355 + $0x20] sm:$0xff] %v6465
        %6562 = vst.msk [vmem:[%s355 + $0x28] sm:$0xff] %vm708, %v6466
        %6563 = vst [vmem:[%s355 + $0x30] sm:$0xff] %v6467
        %6564 = vst [vmem:[%s355 + $0x38] sm:$0xff] %v6468
        %6565 = vst.msk [vmem:[%s355 + $0x40] sm:$0xff] %vm708, %v6469
        %6566 = vst [vmem:[%s355 + $0x48] sm:$0xff] %v6470
        %6567 = vst [vmem:[%s355 + $0x50] sm:$0xff] %v6471
        %6568 = vst.msk [vmem:[%s355 + $0x58] sm:$0xff] %vm708, %v6472
        %6569 = vst [vmem:[%s355 + $0x60] sm:$0xff] %v6473
        %6570 = vst [vmem:[%s355 + $0x68] sm:$0xff] %v6474
        %6571 = vst.msk [vmem:[%s355 + $0x70] sm:$0xff] %vm708, %v6475
        %6572 = vst [vmem:[%s355 + $0x78] sm:$0xff] %v6476
        %6573 = vst [vmem:[%s355 + $0x80] sm:$0xff] %v6477
        %6574 = vst.msk [vmem:[%s355 + $0x88] sm:$0xff] %vm708, %v6478
        %6575 = vst [vmem:[%s355 + $0x90] sm:$0xff] %v6479
        %6576 = vst [vmem:[%s355 + $0x98] sm:$0xff] %v6480
        %6577 = vst.msk [vmem:[%s355 + $0xa0] sm:$0xff] %vm708, %v6481
        %6578 = vst [vmem:[%s355 + $0xa8] sm:$0xff] %v6482
        %6579 = vst [vmem:[%s355 + $0xb0] sm:$0xff] %v6483
        %6580 = vst.msk [vmem:[%s355 + $0xb8] sm:$0xff] %vm708, %v6484
        %6581 = vst [vmem:[%s355 + $0xc0] sm:$0xff] %v6485
        %6582 = vst [vmem:[%s355 + $0xc8] sm:$0xff] %v6486
        %6583 = vst.msk [vmem:[%s355 + $0xd0] sm:$0xff] %vm708, %v6487
        %6584 = vst [vmem:[%s355 + $0xd8] sm:$0xff] %v6488
        %6585 = vst [vmem:[%s355 + $0xe0] sm:$0xff] %v6489
        %6586 = vst.msk [vmem:[%s355 + $0xe8] sm:$0xff] %vm708, %v6490
        %6587 = vst [vmem:[%s355 + $0xf0] sm:$0xff] %v6491
        %6588 = vst [vmem:[%s355 + $0xf8] sm:$0xff] %v6492
        %6589 = vst.msk [vmem:[%s355 + $0x100] sm:$0xff] %vm708, %v6493
        %6590 = vst [vmem:[%s355 + $0x108] sm:$0xff] %v6494
        %6591 = vst [vmem:[%s355 + $0x110] sm:$0xff] %v6495
        %6592 = vst.msk [vmem:[%s355 + $0x118] sm:$0xff] %vm708, %v6496
        %6593 = vst [vmem:[%s355 + $0x120] sm:$0xff] %v6497
        %6594 = vst [vmem:[%s355 + $0x128] sm:$0xff] %v6498
        %6595 = vst.msk [vmem:[%s355 + $0x130] sm:$0xff] %vm708, %v6499
        %6596 = vst [vmem:[%s355 + $0x138] sm:$0xff] %v6500
        %6597 = vst [vmem:[%s355 + $0x140] sm:$0xff] %v6501
        %6598 = vst.msk [vmem:[%s355 + $0x148] sm:$0xff] %vm708, %v6502
        %6599 = vst [vmem:[%s355 + $0x150] sm:$0xff] %v6503
        %6600 = vst [vmem:[%s355 + $0x158] sm:$0xff] %v6504
        %6601 = vst.msk [vmem:[%s355 + $0x160] sm:$0xff] %vm708, %v6505
        %6602 = vst [vmem:[%s355 + $0x168] sm:$0xff] %v6506
        %6603 = vst [vmem:[%s355 + $0x170] sm:$0xff] %v6507
        %6604 = vst.msk [vmem:[%s355 + $0x178] sm:$0xff] %vm708, %v6508
        %6605 = vst [vmem:[%s355 + $0x180] sm:$0xff] %v6509
        %6606 = vst [vmem:[%s355 + $0x188] sm:$0xff] %v6510
        %6607 = vst.msk [vmem:[%s355 + $0x190] sm:$0xff] %vm708, %v6511
        %6608 = vst [vmem:[%s355 + $0x198] sm:$0xff] %v6512
        %6609 = vst [vmem:[%s355 + $0x1a0] sm:$0xff] %v6513
        %6610 = vst.msk [vmem:[%s355 + $0x1a8] sm:$0xff] %vm708, %v6514
        %6611 = vst [vmem:[%s355 + $0x1b0] sm:$0xff] %v6515
        %6612 = vst [vmem:[%s355 + $0x1b8] sm:$0xff] %v6516
        %6613 = vst.msk [vmem:[%s355 + $0x1c0] sm:$0xff] %vm708, %v6517
        %6614 = vst [vmem:[%s355 + $0x1c8] sm:$0xff] %v6518
        %6615 = vst [vmem:[%s355 + $0x1d0] sm:$0xff] %v6519
        %6616 = vst.msk [vmem:[%s355 + $0x1d8] sm:$0xff] %vm708, %v6520
        %6617 = vst [vmem:[%s355 + $0x1e0] sm:$0xff] %v6521
        %6618 = vst [vmem:[%s355 + $0x1e8] sm:$0xff] %v6522
        %6619 = vst.msk [vmem:[%s355 + $0x1f0] sm:$0xff] %vm708, %v6523
        %6620 = vst [vmem:[%s355 + $0x1f8] sm:$0xff] %v6524
        %6621 = vst [vmem:[%s355 + $0x200] sm:$0xff] %v6525
        %6622 = vst.msk [vmem:[%s355 + $0x208] sm:$0xff] %vm708, %v6526
        %6623 = vst [vmem:[%s355 + $0x210] sm:$0xff] %v6527
        %6624 = vst [vmem:[%s355 + $0x218] sm:$0xff] %v6528
        %6625 = vst.msk [vmem:[%s355 + $0x220] sm:$0xff] %vm708, %v6529
        %6626 = vst [vmem:[%s355 + $0x228] sm:$0xff] %v6530
        %6627 = vst [vmem:[%s355 + $0x230] sm:$0xff] %v6531
        %6628 = vst.msk [vmem:[%s355 + $0x238] sm:$0xff] %vm708, %v6532
        %6629 = vst [vmem:[%s355 + $0x240] sm:$0xff] %v6533
        %6630 = vst [vmem:[%s355 + $0x248] sm:$0xff] %v6534
        %6631 = vst.msk [vmem:[%s355 + $0x250] sm:$0xff] %vm708, %v6535
        %6632 = vst [vmem:[%s355 + $0x258] sm:$0xff] %v6536
        %6633 = vst [vmem:[%s355 + $0x260] sm:$0xff] %v6537
        %6634 = vst.msk [vmem:[%s355 + $0x268] sm:$0xff] %vm708, %v6538
        %6635 = vst [vmem:[%s355 + $0x270] sm:$0xff] %v6539
        %6636 = vst [vmem:[%s355 + $0x278] sm:$0xff] %v6540
        %6637 = vst.msk [vmem:[%s355 + $0x280] sm:$0xff] %vm708, %v6541
        %6638 = vst [vmem:[%s355 + $0x288] sm:$0xff] %v6542
        %6639 = vst [vmem:[%s355 + $0x290] sm:$0xff] %v6543
        %6640 = vst.msk [vmem:[%s355 + $0x298] sm:$0xff] %vm708, %v6544
        %6641 = vst [vmem:[%s355 + $0x2a0] sm:$0xff] %v6545
        %6642 = vst [vmem:[%s355 + $0x2a8] sm:$0xff] %v6546
        %6643 = vst.msk [vmem:[%s355 + $0x2b0] sm:$0xff] %vm708, %v6547
        %6644 = vst [vmem:[%s355 + $0x2b8] sm:$0xff] %v6548
        %6645 = vst [vmem:[%s355 + $0x2c0] sm:$0xff] %v6549
        %6646 = vst.msk [vmem:[%s355 + $0x2c8] sm:$0xff] %vm708, %v6550
        %6647 = vst [vmem:[%s355 + $0x2d0] sm:$0xff] %v6551
        %6648 = vst [vmem:[%s355 + $0x2d8] sm:$0xff] %v6552
        %6649 = vst.msk [vmem:[%s355 + $0x2e0] sm:$0xff] %vm708, %v6553
        %6650 = vst [vmem:[%s355 + $0x2e8] sm:$0xff] %v6554
        %6651 = vst [vmem:[%s355 + $0x2f0] sm:$0xff] %v6555
        %6652 = vst.msk [vmem:[%s355 + $0x2f8] sm:$0xff] %vm708, %v6556
        %s6653 = sand.u32 %s247, 1
        %s6654 = scalar_lea.sflag [#allocation3], %s6653
        %s6655 = sand.u32 %s247, 1
        %s6656 = smul.addr %s6655, 768
        %s6657 = scalar_lea.vmem [#allocation2], %s6656
        // Predicated region
        $region61: #{tpu_custom_call.1} parent=59 // pred_check
          %p6658 = pneg %p257
        $region62: #{tpu_custom_call.1} parent=59 // pred_check_branch
          %6660 = sbr.rel (%p6658) target = $region64
        $region63: #{tpu_custom_call.1} parent=59 // pred_region
          %s6661 = smul.u32 4, %s24
          %s6663 = ssub.s32 12288, 12288
          %6664 = vsyncadd %s6654, %s6663
          %s6665 = smul.addr %s6661, 24
          %s6666 = smul.addr %s6665, 128
          %s6667 = scalar_lea.hbm %s10, %s6666
          %s6668 = sshll.u32 %s6657, 4
          %s6669 = int_to_ptr.vmem [resolvable:$true] %s6668
          %6674 = dma.vmem_to_hbm [thread:$0]  %s6669, 12288, %s6667, %s6654, 384, 384, 24
        $region64: #{tpu_custom_call.1} parent=59 // pred_fallthru
          _
      $region60: #{tpu_custom_call.1} parent=5 // pred_fallthru
        _
      %p6675 = scmp.le.s32.totalorder 2, %s19
      // Predicated region
      $region65: #{tpu_custom_call.1} parent=5 // pred_check
        %p6676 = pneg %p6675
      $region66: #{tpu_custom_call.1} parent=5 // pred_check_branch
        %6678 = sbr.rel (%p6676) target = $region68
      $region67: #{tpu_custom_call.1} parent=5 // pred_region
        %s6679 = ssub.s32 %s19, 2
        // Predicated region
        $region69: #{tpu_custom_call.1} parent=67 // pred_check
          %p6680 = pneg %p263
        $region70: #{tpu_custom_call.1} parent=67 // pred_check_branch
          %6682 = sbr.rel (%p6680) target = $region72
        $region71: #{tpu_custom_call.1} parent=67 // pred_region
          %s6683 = sand.u32 %s248, 1
          %s6684 = scalar_lea.sflag [#allocation3], %s6683
          %s6685 = sand.u32 %s248, 1
          %s6686 = smul.addr %s6685, 768
          %s6687 = scalar_lea.vmem [#allocation2], %s6686
          %6688 = dma.done %s6684, 12288
        $region72: #{tpu_custom_call.1} parent=67 // pred_fallthru
          _
      $region68: #{tpu_custom_call.1} parent=5 // pred_fallthru
        _
    $region6: #{tpu_custom_call.1} parent=1 // loop_footer
      %s23 = sadd.s32 1, %s19
    $region7: #{tpu_custom_call.1} parent=1 // loop_footer_branch
      %18 = sbr.rel target = $region3
    $region8: #{tpu_custom_call.1} parent=1 // loop_exit
      _
    %6689 = vsyncpa [#allocation3], 1
    %s6690 = scalar_lea.sflag [#allocation3], 1
    %6691 = vsyncpa %s6690, 1

</llo_original>
